<compile_context>
chip_gen: v5e
topology: v5e:2x2
jax: 0.10.0
libtpu: 0.0.40
codegen_flags: <defaults>
</compile_context>

<pallas_src>
import functools
import math

import jax
import jax.numpy as jnp
from jax import lax
from jax.experimental import pallas as pl
from jax.experimental.pallas import tpu as pltpu


def _round_up(x, m):
    return (x + m - 1) // m * m


# --------------------------------------------------------------------------
# Pallas kernels
# --------------------------------------------------------------------------

def _linear_kernel(x_ref, w_ref, b_ref, o_ref, *, relu):
    acc = jnp.dot(x_ref[...], w_ref[...],
                  preferred_element_type=jnp.float32) + b_ref[...]
    if relu:
        acc = jnp.maximum(acc, 0.0)
    o_ref[...] = acc


def real_matmul_bias(x, w, b, *, relu=False, tm_max=256):
    """Tiled (over M) x @ w + b.  x: [M,K], w: [K,N], b: [N]. bf16 MXU, f32 acc."""
    M, K = x.shape
    N = w.shape[1]
    tm = min(_round_up(M, 8), tm_max)
    Mp = _round_up(M, tm)
    if Mp != M:
        x = jnp.pad(x, ((0, Mp - M), (0, 0)))
    out = pl.pallas_call(
        functools.partial(_linear_kernel, relu=relu),
        grid=(Mp // tm,),
        in_specs=[pl.BlockSpec((tm, K), lambda i: (i, 0)),
                  pl.BlockSpec((K, N), lambda i: (0, 0)),
                  pl.BlockSpec((1, N), lambda i: (0, 0))],
        out_specs=pl.BlockSpec((tm, N), lambda i: (i, 0)),
        out_shape=jax.ShapeDtypeStruct((Mp, N), jnp.float32),
        compiler_params=pltpu.CompilerParams(
            dimension_semantics=("parallel",)),
    )(x.astype(jnp.bfloat16), w.astype(jnp.bfloat16),
      b.reshape(1, N).astype(jnp.float32))
    return out[:M] if Mp != M else out


def complex_matmul_bias(a_re, a_im, w_re, w_im, b_re, b_im, *, relu=False):
    """Complex (a @ w) + b as ONE stacked real matmul.  a:[M,K], w:[K,N], b:[N]."""
    M, K = a_re.shape
    N = w_re.shape[1]
    a = jnp.concatenate([a_re, a_im], axis=1)                    # [M, 2K]
    w = jnp.concatenate(
        [jnp.concatenate([w_re, w_im], axis=1),
         jnp.concatenate([-w_im, w_re], axis=1)], axis=0)        # [2K, 2N]
    bias = jnp.concatenate([b_re, b_im])                         # [2N]
    out = real_matmul_bias(a, w, bias, relu=relu)                # [M, 2N]
    return out[:, :N], out[:, N:]


def _fc_fused_kernel(x_ref, w1_ref, b1_ref, w2_ref, b2_ref, o_ref):
    h = jnp.dot(x_ref[...], w1_ref[...],
                preferred_element_type=jnp.float32) + b1_ref[...]
    h = jnp.maximum(h, 0.0)
    o_ref[...] = jnp.dot(h.astype(jnp.bfloat16), w2_ref[...],
                         preferred_element_type=jnp.float32) + b2_ref[...]


def fused_mlp(x, w1, b1, w2, b2, *, tm_max=256):
    """fc2(relu(fc1(x))) in a single kernel; hidden stays in VMEM/vregs."""
    M, K = x.shape
    H = w1.shape[1]
    N = w2.shape[1]
    tm = min(_round_up(M, 8), tm_max)
    Mp = _round_up(M, tm)
    if Mp != M:
        x = jnp.pad(x, ((0, Mp - M), (0, 0)))
    out = pl.pallas_call(
        _fc_fused_kernel,
        grid=(Mp // tm,),
        in_specs=[pl.BlockSpec((tm, K), lambda i: (i, 0)),
                  pl.BlockSpec((K, H), lambda i: (0, 0)),
                  pl.BlockSpec((1, H), lambda i: (0, 0)),
                  pl.BlockSpec((H, N), lambda i: (0, 0)),
                  pl.BlockSpec((1, N), lambda i: (0, 0))],
        out_specs=pl.BlockSpec((tm, N), lambda i: (i, 0)),
        out_shape=jax.ShapeDtypeStruct((Mp, N), jnp.float32),
        compiler_params=pltpu.CompilerParams(
            dimension_semantics=("parallel",)),
    )(x.astype(jnp.bfloat16), w1.astype(jnp.bfloat16),
      b1.reshape(1, H).astype(jnp.float32),
      w2.astype(jnp.bfloat16), b2.reshape(1, N).astype(jnp.float32))
    return out[:M] if Mp != M else out


def _cattn_kernel(q_ref, k_ref, v_ref, o_ref, *, causal, scale):
    q = q_ref[0]          # [H, Lq, 2*dh]  (re | im along last axis), bf16
    k = k_ref[0]          # [H, Lk, 2*dh]
    v = v_ref[0]          # [H, Lk, 2*dh]
    # Re(q . conj(k)) = q_re.k_re + q_im.k_im = [q_re|q_im] . [k_re|k_im]
    s = jnp.einsum('hqd,hkd->hqk', q, k,
                   preferred_element_type=jnp.float32) * scale
    if causal:
        row = lax.broadcasted_iota(jnp.int32, s.shape, 1)
        col = lax.broadcasted_iota(jnp.int32, s.shape, 2)
        s = jnp.where(col <= row, s, -1e30)
    m = jnp.max(s, axis=-1, keepdims=True)
    p = jnp.exp(s - m)
    denom = jnp.sum(p, axis=-1, keepdims=True)
    p = p * pl.reciprocal(denom, approx=True)
    # P @ [v_re | v_im] = [P v_re | P v_im]
    o_ref[0] = jnp.einsum('hqk,hkd->hqd', p.astype(v.dtype), v,
                          preferred_element_type=jnp.float32)


def complex_attention(q_cat, k_cat, v_cat, *, causal):
    """q_cat: [B,H,Lq,2dh], k/v_cat: [B,H,Lk,2dh] -> [B,H,Lq,2dh]."""
    B, H, Lq, d2 = q_cat.shape
    Lk = k_cat.shape[2]
    scale = 1.0 / math.sqrt(d2 // 2)
    kern = functools.partial(_cattn_kernel, causal=causal, scale=scale)
    q_spec = pl.BlockSpec((1, H, Lq, d2), lambda bidx: (bidx, 0, 0, 0))
    kv_spec = pl.BlockSpec((1, H, Lk, d2), lambda bidx: (bidx, 0, 0, 0))
    return pl.pallas_call(
        kern,
        grid=(B,),
        in_specs=[q_spec, kv_spec, kv_spec],
        out_specs=q_spec,
        out_shape=jax.ShapeDtypeStruct((B, H, Lq, d2), jnp.float32),
        compiler_params=pltpu.CompilerParams(
            dimension_semantics=("parallel",)),
    )(q_cat.astype(jnp.bfloat16), k_cat.astype(jnp.bfloat16),
      v_cat.astype(jnp.bfloat16))


# --------------------------------------------------------------------------
# Complex building blocks (glue around the Pallas kernels)
# --------------------------------------------------------------------------

def clinear_apply(p, a, b, relu=False):
    shp = a.shape
    M = math.prod(shp[:-1])
    N = p['w_re'].shape[1]
    r, i = complex_matmul_bias(a.reshape(M, shp[-1]), b.reshape(M, shp[-1]),
                               p['w_re'], p['w_im'], p['b_re'], p['b_im'],
                               relu=relu)
    return r.reshape(shp[:-1] + (N,)), i.reshape(shp[:-1] + (N,))


def cconv1d(p, a, b):
    """Complex Conv1d (stride 1, valid) via channel-last im2col + complex matmul.

    a, b: [N, L, Cin] (channel-last) -> [N, Lout, Cout].
    """
    Cout, Cin, K = p['w_re'].shape
    N, L, _ = a.shape
    Lout = L - K + 1

    def im2col(t):
        # cols[n, l, c, k] = t[n, l + k, c]  (Cin-major, tap-minor to match
        # the PyTorch (Cout, Cin, K) weight flattening)
        cols = jnp.stack([t[:, i:i + Lout, :] for i in range(K)], axis=-1)
        return cols.reshape(N * Lout, Cin * K)

    wr = p['w_re'].reshape(Cout, Cin * K).T
    wi = p['w_im'].reshape(Cout, Cin * K).T
    r, i = complex_matmul_bias(im2col(a), im2col(b), wr, wi,
                               p['b_re'], p['b_im'])
    return r.reshape(N, Lout, Cout), i.reshape(N, Lout, Cout)


def cbatchnorm(p, a, b, eps=1e-5):
    # channel-last: per-channel params broadcast over the last axis
    def bn(t, g, beta, m, v):
        return (t - m) / jnp.sqrt(v + eps) * g + beta
    return (bn(a, p['g_re'], p['b_re'], p['m_re'], p['v_re']),
            bn(b, p['g_im'], p['b_im'], p['m_im'], p['v_im']))


def crelu(a, b):
    return jnp.maximum(a, 0.0), jnp.maximum(b, 0.0)


def cmaxpool2(a, b):
    # channel-last pooling over the L axis
    N, L, C = a.shape
    Lo = (L - 2) // 2 + 1

    def pool(t):
        return t[:, :Lo * 2, :].reshape(N, Lo, 2, C).max(axis=2)
    return pool(a), pool(b)


def conv_stack(cp, a, b):
    # a, b: [N, L, 1] channel-last
    for idx in range(1, 6):
        a, b = cconv1d(cp['conv%d' % idx], a, b)
        a, b = cbatchnorm(cp['bn%d' % idx], a, b)
        a, b = crelu(a, b)
        a, b = cmaxpool2(a, b)
    N = a.shape[0]
    # ComplexFlatten flattens the NCL tensor (channel-major) -> transpose once.
    a = a.transpose(0, 2, 1).reshape(N, -1)
    b = b.transpose(0, 2, 1).reshape(N, -1)
    return a, b


def layer_norm(x, g, b, eps=1e-5):
    mu = x.mean(-1, keepdims=True)
    var = ((x - mu) ** 2).mean(-1, keepdims=True)
    return (x - mu) / jnp.sqrt(var + eps) * g + b


def _pack_heads(re, im, B, H, dh):
    L = re.shape[0]
    cat = jnp.concatenate([re.reshape(L, B, H, dh),
                           im.reshape(L, B, H, dh)], axis=-1)  # [L,B,H,2dh]
    return cat.transpose(1, 2, 0, 3)                           # [B,H,L,2dh]


def cmha(p, xa, xb, ma, mb, num_heads, causal, fuse_qkv):
    """Complex multi-head attention.  x: [Lq,B,D], m: [Lk,B,D]."""
    Lq, B, D = xa.shape
    Lk = ma.shape[0]
    dh = D // num_heads

    if fuse_qkv:
        # self-attention: one fused QKV complex matmul (lane width 6*D)
        w_re = jnp.concatenate([p['q']['w_re'], p['k']['w_re'], p['v']['w_re']], 1)
        w_im = jnp.concatenate([p['q']['w_im'], p['k']['w_im'], p['v']['w_im']], 1)
        b_re = jnp.concatenate([p['q']['b_re'], p['k']['b_re'], p['v']['b_re']])
        b_im = jnp.concatenate([p['q']['b_im'], p['k']['b_im'], p['v']['b_im']])
        qkv_re, qkv_im = complex_matmul_bias(
            xa.reshape(Lq * B, D), xb.reshape(Lq * B, D), w_re, w_im, b_re, b_im)
        q_re, k_re, v_re = jnp.split(qkv_re, 3, axis=-1)
        q_im, k_im, v_im = jnp.split(qkv_im, 3, axis=-1)
        q_re = q_re.reshape(Lq, B, D); q_im = q_im.reshape(Lq, B, D)
        k_re = k_re.reshape(Lk, B, D); k_im = k_im.reshape(Lk, B, D)
        v_re = v_re.reshape(Lk, B, D); v_im = v_im.reshape(Lk, B, D)
    else:
        # cross-attention: Q from x, fused K/V from memory
        q_re, q_im = clinear_apply(p['q'], xa, xb)
        w_re = jnp.concatenate([p['k']['w_re'], p['v']['w_re']], 1)
        w_im = jnp.concatenate([p['k']['w_im'], p['v']['w_im']], 1)
        b_re = jnp.concatenate([p['k']['b_re'], p['v']['b_re']])
        b_im = jnp.concatenate([p['k']['b_im'], p['v']['b_im']])
        kv_re, kv_im = complex_matmul_bias(
            ma.reshape(Lk * B, D), mb.reshape(Lk * B, D), w_re, w_im, b_re, b_im)
        k_re, v_re = jnp.split(kv_re, 2, axis=-1)
        k_im, v_im = jnp.split(kv_im, 2, axis=-1)
        k_re = k_re.reshape(Lk, B, D); k_im = k_im.reshape(Lk, B, D)
        v_re = v_re.reshape(Lk, B, D); v_im = v_im.reshape(Lk, B, D)

    q_cat = _pack_heads(q_re, q_im, B, num_heads, dh)
    k_cat = _pack_heads(k_re, k_im, B, num_heads, dh)
    v_cat = _pack_heads(v_re, v_im, B, num_heads, dh)

    o_cat = complex_attention(q_cat, k_cat, v_cat, causal=causal)  # [B,H,Lq,2dh]
    o = o_cat.transpose(2, 0, 1, 3)                                # [Lq,B,H,2dh]
    o_re = o[..., :dh].reshape(Lq, B, D)
    o_im = o[..., dh:].reshape(Lq, B, D)
    return clinear_apply(p['o'], o_re, o_im)


def cffn(lp, a, b):
    # ReLU fused into the first complex matmul kernel
    ha, hb = clinear_apply(lp['ff1'], a, b, relu=True)
    return clinear_apply(lp['ff2'], ha, hb)


def encoder_apply(p, a, b, num_heads, attn_mask):
    # TODO(synk): attn_mask is mapped to a causal mask here (as in the original
    # port); verify against the real TransformerEncoder semantics.
    for lp in p['layers']:
        ha = layer_norm(a, lp['ln1']['g_re'], lp['ln1']['b_re'])
        hb = layer_norm(b, lp['ln1']['g_im'], lp['ln1']['b_im'])
        sa, sb = cmha(lp['self_attn'], ha, hb, ha, hb, num_heads,
                      causal=attn_mask, fuse_qkv=True)
        a, b = a + sa, b + sb
        ha = layer_norm(a, lp['ln2']['g_re'], lp['ln2']['b_re'])
        hb = layer_norm(b, lp['ln2']['g_im'], lp['ln2']['b_im'])
        fa, fb = cffn(lp, ha, hb)
        a, b = a + fa, b + fb
    a = layer_norm(a, p['ln']['g_re'], p['ln']['b_re'])
    b = layer_norm(b, p['ln']['g_im'], p['ln']['b_im'])
    return a, b


def decoder_apply(p, a, b, ea, eb, num_heads):
    for lp in p['layers']:
        ha = layer_norm(a, lp['ln1']['g_re'], lp['ln1']['b_re'])
        hb = layer_norm(b, lp['ln1']['g_im'], lp['ln1']['b_im'])
        sa, sb = cmha(lp['self_attn'], ha, hb, ha, hb, num_heads,
                      causal=True, fuse_qkv=True)
        a, b = a + sa, b + sb
        ha = layer_norm(a, lp['ln2']['g_re'], lp['ln2']['b_re'])
        hb = layer_norm(b, lp['ln2']['g_im'], lp['ln2']['b_im'])
        ca, cb = cmha(lp['cross_attn'], ha, hb, ea, eb, num_heads,
                      causal=False, fuse_qkv=False)
        a, b = a + ca, b + cb
        ha = layer_norm(a, lp['ln3']['g_re'], lp['ln3']['b_re'])
        hb = layer_norm(b, lp['ln3']['g_im'], lp['ln3']['b_im'])
        fa, fb = cffn(lp, ha, hb)
        a, b = a + fa, b + fb
    a = layer_norm(a, p['ln']['g_re'], p['ln']['b_re'])
    b = layer_norm(b, p['ln']['g_im'], p['ln']['b_im'])
    return a, b


# --------------------------------------------------------------------------
# Full forward (teacher-forcing path, y given)
# --------------------------------------------------------------------------

def forward(params, x, y, *, num_heads, attn_mask=False):
    T, B, F_ = x.shape
    D = F_ // 2
    # channel-last conv inputs: [T*B, L=D, C=1]
    xa = x[:, :, :D].reshape(T * B, D, 1)
    xb = x[:, :, D:].reshape(T * B, D, 1)
    a, b = conv_stack(params['conv'], xa, xb)              # [T*B, d_a]
    d_a = a.shape[-1]
    a = a.reshape(-1, B, d_a)
    b = b.reshape(-1, B, d_a)
    a, b = clinear_apply(params['proj_enc'], a, b)          # [T, B, E]
    h_as, h_bs = encoder_apply(params['encoder'], a, b, num_heads, attn_mask)

    S, _, F2 = y.shape
    Dy = F2 // 2
    sos = jnp.zeros((1, B, Dy), y.dtype)
    y_a = jnp.concatenate([sos, y[:-1, :, :Dy]], axis=0)
    y_b = jnp.concatenate([sos, y[:-1, :, Dy:2 * Dy]], axis=0)
    y_a, y_b = clinear_apply(params['proj_dec'], y_a, y_b)  # [S, B, E]
    out_as, out_bs = decoder_apply(params['decoder'], y_a, y_b,
                                   h_as, h_bs, num_heads)

    oc = jnp.concatenate([out_as, out_bs], axis=-1)          # [S, B, 2E]
    o = fused_mlp(oc.reshape(S * B, -1),
                  params['fc1']['w'], params['fc1']['b'],
                  params['fc2']['w'], params['fc2']['b'])
    return o.reshape(S, B, -1)


# --------------------------------------------------------------------------
# Deterministic parameter construction
# --------------------------------------------------------------------------

class KeyGen:
    def __init__(self, key):
        self.key = key

    def __call__(self):
        self.key, sub = jax.random.split(self.key)
        return sub


def make_params(key, D, embed_dim, hidden, out_dim, layers):
    kg = KeyGen(key)

    def clinear_p(i, o):
        s = 1.0 / math.sqrt(i)
        return dict(w_re=jax.random.normal(kg(), (i, o), jnp.float32) * s,
                    w_im=jax.random.normal(kg(), (i, o), jnp.float32) * s,
                    b_re=jnp.zeros((o,), jnp.float32),
                    b_im=jnp.zeros((o,), jnp.float32))

    def cconv_p(ci, co, k):
        s = 1.0 / math.sqrt(ci * k)
        return dict(w_re=jax.random.normal(kg(), (co, ci, k), jnp.float32) * s,
                    w_im=jax.random.normal(kg(), (co, ci, k), jnp.float32) * s,
                    b_re=jnp.zeros((co,), jnp.float32),
                    b_im=jnp.zeros((co,), jnp.float32))

    def cbn_p(c):
        return dict(g_re=jnp.ones((c,), jnp.float32), b_re=jnp.zeros((c,), jnp.float32),
                    g_im=jnp.ones((c,), jnp.float32), b_im=jnp.zeros((c,), jnp.float32),
                    m_re=jnp.zeros((c,), jnp.float32), v_re=jnp.ones((c,), jnp.float32),
                    m_im=jnp.zeros((c,), jnp.float32), v_im=jnp.ones((c,), jnp.float32))

    def ln_p(d):
        return dict(g_re=jnp.ones((d,), jnp.float32), b_re=jnp.zeros((d,), jnp.float32),
                    g_im=jnp.ones((d,), jnp.float32), b_im=jnp.zeros((d,), jnp.float32))

    def attn_p(d):
        return dict(q=clinear_p(d, d), k=clinear_p(d, d),
                    v=clinear_p(d, d), o=clinear_p(d, d))

    def enc_layer_p(d):
        return dict(self_attn=attn_p(d), ln1=ln_p(d), ln2=ln_p(d),
                    ff1=clinear_p(d, 4 * d), ff2=clinear_p(4 * d, d))

    def dec_layer_p(d):
        return dict(self_attn=attn_p(d), cross_attn=attn_p(d),
                    ln1=ln_p(d), ln2=ln_p(d), ln3=ln_p(d),
                    ff1=clinear_p(d, 4 * d), ff2=clinear_p(4 * d, d))

    # same channel-count formula as the PyTorch __init__
    channels = ((((((((((D - 6) // 1 + 1 - 2) // 2 + 1 - 3) // 1 + 1 - 2) // 2
                     + 1 - 3) // 1 + 1 - 2) // 2 + 1 - 3) // 1 + 1 - 2) // 2
                 + 1 - 3) // 1 + 1 - 2) // 2 + 1
    assert channels >= 1, "input feature dim too small for the conv stack"
    d_a = 128 * channels

    conv = dict(conv1=cconv_p(1, 16, 6), bn1=cbn_p(16),
                conv2=cconv_p(16, 32, 3), bn2=cbn_p(32),
                conv3=cconv_p(32, 64, 3), bn3=cbn_p(64),
                conv4=cconv_p(64, 64, 3), bn4=cbn_p(64),
                conv5=cconv_p(64, 128, 3), bn5=cbn_p(128))

    return dict(
        conv=conv,
        proj_enc=clinear_p(d_a, embed_dim),
        proj_dec=clinear_p(D, embed_dim),
        encoder=dict(layers=[enc_layer_p(embed_dim) for _ in range(layers)],
                     ln=ln_p(embed_dim)),
        decoder=dict(layers=[dec_layer_p(embed_dim) for _ in range(layers)],
                     ln=ln_p(embed_dim)),
        fc1=dict(w=jax.random.normal(kg(), (2 * embed_dim, hidden), jnp.float32)
                 / math.sqrt(2 * embed_dim),
                 b=jnp.zeros((hidden,), jnp.float32)),
        fc2=dict(w=jax.random.normal(kg(), (hidden, out_dim), jnp.float32)
                 / math.sqrt(hidden),
                 b=jnp.zeros((out_dim,), jnp.float32)),
    )


# --------------------------------------------------------------------------
# Main
# --------------------------------------------------------------------------

if __name__ == "__main__":
    key = jax.random.PRNGKey(0)
    pk, xk, yk = jax.random.split(key, 3)

    # model hyperparameters (small, consistent with the module's __init__)
    D = 100            # orig_d_a == orig_d_b  (min ~97 for the conv stack)
    embed_dim = 32
    hidden = 32
    out_dim = 8
    num_heads = 4
    layers = 2

    # data shapes
    T, B, S = 4, 2, 3  # encoder seq, batch, decoder (target) seq

    params = make_params(pk, D, embed_dim, hidden, out_dim, layers)
    x = jax.random.normal(xk, (T, B, 2 * D), jnp.float32)
    y = jax.random.normal(yk, (S, B, 2 * D), jnp.float32)

    fwd = jax.jit(functools.partial(forward, num_heads=num_heads,
                                    attn_mask=False))
    out = fwd(params, x, y)
    out = jax.block_until_ready(out)

    assert out.shape == (S, B, out_dim), out.shape
    assert bool(jnp.all(jnp.isfinite(out)))
    print("KERNEL_OK")
</pallas_src>

<mosaic_0001>
module attributes {stable_mosaic.version = 11 : i64} {
  func.func @_linear_kernel(%arg0: i32, %arg1: memref<256x12xbf16, #tpu.memory_space<vmem>>, %arg2: memref<12x32xbf16, #tpu.memory_space<vmem>>, %arg3: memref<1x32xf32, #tpu.memory_space<vmem>>, %arg4: memref<256x32xf32, #tpu.memory_space<vmem>>) attributes {dimension_semantics = [#tpu.dimension_semantics<parallel>], iteration_bounds = array<i64: 3>, scalar_prefetch = 0 : i64, scratch_operands = 0 : i64, tpu.core_type = #tpu.core_type<tc>, window_params = [{transform_indices = @transform_0, window_bounds = array<i64: 256, 12>}, {pipeline_mode = #tpu.pipeline_mode<synchronous>, transform_indices = @transform_1, window_bounds = array<i64: 12, 32>}, {pipeline_mode = #tpu.pipeline_mode<synchronous>, transform_indices = @transform_2, window_bounds = array<i64: 1, 32>}, {transform_indices = @transform_3, window_bounds = array<i64: 256, 32>}]} {
    %c0 = arith.constant 0 : index
    %c0_0 = arith.constant 0 : index
    %0 = vector.load %arg1[%c0, %c0_0] : memref<256x12xbf16, #tpu.memory_space<vmem>>, vector<256x12xbf16>
    %c0_1 = arith.constant 0 : index
    %c0_2 = arith.constant 0 : index
    %1 = vector.load %arg2[%c0_1, %c0_2] : memref<12x32xbf16, #tpu.memory_space<vmem>>, vector<12x32xbf16>
    %cst = arith.constant dense<0.000000e+00> : vector<256x32xf32>
    %2 = tpu.matmul %0, %1, %cst {dimension_numbers = #tpu.dot_dimension_numbers<[1], [0], [0], [1], [0, 0, 1, 1], [], []>} : vector<256x12xbf16>, vector<12x32xbf16>, vector<256x32xf32> -> vector<256x32xf32>
    %c0_3 = arith.constant 0 : index
    %c0_4 = arith.constant 0 : index
    %3 = vector.load %arg3[%c0_3, %c0_4] : memref<1x32xf32, #tpu.memory_space<vmem>>, vector<1x32xf32>
    %4 = vector.broadcast %3 : vector<1x32xf32> to vector<256x32xf32>
    %5 = arith.addf %2, %4 : vector<256x32xf32>
    %c0_5 = arith.constant 0 : index
    %c0_6 = arith.constant 0 : index
    %6 = vector.load %arg4[%c0_5, %c0_6] : memref<256x32xf32, #tpu.memory_space<vmem>>, vector<256x32xf32>
    tpu.vector_store %arg4[%c0_5, %c0_6], %5 {strides = array<i32>} : memref<256x32xf32, #tpu.memory_space<vmem>>, vector<256x32xf32>,
    return
  }
  func.func @transform_0(%arg0: i32) -> (i32, i32) {
    %c0_i32 = arith.constant 0 : i32
    %c0_i32_0 = arith.constant 0 : i32
    return %arg0, %c0_i32 : i32, i32
  }
  func.func @transform_1(%arg0: i32) -> (i32, i32) {
    %c0_i32 = arith.constant 0 : i32
    %c0_i32_0 = arith.constant 0 : i32
    %c0_i32_1 = arith.constant 0 : i32
    return %c0_i32, %c0_i32_0 : i32, i32
  }
  func.func @transform_2(%arg0: i32) -> (i32, i32) {
    %c0_i32 = arith.constant 0 : i32
    %c0_i32_0 = arith.constant 0 : i32
    %c0_i32_1 = arith.constant 0 : i32
    return %c0_i32, %c0_i32_0 : i32, i32
  }
  func.func @transform_3(%arg0: i32) -> (i32, i32) {
    %c0_i32 = arith.constant 0 : i32
    %c0_i32_0 = arith.constant 0 : i32
    return %arg0, %c0_i32 : i32, i32
  }
}

module attributes {stable_mosaic.version = 11 : i64} {
  func.func @_linear_kernel(%arg0: i32, %arg1: memref<256x96xbf16, #tpu.memory_space<vmem>>, %arg2: memref<96x64xbf16, #tpu.memory_space<vmem>>, %arg3: memref<1x64xf32, #tpu.memory_space<vmem>>, %arg4: memref<256x64xf32, #tpu.memory_space<vmem>>) attributes {dimension_semantics = [#tpu.dimension_semantics<parallel>], iteration_bounds = array<i64: 2>, scalar_prefetch = 0 : i64, scratch_operands = 0 : i64, tpu.core_type = #tpu.core_type<tc>, window_params = [{transform_indices = @transform_0, window_bounds = array<i64: 256, 96>}, {pipeline_mode = #tpu.pipeline_mode<synchronous>, transform_indices = @transform_1, window_bounds = array<i64: 96, 64>}, {pipeline_mode = #tpu.pipeline_mode<synchronous>, transform_indices = @transform_2, window_bounds = array<i64: 1, 64>}, {transform_indices = @transform_3, window_bounds = array<i64: 256, 64>}]} {
    %c0 = arith.constant 0 : index
    %c0_0 = arith.constant 0 : index
    %0 = vector.load %arg1[%c0, %c0_0] : memref<256x96xbf16, #tpu.memory_space<vmem>>, vector<256x96xbf16>
    %c0_1 = arith.constant 0 : index
    %c0_2 = arith.constant 0 : index
    %1 = vector.load %arg2[%c0_1, %c0_2] : memref<96x64xbf16, #tpu.memory_space<vmem>>, vector<96x64xbf16>
    %cst = arith.constant dense<0.000000e+00> : vector<256x64xf32>
    %2 = tpu.matmul %0, %1, %cst {dimension_numbers = #tpu.dot_dimension_numbers<[1], [0], [0], [1], [0, 0, 1, 1], [], []>} : vector<256x96xbf16>, vector<96x64xbf16>, vector<256x64xf32> -> vector<256x64xf32>
    %c0_3 = arith.constant 0 : index
    %c0_4 = arith.constant 0 : index
    %3 = vector.load %arg3[%c0_3, %c0_4] : memref<1x64xf32, #tpu.memory_space<vmem>>, vector<1x64xf32>
    %4 = vector.broadcast %3 : vector<1x64xf32> to vector<256x64xf32>
    %5 = arith.addf %2, %4 : vector<256x64xf32>
    %c0_5 = arith.constant 0 : index
    %c0_6 = arith.constant 0 : index
    %6 = vector.load %arg4[%c0_5, %c0_6] : memref<256x64xf32, #tpu.memory_space<vmem>>, vector<256x64xf32>
    tpu.vector_store %arg4[%c0_5, %c0_6], %5 {strides = array<i32>} : memref<256x64xf32, #tpu.memory_space<vmem>>, vector<256x64xf32>,
    return
  }
  func.func @transform_0(%arg0: i32) -> (i32, i32) {
    %c0_i32 = arith.constant 0 : i32
    %c0_i32_0 = arith.constant 0 : i32
    return %arg0, %c0_i32 : i32, i32
  }
  func.func @transform_1(%arg0: i32) -> (i32, i32) {
    %c0_i32 = arith.constant 0 : i32
    %c0_i32_0 = arith.constant 0 : i32
    %c0_i32_1 = arith.constant 0 : i32
    return %c0_i32, %c0_i32_0 : i32, i32
  }
  func.func @transform_2(%arg0: i32) -> (i32, i32) {
    %c0_i32 = arith.constant 0 : i32
    %c0_i32_0 = arith.constant 0 : i32
    %c0_i32_1 = arith.constant 0 : i32
    return %c0_i32, %c0_i32_0 : i32, i32
  }
  func.func @transform_3(%arg0: i32) -> (i32, i32) {
    %c0_i32 = arith.constant 0 : i32
    %c0_i32_0 = arith.constant 0 : i32
    return %arg0, %c0_i32 : i32, i32
  }
}

module attributes {stable_mosaic.version = 11 : i64} {
  func.func @_linear_kernel(%arg0: i32, %arg1: memref<160x192xbf16, #tpu.memory_space<vmem>>, %arg2: memref<192x128xbf16, #tpu.memory_space<vmem>>, %arg3: memref<1x128xf32, #tpu.memory_space<vmem>>, %arg4: memref<160x128xf32, #tpu.memory_space<vmem>>) attributes {dimension_semantics = [#tpu.dimension_semantics<parallel>], iteration_bounds = array<i64: 1>, scalar_prefetch = 0 : i64, scratch_operands = 0 : i64, tpu.core_type = #tpu.core_type<tc>, window_params = [{transform_indices = @transform_0, window_bounds = array<i64: 160, 192>}, {pipeline_mode = #tpu.pipeline_mode<synchronous>, transform_indices = @transform_1, window_bounds = array<i64: 192, 128>}, {pipeline_mode = #tpu.pipeline_mode<synchronous>, transform_indices = @transform_2, window_bounds = array<i64: 1, 128>}, {transform_indices = @transform_3, window_bounds = array<i64: 160, 128>}]} {
    %c0 = arith.constant 0 : index
    %c0_0 = arith.constant 0 : index
    %0 = vector.load %arg1[%c0, %c0_0] : memref<160x192xbf16, #tpu.memory_space<vmem>>, vector<160x192xbf16>
    %c0_1 = arith.constant 0 : index
    %c0_2 = arith.constant 0 : index
    %1 = vector.load %arg2[%c0_1, %c0_2] : memref<192x128xbf16, #tpu.memory_space<vmem>>, vector<192x128xbf16>
    %cst = arith.constant dense<0.000000e+00> : vector<160x128xf32>
    %2 = tpu.matmul %0, %1, %cst {dimension_numbers = #tpu.dot_dimension_numbers<[1], [0], [0], [1], [0, 0, 1, 1], [], []>} : vector<160x192xbf16>, vector<192x128xbf16>, vector<160x128xf32> -> vector<160x128xf32>
    %c0_3 = arith.constant 0 : index
    %c0_4 = arith.constant 0 : index
    %3 = vector.load %arg3[%c0_3, %c0_4] : memref<1x128xf32, #tpu.memory_space<vmem>>, vector<1x128xf32>
    %4 = vector.broadcast %3 : vector<1x128xf32> to vector<160x128xf32>
    %5 = arith.addf %2, %4 : vector<160x128xf32>
    %c0_5 = arith.constant 0 : index
    %c0_6 = arith.constant 0 : index
    %6 = vector.load %arg4[%c0_5, %c0_6] : memref<160x128xf32, #tpu.memory_space<vmem>>, vector<160x128xf32>
    tpu.vector_store %arg4[%c0_5, %c0_6], %5 {strides = array<i32>} : memref<160x128xf32, #tpu.memory_space<vmem>>, vector<160x128xf32>,
    return
  }
  func.func @transform_0(%arg0: i32) -> (i32, i32) {
    %c0_i32 = arith.constant 0 : i32
    %c0_i32_0 = arith.constant 0 : i32
    return %arg0, %c0_i32 : i32, i32
  }
  func.func @transform_1(%arg0: i32) -> (i32, i32) {
    %c0_i32 = arith.constant 0 : i32
    %c0_i32_0 = arith.constant 0 : i32
    %c0_i32_1 = arith.constant 0 : i32
    return %c0_i32, %c0_i32_0 : i32, i32
  }
  func.func @transform_2(%arg0: i32) -> (i32, i32) {
    %c0_i32 = arith.constant 0 : i32
    %c0_i32_0 = arith.constant 0 : i32
    %c0_i32_1 = arith.constant 0 : i32
    return %c0_i32, %c0_i32_0 : i32, i32
  }
  func.func @transform_3(%arg0: i32) -> (i32, i32) {
    %c0_i32 = arith.constant 0 : i32
    %c0_i32_0 = arith.constant 0 : i32
    return %arg0, %c0_i32 : i32, i32
  }
}

module attributes {stable_mosaic.version = 11 : i64} {
  func.func @_linear_kernel(%arg0: i32, %arg1: memref<64x384xbf16, #tpu.memory_space<vmem>>, %arg2: memref<384x128xbf16, #tpu.memory_space<vmem>>, %arg3: memref<1x128xf32, #tpu.memory_space<vmem>>, %arg4: memref<64x128xf32, #tpu.memory_space<vmem>>) attributes {dimension_semantics = [#tpu.dimension_semantics<parallel>], iteration_bounds = array<i64: 1>, scalar_prefetch = 0 : i64, scratch_operands = 0 : i64, tpu.core_type = #tpu.core_type<tc>, window_params = [{transform_indices = @transform_0, window_bounds = array<i64: 64, 384>}, {pipeline_mode = #tpu.pipeline_mode<synchronous>, transform_indices = @transform_1, window_bounds = array<i64: 384, 128>}, {pipeline_mode = #tpu.pipeline_mode<synchronous>, transform_indices = @transform_2, window_bounds = array<i64: 1, 128>}, {transform_indices = @transform_3, window_bounds = array<i64: 64, 128>}]} {
    %c0 = arith.constant 0 : index
    %c0_0 = arith.constant 0 : index
    %0 = vector.load %arg1[%c0, %c0_0] : memref<64x384xbf16, #tpu.memory_space<vmem>>, vector<64x384xbf16>
    %c0_1 = arith.constant 0 : index
    %c0_2 = arith.constant 0 : index
    %1 = vector.load %arg2[%c0_1, %c0_2] : memref<384x128xbf16, #tpu.memory_space<vmem>>, vector<384x128xbf16>
    %cst = arith.constant dense<0.000000e+00> : vector<64x128xf32>
    %2 = tpu.matmul %0, %1, %cst {dimension_numbers = #tpu.dot_dimension_numbers<[1], [0], [0], [1], [0, 0, 1, 1], [], []>} : vector<64x384xbf16>, vector<384x128xbf16>, vector<64x128xf32> -> vector<64x128xf32>
    %c0_3 = arith.constant 0 : index
    %c0_4 = arith.constant 0 : index
    %3 = vector.load %arg3[%c0_3, %c0_4] : memref<1x128xf32, #tpu.memory_space<vmem>>, vector<1x128xf32>
    %4 = vector.broadcast %3 : vector<1x128xf32> to vector<64x128xf32>
    %5 = arith.addf %2, %4 : vector<64x128xf32>
    %c0_5 = arith.constant 0 : index
    %c0_6 = arith.constant 0 : index
    %6 = vector.load %arg4[%c0_5, %c0_6] : memref<64x128xf32, #tpu.memory_space<vmem>>, vector<64x128xf32>
    tpu.vector_store %arg4[%c0_5, %c0_6], %5 {strides = array<i32>} : memref<64x128xf32, #tpu.memory_space<vmem>>, vector<64x128xf32>,
    return
  }
  func.func @transform_0(%arg0: i32) -> (i32, i32) {
    %c0_i32 = arith.constant 0 : i32
    %c0_i32_0 = arith.constant 0 : i32
    return %arg0, %c0_i32 : i32, i32
  }
  func.func @transform_1(%arg0: i32) -> (i32, i32) {
    %c0_i32 = arith.constant 0 : i32
    %c0_i32_0 = arith.constant 0 : i32
    %c0_i32_1 = arith.constant 0 : i32
    return %c0_i32, %c0_i32_0 : i32, i32
  }
  func.func @transform_2(%arg0: i32) -> (i32, i32) {
    %c0_i32 = arith.constant 0 : i32
    %c0_i32_0 = arith.constant 0 : i32
    %c0_i32_1 = arith.constant 0 : i32
    return %c0_i32, %c0_i32_0 : i32, i32
  }
  func.func @transform_3(%arg0: i32) -> (i32, i32) {
    %c0_i32 = arith.constant 0 : i32
    %c0_i32_0 = arith.constant 0 : i32
    return %arg0, %c0_i32 : i32, i32
  }
}

module attributes {stable_mosaic.version = 11 : i64} {
  func.func @_linear_kernel(%arg0: i32, %arg1: memref<16x384xbf16, #tpu.memory_space<vmem>>, %arg2: memref<384x256xbf16, #tpu.memory_space<vmem>>, %arg3: memref<1x256xf32, #tpu.memory_space<vmem>>, %arg4: memref<16x256xf32, #tpu.memory_space<vmem>>) attributes {dimension_semantics = [#tpu.dimension_semantics<parallel>], iteration_bounds = array<i64: 1>, scalar_prefetch = 0 : i64, scratch_operands = 0 : i64, tpu.core_type = #tpu.core_type<tc>, window_params = [{transform_indices = @transform_0, window_bounds = array<i64: 16, 384>}, {pipeline_mode = #tpu.pipeline_mode<synchronous>, transform_indices = @transform_1, window_bounds = array<i64: 384, 256>}, {pipeline_mode = #tpu.pipeline_mode<synchronous>, transform_indices = @transform_2, window_bounds = array<i64: 1, 256>}, {transform_indices = @transform_3, window_bounds = array<i64: 16, 256>}]} {
    %c0 = arith.constant 0 : index
    %c0_0 = arith.constant 0 : index
    %0 = vector.load %arg1[%c0, %c0_0] : memref<16x384xbf16, #tpu.memory_space<vmem>>, vector<16x384xbf16>
    %c0_1 = arith.constant 0 : index
    %c0_2 = arith.constant 0 : index
    %1 = vector.load %arg2[%c0_1, %c0_2] : memref<384x256xbf16, #tpu.memory_space<vmem>>, vector<384x256xbf16>
    %cst = arith.constant dense<0.000000e+00> : vector<16x256xf32>
    %2 = tpu.matmul %0, %1, %cst {dimension_numbers = #tpu.dot_dimension_numbers<[1], [0], [0], [1], [0, 0, 1, 1], [], []>} : vector<16x384xbf16>, vector<384x256xbf16>, vector<16x256xf32> -> vector<16x256xf32>
    %c0_3 = arith.constant 0 : index
    %c0_4 = arith.constant 0 : index
    %3 = vector.load %arg3[%c0_3, %c0_4] : memref<1x256xf32, #tpu.memory_space<vmem>>, vector<1x256xf32>
    %4 = vector.broadcast %3 : vector<1x256xf32> to vector<16x256xf32>
    %5 = arith.addf %2, %4 : vector<16x256xf32>
    %c0_5 = arith.constant 0 : index
    %c0_6 = arith.constant 0 : index
    %6 = vector.load %arg4[%c0_5, %c0_6] : memref<16x256xf32, #tpu.memory_space<vmem>>, vector<16x256xf32>
    tpu.vector_store %arg4[%c0_5, %c0_6], %5 {strides = array<i32>} : memref<16x256xf32, #tpu.memory_space<vmem>>, vector<16x256xf32>,
    return
  }
  func.func @transform_0(%arg0: i32) -> (i32, i32) {
    %c0_i32 = arith.constant 0 : i32
    %c0_i32_0 = arith.constant 0 : i32
    return %arg0, %c0_i32 : i32, i32
  }
  func.func @transform_1(%arg0: i32) -> (i32, i32) {
    %c0_i32 = arith.constant 0 : i32
    %c0_i32_0 = arith.constant 0 : i32
    %c0_i32_1 = arith.constant 0 : i32
    return %c0_i32, %c0_i32_0 : i32, i32
  }
  func.func @transform_2(%arg0: i32) -> (i32, i32) {
    %c0_i32 = arith.constant 0 : i32
    %c0_i32_0 = arith.constant 0 : i32
    %c0_i32_1 = arith.constant 0 : i32
    return %c0_i32, %c0_i32_0 : i32, i32
  }
  func.func @transform_3(%arg0: i32) -> (i32, i32) {
    %c0_i32 = arith.constant 0 : i32
    %c0_i32_0 = arith.constant 0 : i32
    return %arg0, %c0_i32 : i32, i32
  }
}

module attributes {stable_mosaic.version = 11 : i64} {
  func.func @_linear_kernel(%arg0: i32, %arg1: memref<8x256xbf16, #tpu.memory_space<vmem>>, %arg2: memref<256x64xbf16, #tpu.memory_space<vmem>>, %arg3: memref<1x64xf32, #tpu.memory_space<vmem>>, %arg4: memref<8x64xf32, #tpu.memory_space<vmem>>) attributes {dimension_semantics = [#tpu.dimension_semantics<parallel>], iteration_bounds = array<i64: 1>, scalar_prefetch = 0 : i64, scratch_operands = 0 : i64, tpu.core_type = #tpu.core_type<tc>, window_params = [{transform_indices = @transform_0, window_bounds = array<i64: 8, 256>}, {pipeline_mode = #tpu.pipeline_mode<synchronous>, transform_indices = @transform_1, window_bounds = array<i64: 256, 64>}, {pipeline_mode = #tpu.pipeline_mode<synchronous>, transform_indices = @transform_2, window_bounds = array<i64: 1, 64>}, {transform_indices = @transform_3, window_bounds = array<i64: 8, 64>}]} {
    %c0 = arith.constant 0 : index
    %c0_0 = arith.constant 0 : index
    %0 = vector.load %arg1[%c0, %c0_0] : memref<8x256xbf16, #tpu.memory_space<vmem>>, vector<8x256xbf16>
    %c0_1 = arith.constant 0 : index
    %c0_2 = arith.constant 0 : index
    %1 = vector.load %arg2[%c0_1, %c0_2] : memref<256x64xbf16, #tpu.memory_space<vmem>>, vector<256x64xbf16>
    %cst = arith.constant dense<0.000000e+00> : vector<8x64xf32>
    %2 = tpu.matmul %0, %1, %cst {dimension_numbers = #tpu.dot_dimension_numbers<[1], [0], [0], [1], [0, 0, 1, 1], [], []>} : vector<8x256xbf16>, vector<256x64xbf16>, vector<8x64xf32> -> vector<8x64xf32>
    %c0_3 = arith.constant 0 : index
    %c0_4 = arith.constant 0 : index
    %3 = vector.load %arg3[%c0_3, %c0_4] : memref<1x64xf32, #tpu.memory_space<vmem>>, vector<1x64xf32>
    %4 = vector.broadcast %3 : vector<1x64xf32> to vector<8x64xf32>
    %5 = arith.addf %2, %4 : vector<8x64xf32>
    %c0_5 = arith.constant 0 : index
    %c0_6 = arith.constant 0 : index
    %6 = vector.load %arg4[%c0_5, %c0_6] : memref<8x64xf32, #tpu.memory_space<vmem>>, vector<8x64xf32>
    tpu.vector_store %arg4[%c0_5, %c0_6], %5 {strides = array<i32>} : memref<8x64xf32, #tpu.memory_space<vmem>>, vector<8x64xf32>,
    return
  }
  func.func @transform_0(%arg0: i32) -> (i32, i32) {
    %c0_i32 = arith.constant 0 : i32
    %c0_i32_0 = arith.constant 0 : i32
    return %arg0, %c0_i32 : i32, i32
  }
  func.func @transform_1(%arg0: i32) -> (i32, i32) {
    %c0_i32 = arith.constant 0 : i32
    %c0_i32_0 = arith.constant 0 : i32
    %c0_i32_1 = arith.constant 0 : i32
    return %c0_i32, %c0_i32_0 : i32, i32
  }
  func.func @transform_2(%arg0: i32) -> (i32, i32) {
    %c0_i32 = arith.constant 0 : i32
    %c0_i32_0 = arith.constant 0 : i32
    %c0_i32_1 = arith.constant 0 : i32
    return %c0_i32, %c0_i32_0 : i32, i32
  }
  func.func @transform_3(%arg0: i32) -> (i32, i32) {
    %c0_i32 = arith.constant 0 : i32
    %c0_i32_0 = arith.constant 0 : i32
    return %arg0, %c0_i32 : i32, i32
  }
}

module attributes {stable_mosaic.version = 11 : i64} {
  func.func @_linear_kernel(%arg0: i32, %arg1: memref<8x64xbf16, #tpu.memory_space<vmem>>, %arg2: memref<64x192xbf16, #tpu.memory_space<vmem>>, %arg3: memref<1x192xf32, #tpu.memory_space<vmem>>, %arg4: memref<8x192xf32, #tpu.memory_space<vmem>>) attributes {dimension_semantics = [#tpu.dimension_semantics<parallel>], iteration_bounds = array<i64: 1>, scalar_prefetch = 0 : i64, scratch_operands = 0 : i64, tpu.core_type = #tpu.core_type<tc>, window_params = [{transform_indices = @transform_0, window_bounds = array<i64: 8, 64>}, {pipeline_mode = #tpu.pipeline_mode<synchronous>, transform_indices = @transform_1, window_bounds = array<i64: 64, 192>}, {pipeline_mode = #tpu.pipeline_mode<synchronous>, transform_indices = @transform_2, window_bounds = array<i64: 1, 192>}, {transform_indices = @transform_3, window_bounds = array<i64: 8, 192>}]} {
    %c0 = arith.constant 0 : index
    %c0_0 = arith.constant 0 : index
    %0 = vector.load %arg1[%c0, %c0_0] : memref<8x64xbf16, #tpu.memory_space<vmem>>, vector<8x64xbf16>
    %c0_1 = arith.constant 0 : index
    %c0_2 = arith.constant 0 : index
    %1 = vector.load %arg2[%c0_1, %c0_2] : memref<64x192xbf16, #tpu.memory_space<vmem>>, vector<64x192xbf16>
    %cst = arith.constant dense<0.000000e+00> : vector<8x192xf32>
    %2 = tpu.matmul %0, %1, %cst {dimension_numbers = #tpu.dot_dimension_numbers<[1], [0], [0], [1], [0, 0, 1, 1], [], []>} : vector<8x64xbf16>, vector<64x192xbf16>, vector<8x192xf32> -> vector<8x192xf32>
    %c0_3 = arith.constant 0 : index
    %c0_4 = arith.constant 0 : index
    %3 = vector.load %arg3[%c0_3, %c0_4] : memref<1x192xf32, #tpu.memory_space<vmem>>, vector<1x192xf32>
    %4 = vector.broadcast %3 : vector<1x192xf32> to vector<8x192xf32>
    %5 = arith.addf %2, %4 : vector<8x192xf32>
    %c0_5 = arith.constant 0 : index
    %c0_6 = arith.constant 0 : index
    %6 = vector.load %arg4[%c0_5, %c0_6] : memref<8x192xf32, #tpu.memory_space<vmem>>, vector<8x192xf32>
    tpu.vector_store %arg4[%c0_5, %c0_6], %5 {strides = array<i32>} : memref<8x192xf32, #tpu.memory_space<vmem>>, vector<8x192xf32>,
    return
  }
  func.func @transform_0(%arg0: i32) -> (i32, i32) {
    %c0_i32 = arith.constant 0 : i32
    %c0_i32_0 = arith.constant 0 : i32
    return %arg0, %c0_i32 : i32, i32
  }
  func.func @transform_1(%arg0: i32) -> (i32, i32) {
    %c0_i32 = arith.constant 0 : i32
    %c0_i32_0 = arith.constant 0 : i32
    %c0_i32_1 = arith.constant 0 : i32
    return %c0_i32, %c0_i32_0 : i32, i32
  }
  func.func @transform_2(%arg0: i32) -> (i32, i32) {
    %c0_i32 = arith.constant 0 : i32
    %c0_i32_0 = arith.constant 0 : i32
    %c0_i32_1 = arith.constant 0 : i32
    return %c0_i32, %c0_i32_0 : i32, i32
  }
  func.func @transform_3(%arg0: i32) -> (i32, i32) {
    %c0_i32 = arith.constant 0 : i32
    %c0_i32_0 = arith.constant 0 : i32
    return %arg0, %c0_i32 : i32, i32
  }
}

module attributes {stable_mosaic.version = 11 : i64} {
  func.func @_cattn_kernel(%arg0: i32, %arg1: memref<1x4x4x16xbf16, #tpu.memory_space<vmem>>, %arg2: memref<1x4x4x16xbf16, #tpu.memory_space<vmem>>, %arg3: memref<1x4x4x16xbf16, #tpu.memory_space<vmem>>, %arg4: memref<1x4x4x16xf32, #tpu.memory_space<vmem>>) attributes {dimension_semantics = [#tpu.dimension_semantics<parallel>], iteration_bounds = array<i64: 2>, scalar_prefetch = 0 : i64, scratch_operands = 0 : i64, tpu.core_type = #tpu.core_type<tc>, window_params = [{transform_indices = @transform_0, window_bounds = array<i64: 1, 4, 4, 16>}, {transform_indices = @transform_1, window_bounds = array<i64: 1, 4, 4, 16>}, {transform_indices = @transform_2, window_bounds = array<i64: 1, 4, 4, 16>}, {transform_indices = @transform_3, window_bounds = array<i64: 1, 4, 4, 16>}]} {
    %c0 = arith.constant 0 : index
    %c0_0 = arith.constant 0 : index
    %c0_1 = arith.constant 0 : index
    %c0_2 = arith.constant 0 : index
    %0 = vector.load %arg1[%c0, %c0_0, %c0_1, %c0_2] : memref<1x4x4x16xbf16, #tpu.memory_space<vmem>>, vector<1x4x4x16xbf16>
    %1 = vector.shape_cast %0 : vector<1x4x4x16xbf16> to vector<4x4x16xbf16>
    %c0_3 = arith.constant 0 : index
    %c0_4 = arith.constant 0 : index
    %c0_5 = arith.constant 0 : index
    %c0_6 = arith.constant 0 : index
    %2 = vector.load %arg2[%c0_3, %c0_4, %c0_5, %c0_6] : memref<1x4x4x16xbf16, #tpu.memory_space<vmem>>, vector<1x4x4x16xbf16>
    %3 = vector.shape_cast %2 : vector<1x4x4x16xbf16> to vector<4x4x16xbf16>
    %c0_7 = arith.constant 0 : index
    %c0_8 = arith.constant 0 : index
    %c0_9 = arith.constant 0 : index
    %c0_10 = arith.constant 0 : index
    %4 = vector.load %arg3[%c0_7, %c0_8, %c0_9, %c0_10] : memref<1x4x4x16xbf16, #tpu.memory_space<vmem>>, vector<1x4x4x16xbf16>
    %5 = vector.shape_cast %4 : vector<1x4x4x16xbf16> to vector<4x4x16xbf16>
    "tpu.trace_start"() <{level = 10 : i32, message = "hqd,hkd->hqk"}> : () -> ()
    %cst = arith.constant dense<0.000000e+00> : vector<4x4x4xf32>
    %6 = tpu.matmul %1, %3, %cst {dimension_numbers = #tpu.dot_dimension_numbers<[2], [2], [1], [1], [0, 0, 0, 1, 1, 1], [0], [0]>} : vector<4x4x16xbf16>, vector<4x4x16xbf16>, vector<4x4x4xf32> -> vector<4x4x4xf32>
    "tpu.trace_stop"() : () -> ()
    %cst_11 = arith.constant 0.353553385 : f32
    %7 = vector.broadcast %cst_11 : f32 to vector<4x4x4xf32>
    %8 = arith.mulf %6, %7 : vector<4x4x4xf32>
    %cst_12 = arith.constant dense<0xFF800000> : vector<4x4xf32>
    %9 = vector.multi_reduction <maximumf>, %8, %cst_12 [2] : vector<4x4x4xf32> to vector<4x4xf32>
    %10 = vector.shape_cast %9 : vector<4x4xf32> to vector<4x4x1xf32>
    %11 = vector.broadcast %10 : vector<4x4x1xf32> to vector<4x4x4xf32>
    %12 = arith.subf %8, %11 : vector<4x4x4xf32>
    %13 = math.exp %12 : vector<4x4x4xf32>
    %cst_13 = arith.constant dense<0.000000e+00> : vector<4x4xf32>
    %14 = vector.multi_reduction <add>, %13, %cst_13 [2] : vector<4x4x4xf32> to vector<4x4xf32>
    %15 = vector.shape_cast %14 : vector<4x4xf32> to vector<4x4x1xf32>
    %16 = tpu.reciprocal %15 {approx = true} : vector<4x4x1xf32> -> vector<4x4x1xf32>
    %17 = vector.broadcast %16 : vector<4x4x1xf32> to vector<4x4x4xf32>
    %18 = arith.mulf %13, %17 : vector<4x4x4xf32>
    %19 = arith.truncf %18 : vector<4x4x4xf32> to vector<4x4x4xbf16>
    "tpu.trace_start"() <{level = 10 : i32, message = "hqk,hkd->hqd"}> : () -> ()
    %cst_14 = arith.constant dense<0.000000e+00> : vector<4x4x16xf32>
    %20 = tpu.matmul %19, %5, %cst_14 {dimension_numbers = #tpu.dot_dimension_numbers<[2], [1], [1], [2], [0, 0, 0, 1, 1, 2], [0], [0]>} : vector<4x4x4xbf16>, vector<4x4x16xbf16>, vector<4x4x16xf32> -> vector<4x4x16xf32>
    "tpu.trace_stop"() : () -> ()
    %c0_15 = arith.constant 0 : index
    %c0_16 = arith.constant 0 : index
    %c0_17 = arith.constant 0 : index
    %c0_18 = arith.constant 0 : index
    %21 = vector.load %arg4[%c0_15, %c0_16, %c0_17, %c0_18] : memref<1x4x4x16xf32, #tpu.memory_space<vmem>>, vector<1x4x4x16xf32>
    %22 = vector.shape_cast %21 : vector<1x4x4x16xf32> to vector<4x4x16xf32>
    %23 = vector.shape_cast %20 : vector<4x4x16xf32> to vector<1x4x4x16xf32>
    tpu.vector_store %arg4[%c0_15, %c0_16, %c0_17, %c0_18], %23 {strides = array<i32>} : memref<1x4x4x16xf32, #tpu.memory_space<vmem>>, vector<1x4x4x16xf32>,
    return
  }
  func.func @transform_0(%arg0: i32) -> (i32, i32, i32, i32) {
    %c0_i32 = arith.constant 0 : i32
    %c0_i32_0 = arith.constant 0 : i32
    %c0_i32_1 = arith.constant 0 : i32
    %c0_i32_2 = arith.constant 0 : i32
    return %arg0, %c0_i32, %c0_i32_0, %c0_i32_1 : i32, i32, i32, i32
  }
  func.func @transform_1(%arg0: i32) -> (i32, i32, i32, i32) {
    %c0_i32 = arith.constant 0 : i32
    %c0_i32_0 = arith.constant 0 : i32
    %c0_i32_1 = arith.constant 0 : i32
    %c0_i32_2 = arith.constant 0 : i32
    return %arg0, %c0_i32, %c0_i32_0, %c0_i32_1 : i32, i32, i32, i32
  }
  func.func @transform_2(%arg0: i32) -> (i32, i32, i32, i32) {
    %c0_i32 = arith.constant 0 : i32
    %c0_i32_0 = arith.constant 0 : i32
    %c0_i32_1 = arith.constant 0 : i32
    %c0_i32_2 = arith.constant 0 : i32
    return %arg0, %c0_i32, %c0_i32_0, %c0_i32_1 : i32, i32, i32, i32
  }
  func.func @transform_3(%arg0: i32) -> (i32, i32, i32, i32) {
    %c0_i32 = arith.constant 0 : i32
    %c0_i32_0 = arith.constant 0 : i32
    %c0_i32_1 = arith.constant 0 : i32
    %c0_i32_2 = arith.constant 0 : i32
    return %arg0, %c0_i32, %c0_i32_0, %c0_i32_1 : i32, i32, i32, i32
  }
}

module attributes {stable_mosaic.version = 11 : i64} {
  func.func @_linear_kernel(%arg0: i32, %arg1: memref<8x64xbf16, #tpu.memory_space<vmem>>, %arg2: memref<64x64xbf16, #tpu.memory_space<vmem>>, %arg3: memref<1x64xf32, #tpu.memory_space<vmem>>, %arg4: memref<8x64xf32, #tpu.memory_space<vmem>>) attributes {dimension_semantics = [#tpu.dimension_semantics<parallel>], iteration_bounds = array<i64: 1>, scalar_prefetch = 0 : i64, scratch_operands = 0 : i64, tpu.core_type = #tpu.core_type<tc>, window_params = [{transform_indices = @transform_0, window_bounds = array<i64: 8, 64>}, {pipeline_mode = #tpu.pipeline_mode<synchronous>, transform_indices = @transform_1, window_bounds = array<i64: 64, 64>}, {pipeline_mode = #tpu.pipeline_mode<synchronous>, transform_indices = @transform_2, window_bounds = array<i64: 1, 64>}, {transform_indices = @transform_3, window_bounds = array<i64: 8, 64>}]} {
    %c0 = arith.constant 0 : index
    %c0_0 = arith.constant 0 : index
    %0 = vector.load %arg1[%c0, %c0_0] : memref<8x64xbf16, #tpu.memory_space<vmem>>, vector<8x64xbf16>
    %c0_1 = arith.constant 0 : index
    %c0_2 = arith.constant 0 : index
    %1 = vector.load %arg2[%c0_1, %c0_2] : memref<64x64xbf16, #tpu.memory_space<vmem>>, vector<64x64xbf16>
    %cst = arith.constant dense<0.000000e+00> : vector<8x64xf32>
    %2 = tpu.matmul %0, %1, %cst {dimension_numbers = #tpu.dot_dimension_numbers<[1], [0], [0], [1], [0, 0, 1, 1], [], []>} : vector<8x64xbf16>, vector<64x64xbf16>, vector<8x64xf32> -> vector<8x64xf32>
    %c0_3 = arith.constant 0 : index
    %c0_4 = arith.constant 0 : index
    %3 = vector.load %arg3[%c0_3, %c0_4] : memref<1x64xf32, #tpu.memory_space<vmem>>, vector<1x64xf32>
    %4 = vector.broadcast %3 : vector<1x64xf32> to vector<8x64xf32>
    %5 = arith.addf %2, %4 : vector<8x64xf32>
    %c0_5 = arith.constant 0 : index
    %c0_6 = arith.constant 0 : index
    %6 = vector.load %arg4[%c0_5, %c0_6] : memref<8x64xf32, #tpu.memory_space<vmem>>, vector<8x64xf32>
    tpu.vector_store %arg4[%c0_5, %c0_6], %5 {strides = array<i32>} : memref<8x64xf32, #tpu.memory_space<vmem>>, vector<8x64xf32>,
    return
  }
  func.func @transform_0(%arg0: i32) -> (i32, i32) {
    %c0_i32 = arith.constant 0 : i32
    %c0_i32_0 = arith.constant 0 : i32
    return %arg0, %c0_i32 : i32, i32
  }
  func.func @transform_1(%arg0: i32) -> (i32, i32) {
    %c0_i32 = arith.constant 0 : i32
    %c0_i32_0 = arith.constant 0 : i32
    %c0_i32_1 = arith.constant 0 : i32
    return %c0_i32, %c0_i32_0 : i32, i32
  }
  func.func @transform_2(%arg0: i32) -> (i32, i32) {
    %c0_i32 = arith.constant 0 : i32
    %c0_i32_0 = arith.constant 0 : i32
    %c0_i32_1 = arith.constant 0 : i32
    return %c0_i32, %c0_i32_0 : i32, i32
  }
  func.func @transform_3(%arg0: i32) -> (i32, i32) {
    %c0_i32 = arith.constant 0 : i32
    %c0_i32_0 = arith.constant 0 : i32
    return %arg0, %c0_i32 : i32, i32
  }
}

module attributes {stable_mosaic.version = 11 : i64} {
  func.func @_linear_kernel(%arg0: i32, %arg1: memref<8x64xbf16, #tpu.memory_space<vmem>>, %arg2: memref<64x256xbf16, #tpu.memory_space<vmem>>, %arg3: memref<1x256xf32, #tpu.memory_space<vmem>>, %arg4: memref<8x256xf32, #tpu.memory_space<vmem>>) attributes {dimension_semantics = [#tpu.dimension_semantics<parallel>], iteration_bounds = array<i64: 1>, scalar_prefetch = 0 : i64, scratch_operands = 0 : i64, tpu.core_type = #tpu.core_type<tc>, window_params = [{transform_indices = @transform_0, window_bounds = array<i64: 8, 64>}, {pipeline_mode = #tpu.pipeline_mode<synchronous>, transform_indices = @transform_1, window_bounds = array<i64: 64, 256>}, {pipeline_mode = #tpu.pipeline_mode<synchronous>, transform_indices = @transform_2, window_bounds = array<i64: 1, 256>}, {transform_indices = @transform_3, window_bounds = array<i64: 8, 256>}]} {
    %c0 = arith.constant 0 : index
    %c0_0 = arith.constant 0 : index
    %0 = vector.load %arg1[%c0, %c0_0] : memref<8x64xbf16, #tpu.memory_space<vmem>>, vector<8x64xbf16>
    %c0_1 = arith.constant 0 : index
    %c0_2 = arith.constant 0 : index
    %1 = vector.load %arg2[%c0_1, %c0_2] : memref<64x256xbf16, #tpu.memory_space<vmem>>, vector<64x256xbf16>
    %cst = arith.constant dense<0.000000e+00> : vector<8x256xf32>
    %2 = tpu.matmul %0, %1, %cst {dimension_numbers = #tpu.dot_dimension_numbers<[1], [0], [0], [1], [0, 0, 1, 1], [], []>} : vector<8x64xbf16>, vector<64x256xbf16>, vector<8x256xf32> -> vector<8x256xf32>
    %c0_3 = arith.constant 0 : index
    %c0_4 = arith.constant 0 : index
    %3 = vector.load %arg3[%c0_3, %c0_4] : memref<1x256xf32, #tpu.memory_space<vmem>>, vector<1x256xf32>
    %4 = vector.broadcast %3 : vector<1x256xf32> to vector<8x256xf32>
    %5 = arith.addf %2, %4 : vector<8x256xf32>
    %cst_5 = arith.constant 0.000000e+00 : f32
    %6 = vector.broadcast %cst_5 : f32 to vector<8x256xf32>
    %7 = arith.maximumf %5, %6 : vector<8x256xf32>
    %c0_6 = arith.constant 0 : index
    %c0_7 = arith.constant 0 : index
    %8 = vector.load %arg4[%c0_6, %c0_7] : memref<8x256xf32, #tpu.memory_space<vmem>>, vector<8x256xf32>
    tpu.vector_store %arg4[%c0_6, %c0_7], %7 {strides = array<i32>} : memref<8x256xf32, #tpu.memory_space<vmem>>, vector<8x256xf32>,
    return
  }
  func.func @transform_0(%arg0: i32) -> (i32, i32) {
    %c0_i32 = arith.constant 0 : i32
    %c0_i32_0 = arith.constant 0 : i32
    return %arg0, %c0_i32 : i32, i32
  }
  func.func @transform_1(%arg0: i32) -> (i32, i32) {
    %c0_i32 = arith.constant 0 : i32
    %c0_i32_0 = arith.constant 0 : i32
    %c0_i32_1 = arith.constant 0 : i32
    return %c0_i32, %c0_i32_0 : i32, i32
  }
  func.func @transform_2(%arg0: i32) -> (i32, i32) {
    %c0_i32 = arith.constant 0 : i32
    %c0_i32_0 = arith.constant 0 : i32
    %c0_i32_1 = arith.constant 0 : i32
    return %c0_i32, %c0_i32_0 : i32, i32
  }
  func.func @transform_3(%arg0: i32) -> (i32, i32) {
    %c0_i32 = arith.constant 0 : i32
    %c0_i32_0 = arith.constant 0 : i32
    return %arg0, %c0_i32 : i32, i32
  }
}

module attributes {stable_mosaic.version = 11 : i64} {
  func.func @_linear_kernel(%arg0: i32, %arg1: memref<8x64xbf16, #tpu.memory_space<vmem>>, %arg2: memref<64x128xbf16, #tpu.memory_space<vmem>>, %arg3: memref<1x128xf32, #tpu.memory_space<vmem>>, %arg4: memref<8x128xf32, #tpu.memory_space<vmem>>) attributes {dimension_semantics = [#tpu.dimension_semantics<parallel>], iteration_bounds = array<i64: 1>, scalar_prefetch = 0 : i64, scratch_operands = 0 : i64, tpu.core_type = #tpu.core_type<tc>, window_params = [{transform_indices = @transform_0, window_bounds = array<i64: 8, 64>}, {pipeline_mode = #tpu.pipeline_mode<synchronous>, transform_indices = @transform_1, window_bounds = array<i64: 64, 128>}, {pipeline_mode = #tpu.pipeline_mode<synchronous>, transform_indices = @transform_2, window_bounds = array<i64: 1, 128>}, {transform_indices = @transform_3, window_bounds = array<i64: 8, 128>}]} {
    %c0 = arith.constant 0 : index
    %c0_0 = arith.constant 0 : index
    %0 = vector.load %arg1[%c0, %c0_0] : memref<8x64xbf16, #tpu.memory_space<vmem>>, vector<8x64xbf16>
    %c0_1 = arith.constant 0 : index
    %c0_2 = arith.constant 0 : index
    %1 = vector.load %arg2[%c0_1, %c0_2] : memref<64x128xbf16, #tpu.memory_space<vmem>>, vector<64x128xbf16>
    %cst = arith.constant dense<0.000000e+00> : vector<8x128xf32>
    %2 = tpu.matmul %0, %1, %cst {dimension_numbers = #tpu.dot_dimension_numbers<[1], [0], [0], [1], [0, 0, 1, 1], [], []>} : vector<8x64xbf16>, vector<64x128xbf16>, vector<8x128xf32> -> vector<8x128xf32>
    %c0_3 = arith.constant 0 : index
    %c0_4 = arith.constant 0 : index
    %3 = vector.load %arg3[%c0_3, %c0_4] : memref<1x128xf32, #tpu.memory_space<vmem>>, vector<1x128xf32>
    %4 = vector.broadcast %3 : vector<1x128xf32> to vector<8x128xf32>
    %5 = arith.addf %2, %4 : vector<8x128xf32>
    %c0_5 = arith.constant 0 : index
    %c0_6 = arith.constant 0 : index
    %6 = vector.load %arg4[%c0_5, %c0_6] : memref<8x128xf32, #tpu.memory_space<vmem>>, vector<8x128xf32>
    tpu.vector_store %arg4[%c0_5, %c0_6], %5 {strides = array<i32>} : memref<8x128xf32, #tpu.memory_space<vmem>>, vector<8x128xf32>,
    return
  }
  func.func @transform_0(%arg0: i32) -> (i32, i32) {
    %c0_i32 = arith.constant 0 : i32
    %c0_i32_0 = arith.constant 0 : i32
    return %arg0, %c0_i32 : i32, i32
  }
  func.func @transform_1(%arg0: i32) -> (i32, i32) {
    %c0_i32 = arith.constant 0 : i32
    %c0_i32_0 = arith.constant 0 : i32
    %c0_i32_1 = arith.constant 0 : i32
    return %c0_i32, %c0_i32_0 : i32, i32
  }
  func.func @transform_2(%arg0: i32) -> (i32, i32) {
    %c0_i32 = arith.constant 0 : i32
    %c0_i32_0 = arith.constant 0 : i32
    %c0_i32_1 = arith.constant 0 : i32
    return %c0_i32, %c0_i32_0 : i32, i32
  }
  func.func @transform_3(%arg0: i32) -> (i32, i32) {
    %c0_i32 = arith.constant 0 : i32
    %c0_i32_0 = arith.constant 0 : i32
    return %arg0, %c0_i32 : i32, i32
  }
}

module attributes {stable_mosaic.version = 11 : i64} {
  func.func @_linear_kernel(%arg0: i32, %arg1: memref<8x200xbf16, #tpu.memory_space<vmem>>, %arg2: memref<200x64xbf16, #tpu.memory_space<vmem>>, %arg3: memref<1x64xf32, #tpu.memory_space<vmem>>, %arg4: memref<8x64xf32, #tpu.memory_space<vmem>>) attributes {dimension_semantics = [#tpu.dimension_semantics<parallel>], iteration_bounds = array<i64: 1>, scalar_prefetch = 0 : i64, scratch_operands = 0 : i64, tpu.core_type = #tpu.core_type<tc>, window_params = [{transform_indices = @transform_0, window_bounds = array<i64: 8, 200>}, {pipeline_mode = #tpu.pipeline_mode<synchronous>, transform_indices = @transform_1, window_bounds = array<i64: 200, 64>}, {pipeline_mode = #tpu.pipeline_mode<synchronous>, transform_indices = @transform_2, window_bounds = array<i64: 1, 64>}, {transform_indices = @transform_3, window_bounds = array<i64: 8, 64>}]} {
    %c0 = arith.constant 0 : index
    %c0_0 = arith.constant 0 : index
    %0 = vector.load %arg1[%c0, %c0_0] : memref<8x200xbf16, #tpu.memory_space<vmem>>, vector<8x200xbf16>
    %c0_1 = arith.constant 0 : index
    %c0_2 = arith.constant 0 : index
    %1 = vector.load %arg2[%c0_1, %c0_2] : memref<200x64xbf16, #tpu.memory_space<vmem>>, vector<200x64xbf16>
    %cst = arith.constant dense<0.000000e+00> : vector<8x64xf32>
    %2 = tpu.matmul %0, %1, %cst {dimension_numbers = #tpu.dot_dimension_numbers<[1], [0], [0], [1], [0, 0, 1, 1], [], []>} : vector<8x200xbf16>, vector<200x64xbf16>, vector<8x64xf32> -> vector<8x64xf32>
    %c0_3 = arith.constant 0 : index
    %c0_4 = arith.constant 0 : index
    %3 = vector.load %arg3[%c0_3, %c0_4] : memref<1x64xf32, #tpu.memory_space<vmem>>, vector<1x64xf32>
    %4 = vector.broadcast %3 : vector<1x64xf32> to vector<8x64xf32>
    %5 = arith.addf %2, %4 : vector<8x64xf32>
    %c0_5 = arith.constant 0 : index
    %c0_6 = arith.constant 0 : index
    %6 = vector.load %arg4[%c0_5, %c0_6] : memref<8x64xf32, #tpu.memory_space<vmem>>, vector<8x64xf32>
    tpu.vector_store %arg4[%c0_5, %c0_6], %5 {strides = array<i32>} : memref<8x64xf32, #tpu.memory_space<vmem>>, vector<8x64xf32>,
    return
  }
  func.func @transform_0(%arg0: i32) -> (i32, i32) {
    %c0_i32 = arith.constant 0 : i32
    %c0_i32_0 = arith.constant 0 : i32
    return %arg0, %c0_i32 : i32, i32
  }
  func.func @transform_1(%arg0: i32) -> (i32, i32) {
    %c0_i32 = arith.constant 0 : i32
    %c0_i32_0 = arith.constant 0 : i32
    %c0_i32_1 = arith.constant 0 : i32
    return %c0_i32, %c0_i32_0 : i32, i32
  }
  func.func @transform_2(%arg0: i32) -> (i32, i32) {
    %c0_i32 = arith.constant 0 : i32
    %c0_i32_0 = arith.constant 0 : i32
    %c0_i32_1 = arith.constant 0 : i32
    return %c0_i32, %c0_i32_0 : i32, i32
  }
  func.func @transform_3(%arg0: i32) -> (i32, i32) {
    %c0_i32 = arith.constant 0 : i32
    %c0_i32_0 = arith.constant 0 : i32
    return %arg0, %c0_i32 : i32, i32
  }
}

module attributes {stable_mosaic.version = 11 : i64} {
  func.func @_cattn_kernel(%arg0: i32, %arg1: memref<1x4x3x16xbf16, #tpu.memory_space<vmem>>, %arg2: memref<1x4x3x16xbf16, #tpu.memory_space<vmem>>, %arg3: memref<1x4x3x16xbf16, #tpu.memory_space<vmem>>, %arg4: memref<1x4x3x16xf32, #tpu.memory_space<vmem>>) attributes {dimension_semantics = [#tpu.dimension_semantics<parallel>], iteration_bounds = array<i64: 2>, scalar_prefetch = 0 : i64, scratch_operands = 0 : i64, tpu.core_type = #tpu.core_type<tc>, window_params = [{transform_indices = @transform_0, window_bounds = array<i64: 1, 4, 3, 16>}, {transform_indices = @transform_1, window_bounds = array<i64: 1, 4, 3, 16>}, {transform_indices = @transform_2, window_bounds = array<i64: 1, 4, 3, 16>}, {transform_indices = @transform_3, window_bounds = array<i64: 1, 4, 3, 16>}]} {
    %c0 = arith.constant 0 : index
    %c0_0 = arith.constant 0 : index
    %c0_1 = arith.constant 0 : index
    %c0_2 = arith.constant 0 : index
    %0 = vector.load %arg1[%c0, %c0_0, %c0_1, %c0_2] : memref<1x4x3x16xbf16, #tpu.memory_space<vmem>>, vector<1x4x3x16xbf16>
    %1 = vector.shape_cast %0 : vector<1x4x3x16xbf16> to vector<4x3x16xbf16>
    %c0_3 = arith.constant 0 : index
    %c0_4 = arith.constant 0 : index
    %c0_5 = arith.constant 0 : index
    %c0_6 = arith.constant 0 : index
    %2 = vector.load %arg2[%c0_3, %c0_4, %c0_5, %c0_6] : memref<1x4x3x16xbf16, #tpu.memory_space<vmem>>, vector<1x4x3x16xbf16>
    %3 = vector.shape_cast %2 : vector<1x4x3x16xbf16> to vector<4x3x16xbf16>
    %c0_7 = arith.constant 0 : index
    %c0_8 = arith.constant 0 : index
    %c0_9 = arith.constant 0 : index
    %c0_10 = arith.constant 0 : index
    %4 = vector.load %arg3[%c0_7, %c0_8, %c0_9, %c0_10] : memref<1x4x3x16xbf16, #tpu.memory_space<vmem>>, vector<1x4x3x16xbf16>
    %5 = vector.shape_cast %4 : vector<1x4x3x16xbf16> to vector<4x3x16xbf16>
    "tpu.trace_start"() <{level = 10 : i32, message = "hqd,hkd->hqk"}> : () -> ()
    %cst = arith.constant dense<0.000000e+00> : vector<4x3x3xf32>
    %6 = tpu.matmul %1, %3, %cst {dimension_numbers = #tpu.dot_dimension_numbers<[2], [2], [1], [1], [0, 0, 0, 1, 1, 1], [0], [0]>} : vector<4x3x16xbf16>, vector<4x3x16xbf16>, vector<4x3x3xf32> -> vector<4x3x3xf32>
    "tpu.trace_stop"() : () -> ()
    %cst_11 = arith.constant 0.353553385 : f32
    %7 = vector.broadcast %cst_11 : f32 to vector<4x3x3xf32>
    %8 = arith.mulf %6, %7 : vector<4x3x3xf32>
    %9 = tpu.iota {dimensions = array<i32: 1>} : vector<4x3x3xi32>
    %10 = tpu.iota {dimensions = array<i32: 2>} : vector<4x3x3xi32>
    %11 = arith.cmpi sle, %10, %9 : vector<4x3x3xi32>
    %cst_12 = arith.constant -1.000000e+30 : f32
    %12 = vector.broadcast %cst_12 : f32 to vector<4x3x3xf32>
    %13 = arith.select %11, %8, %12 : vector<4x3x3xi1>, vector<4x3x3xf32>
    %cst_13 = arith.constant dense<0xFF800000> : vector<4x3xf32>
    %14 = vector.multi_reduction <maximumf>, %13, %cst_13 [2] : vector<4x3x3xf32> to vector<4x3xf32>
    %15 = vector.shape_cast %14 : vector<4x3xf32> to vector<4x3x1xf32>
    %16 = vector.broadcast %15 : vector<4x3x1xf32> to vector<4x3x3xf32>
    %17 = arith.subf %13, %16 : vector<4x3x3xf32>
    %18 = math.exp %17 : vector<4x3x3xf32>
    %cst_14 = arith.constant dense<0.000000e+00> : vector<4x3xf32>
    %19 = vector.multi_reduction <add>, %18, %cst_14 [2] : vector<4x3x3xf32> to vector<4x3xf32>
    %20 = vector.shape_cast %19 : vector<4x3xf32> to vector<4x3x1xf32>
    %21 = tpu.reciprocal %20 {approx = true} : vector<4x3x1xf32> -> vector<4x3x1xf32>
    %22 = vector.broadcast %21 : vector<4x3x1xf32> to vector<4x3x3xf32>
    %23 = arith.mulf %18, %22 : vector<4x3x3xf32>
    %24 = arith.truncf %23 : vector<4x3x3xf32> to vector<4x3x3xbf16>
    "tpu.trace_start"() <{level = 10 : i32, message = "hqk,hkd->hqd"}> : () -> ()
    %cst_15 = arith.constant dense<0.000000e+00> : vector<4x3x16xf32>
    %25 = tpu.matmul %24, %5, %cst_15 {dimension_numbers = #tpu.dot_dimension_numbers<[2], [1], [1], [2], [0, 0, 0, 1, 1, 2], [0], [0]>} : vector<4x3x3xbf16>, vector<4x3x16xbf16>, vector<4x3x16xf32> -> vector<4x3x16xf32>
    "tpu.trace_stop"() : () -> ()
    %c0_16 = arith.constant 0 : index
    %c0_17 = arith.constant 0 : index
    %c0_18 = arith.constant 0 : index
    %c0_19 = arith.constant 0 : index
    %26 = vector.load %arg4[%c0_16, %c0_17, %c0_18, %c0_19] : memref<1x4x3x16xf32, #tpu.memory_space<vmem>>, vector<1x4x3x16xf32>
    %27 = vector.shape_cast %26 : vector<1x4x3x16xf32> to vector<4x3x16xf32>
    %28 = vector.shape_cast %25 : vector<4x3x16xf32> to vector<1x4x3x16xf32>
    tpu.vector_store %arg4[%c0_16, %c0_17, %c0_18, %c0_19], %28 {strides = array<i32>} : memref<1x4x3x16xf32, #tpu.memory_space<vmem>>, vector<1x4x3x16xf32>,
    return
  }
  func.func @transform_0(%arg0: i32) -> (i32, i32, i32, i32) {
    %c0_i32 = arith.constant 0 : i32
    %c0_i32_0 = arith.constant 0 : i32
    %c0_i32_1 = arith.constant 0 : i32
    %c0_i32_2 = arith.constant 0 : i32
    return %arg0, %c0_i32, %c0_i32_0, %c0_i32_1 : i32, i32, i32, i32
  }
  func.func @transform_1(%arg0: i32) -> (i32, i32, i32, i32) {
    %c0_i32 = arith.constant 0 : i32
    %c0_i32_0 = arith.constant 0 : i32
    %c0_i32_1 = arith.constant 0 : i32
    %c0_i32_2 = arith.constant 0 : i32
    return %arg0, %c0_i32, %c0_i32_0, %c0_i32_1 : i32, i32, i32, i32
  }
  func.func @transform_2(%arg0: i32) -> (i32, i32, i32, i32) {
    %c0_i32 = arith.constant 0 : i32
    %c0_i32_0 = arith.constant 0 : i32
    %c0_i32_1 = arith.constant 0 : i32
    %c0_i32_2 = arith.constant 0 : i32
    return %arg0, %c0_i32, %c0_i32_0, %c0_i32_1 : i32, i32, i32, i32
  }
  func.func @transform_3(%arg0: i32) -> (i32, i32, i32, i32) {
    %c0_i32 = arith.constant 0 : i32
    %c0_i32_0 = arith.constant 0 : i32
    %c0_i32_1 = arith.constant 0 : i32
    %c0_i32_2 = arith.constant 0 : i32
    return %arg0, %c0_i32, %c0_i32_0, %c0_i32_1 : i32, i32, i32, i32
  }
}

module attributes {stable_mosaic.version = 11 : i64} {
  func.func @_cattn_kernel(%arg0: i32, %arg1: memref<1x4x3x16xbf16, #tpu.memory_space<vmem>>, %arg2: memref<1x4x4x16xbf16, #tpu.memory_space<vmem>>, %arg3: memref<1x4x4x16xbf16, #tpu.memory_space<vmem>>, %arg4: memref<1x4x3x16xf32, #tpu.memory_space<vmem>>) attributes {dimension_semantics = [#tpu.dimension_semantics<parallel>], iteration_bounds = array<i64: 2>, scalar_prefetch = 0 : i64, scratch_operands = 0 : i64, tpu.core_type = #tpu.core_type<tc>, window_params = [{transform_indices = @transform_0, window_bounds = array<i64: 1, 4, 3, 16>}, {transform_indices = @transform_1, window_bounds = array<i64: 1, 4, 4, 16>}, {transform_indices = @transform_2, window_bounds = array<i64: 1, 4, 4, 16>}, {transform_indices = @transform_3, window_bounds = array<i64: 1, 4, 3, 16>}]} {
    %c0 = arith.constant 0 : index
    %c0_0 = arith.constant 0 : index
    %c0_1 = arith.constant 0 : index
    %c0_2 = arith.constant 0 : index
    %0 = vector.load %arg1[%c0, %c0_0, %c0_1, %c0_2] : memref<1x4x3x16xbf16, #tpu.memory_space<vmem>>, vector<1x4x3x16xbf16>
    %1 = vector.shape_cast %0 : vector<1x4x3x16xbf16> to vector<4x3x16xbf16>
    %c0_3 = arith.constant 0 : index
    %c0_4 = arith.constant 0 : index
    %c0_5 = arith.constant 0 : index
    %c0_6 = arith.constant 0 : index
    %2 = vector.load %arg2[%c0_3, %c0_4, %c0_5, %c0_6] : memref<1x4x4x16xbf16, #tpu.memory_space<vmem>>, vector<1x4x4x16xbf16>
    %3 = vector.shape_cast %2 : vector<1x4x4x16xbf16> to vector<4x4x16xbf16>
    %c0_7 = arith.constant 0 : index
    %c0_8 = arith.constant 0 : index
    %c0_9 = arith.constant 0 : index
    %c0_10 = arith.constant 0 : index
    %4 = vector.load %arg3[%c0_7, %c0_8, %c0_9, %c0_10] : memref<1x4x4x16xbf16, #tpu.memory_space<vmem>>, vector<1x4x4x16xbf16>
    %5 = vector.shape_cast %4 : vector<1x4x4x16xbf16> to vector<4x4x16xbf16>
    "tpu.trace_start"() <{level = 10 : i32, message = "hqd,hkd->hqk"}> : () -> ()
    %cst = arith.constant dense<0.000000e+00> : vector<4x3x4xf32>
    %6 = tpu.matmul %1, %3, %cst {dimension_numbers = #tpu.dot_dimension_numbers<[2], [2], [1], [1], [0, 0, 0, 1, 1, 1], [0], [0]>} : vector<4x3x16xbf16>, vector<4x4x16xbf16>, vector<4x3x4xf32> -> vector<4x3x4xf32>
    "tpu.trace_stop"() : () -> ()
    %cst_11 = arith.constant 0.353553385 : f32
    %7 = vector.broadcast %cst_11 : f32 to vector<4x3x4xf32>
    %8 = arith.mulf %6, %7 : vector<4x3x4xf32>
    %cst_12 = arith.constant dense<0xFF800000> : vector<4x3xf32>
    %9 = vector.multi_reduction <maximumf>, %8, %cst_12 [2] : vector<4x3x4xf32> to vector<4x3xf32>
    %10 = vector.shape_cast %9 : vector<4x3xf32> to vector<4x3x1xf32>
    %11 = vector.broadcast %10 : vector<4x3x1xf32> to vector<4x3x4xf32>
    %12 = arith.subf %8, %11 : vector<4x3x4xf32>
    %13 = math.exp %12 : vector<4x3x4xf32>
    %cst_13 = arith.constant dense<0.000000e+00> : vector<4x3xf32>
    %14 = vector.multi_reduction <add>, %13, %cst_13 [2] : vector<4x3x4xf32> to vector<4x3xf32>
    %15 = vector.shape_cast %14 : vector<4x3xf32> to vector<4x3x1xf32>
    %16 = tpu.reciprocal %15 {approx = true} : vector<4x3x1xf32> -> vector<4x3x1xf32>
    %17 = vector.broadcast %16 : vector<4x3x1xf32> to vector<4x3x4xf32>
    %18 = arith.mulf %13, %17 : vector<4x3x4xf32>
    %19 = arith.truncf %18 : vector<4x3x4xf32> to vector<4x3x4xbf16>
    "tpu.trace_start"() <{level = 10 : i32, message = "hqk,hkd->hqd"}> : () -> ()
    %cst_14 = arith.constant dense<0.000000e+00> : vector<4x3x16xf32>
    %20 = tpu.matmul %19, %5, %cst_14 {dimension_numbers = #tpu.dot_dimension_numbers<[2], [1], [1], [2], [0, 0, 0, 1, 1, 2], [0], [0]>} : vector<4x3x4xbf16>, vector<4x4x16xbf16>, vector<4x3x16xf32> -> vector<4x3x16xf32>
    "tpu.trace_stop"() : () -> ()
    %c0_15 = arith.constant 0 : index
    %c0_16 = arith.constant 0 : index
    %c0_17 = arith.constant 0 : index
    %c0_18 = arith.constant 0 : index
    %21 = vector.load %arg4[%c0_15, %c0_16, %c0_17, %c0_18] : memref<1x4x3x16xf32, #tpu.memory_space<vmem>>, vector<1x4x3x16xf32>
    %22 = vector.shape_cast %21 : vector<1x4x3x16xf32> to vector<4x3x16xf32>
    %23 = vector.shape_cast %20 : vector<4x3x16xf32> to vector<1x4x3x16xf32>
    tpu.vector_store %arg4[%c0_15, %c0_16, %c0_17, %c0_18], %23 {strides = array<i32>} : memref<1x4x3x16xf32, #tpu.memory_space<vmem>>, vector<1x4x3x16xf32>,
    return
  }
  func.func @transform_0(%arg0: i32) -> (i32, i32, i32, i32) {
    %c0_i32 = arith.constant 0 : i32
    %c0_i32_0 = arith.constant 0 : i32
    %c0_i32_1 = arith.constant 0 : i32
    %c0_i32_2 = arith.constant 0 : i32
    return %arg0, %c0_i32, %c0_i32_0, %c0_i32_1 : i32, i32, i32, i32
  }
  func.func @transform_1(%arg0: i32) -> (i32, i32, i32, i32) {
    %c0_i32 = arith.constant 0 : i32
    %c0_i32_0 = arith.constant 0 : i32
    %c0_i32_1 = arith.constant 0 : i32
    %c0_i32_2 = arith.constant 0 : i32
    return %arg0, %c0_i32, %c0_i32_0, %c0_i32_1 : i32, i32, i32, i32
  }
  func.func @transform_2(%arg0: i32) -> (i32, i32, i32, i32) {
    %c0_i32 = arith.constant 0 : i32
    %c0_i32_0 = arith.constant 0 : i32
    %c0_i32_1 = arith.constant 0 : i32
    %c0_i32_2 = arith.constant 0 : i32
    return %arg0, %c0_i32, %c0_i32_0, %c0_i32_1 : i32, i32, i32, i32
  }
  func.func @transform_3(%arg0: i32) -> (i32, i32, i32, i32) {
    %c0_i32 = arith.constant 0 : i32
    %c0_i32_0 = arith.constant 0 : i32
    %c0_i32_1 = arith.constant 0 : i32
    %c0_i32_2 = arith.constant 0 : i32
    return %arg0, %c0_i32, %c0_i32_0, %c0_i32_1 : i32, i32, i32, i32
  }
}

module attributes {stable_mosaic.version = 11 : i64} {
  func.func @_fc_fused_kernel(%arg0: i32, %arg1: memref<8x64xbf16, #tpu.memory_space<vmem>>, %arg2: memref<64x32xbf16, #tpu.memory_space<vmem>>, %arg3: memref<1x32xf32, #tpu.memory_space<vmem>>, %arg4: memref<32x8xbf16, #tpu.memory_space<vmem>>, %arg5: memref<1x8xf32, #tpu.memory_space<vmem>>, %arg6: memref<8x8xf32, #tpu.memory_space<vmem>>) attributes {dimension_semantics = [#tpu.dimension_semantics<parallel>], iteration_bounds = array<i64: 1>, scalar_prefetch = 0 : i64, scratch_operands = 0 : i64, tpu.core_type = #tpu.core_type<tc>, window_params = [{transform_indices = @transform_0, window_bounds = array<i64: 8, 64>}, {pipeline_mode = #tpu.pipeline_mode<synchronous>, transform_indices = @transform_1, window_bounds = array<i64: 64, 32>}, {pipeline_mode = #tpu.pipeline_mode<synchronous>, transform_indices = @transform_2, window_bounds = array<i64: 1, 32>}, {pipeline_mode = #tpu.pipeline_mode<synchronous>, transform_indices = @transform_3, window_bounds = array<i64: 32, 8>}, {pipeline_mode = #tpu.pipeline_mode<synchronous>, transform_indices = @transform_4, window_bounds = array<i64: 1, 8>}, {transform_indices = @transform_5, window_bounds = array<i64: 8, 8>}]} {
    %c0 = arith.constant 0 : index
    %c0_0 = arith.constant 0 : index
    %0 = vector.load %arg1[%c0, %c0_0] : memref<8x64xbf16, #tpu.memory_space<vmem>>, vector<8x64xbf16>
    %c0_1 = arith.constant 0 : index
    %c0_2 = arith.constant 0 : index
    %1 = vector.load %arg2[%c0_1, %c0_2] : memref<64x32xbf16, #tpu.memory_space<vmem>>, vector<64x32xbf16>
    %cst = arith.constant dense<0.000000e+00> : vector<8x32xf32>
    %2 = tpu.matmul %0, %1, %cst {dimension_numbers = #tpu.dot_dimension_numbers<[1], [0], [0], [1], [0, 0, 1, 1], [], []>} : vector<8x64xbf16>, vector<64x32xbf16>, vector<8x32xf32> -> vector<8x32xf32>
    %c0_3 = arith.constant 0 : index
    %c0_4 = arith.constant 0 : index
    %3 = vector.load %arg3[%c0_3, %c0_4] : memref<1x32xf32, #tpu.memory_space<vmem>>, vector<1x32xf32>
    %4 = vector.broadcast %3 : vector<1x32xf32> to vector<8x32xf32>
    %5 = arith.addf %2, %4 : vector<8x32xf32>
    %cst_5 = arith.constant 0.000000e+00 : f32
    %6 = vector.broadcast %cst_5 : f32 to vector<8x32xf32>
    %7 = arith.maximumf %5, %6 : vector<8x32xf32>
    %8 = arith.truncf %7 : vector<8x32xf32> to vector<8x32xbf16>
    %c0_6 = arith.constant 0 : index
    %c0_7 = arith.constant 0 : index
    %9 = vector.load %arg4[%c0_6, %c0_7] : memref<32x8xbf16, #tpu.memory_space<vmem>>, vector<32x8xbf16>
    %cst_8 = arith.constant dense<0.000000e+00> : vector<8x8xf32>
    %10 = tpu.matmul %8, %9, %cst_8 {dimension_numbers = #tpu.dot_dimension_numbers<[1], [0], [0], [1], [0, 0, 1, 1], [], []>} : vector<8x32xbf16>, vector<32x8xbf16>, vector<8x8xf32> -> vector<8x8xf32>
    %c0_9 = arith.constant 0 : index
    %c0_10 = arith.constant 0 : index
    %11 = vector.load %arg5[%c0_9, %c0_10] : memref<1x8xf32, #tpu.memory_space<vmem>>, vector<1x8xf32>
    %12 = vector.broadcast %11 : vector<1x8xf32> to vector<8x8xf32>
    %13 = arith.addf %10, %12 : vector<8x8xf32>
    %c0_11 = arith.constant 0 : index
    %c0_12 = arith.constant 0 : index
    %14 = vector.load %arg6[%c0_11, %c0_12] : memref<8x8xf32, #tpu.memory_space<vmem>>, vector<8x8xf32>
    tpu.vector_store %arg6[%c0_11, %c0_12], %13 {strides = array<i32>} : memref<8x8xf32, #tpu.memory_space<vmem>>, vector<8x8xf32>,
    return
  }
  func.func @transform_0(%arg0: i32) -> (i32, i32) {
    %c0_i32 = arith.constant 0 : i32
    %c0_i32_0 = arith.constant 0 : i32
    return %arg0, %c0_i32 : i32, i32
  }
  func.func @transform_1(%arg0: i32) -> (i32, i32) {
    %c0_i32 = arith.constant 0 : i32
    %c0_i32_0 = arith.constant 0 : i32
    %c0_i32_1 = arith.constant 0 : i32
    return %c0_i32, %c0_i32_0 : i32, i32
  }
  func.func @transform_2(%arg0: i32) -> (i32, i32) {
    %c0_i32 = arith.constant 0 : i32
    %c0_i32_0 = arith.constant 0 : i32
    %c0_i32_1 = arith.constant 0 : i32
    return %c0_i32, %c0_i32_0 : i32, i32
  }
  func.func @transform_3(%arg0: i32) -> (i32, i32) {
    %c0_i32 = arith.constant 0 : i32
    %c0_i32_0 = arith.constant 0 : i32
    %c0_i32_1 = arith.constant 0 : i32
    return %c0_i32, %c0_i32_0 : i32, i32
  }
  func.func @transform_4(%arg0: i32) -> (i32, i32) {
    %c0_i32 = arith.constant 0 : i32
    %c0_i32_0 = arith.constant 0 : i32
    %c0_i32_1 = arith.constant 0 : i32
    return %c0_i32, %c0_i32_0 : i32, i32
  }
  func.func @transform_5(%arg0: i32) -> (i32, i32) {
    %c0_i32 = arith.constant 0 : i32
    %c0_i32_0 = arith.constant 0 : i32
    return %arg0, %c0_i32 : i32, i32
  }
}

</mosaic_0001>

<llo_original>
// kernel: forward.36
$region0: #{forward.36}
  #allocation0 [shape = 'u32[]', space=smem, size = 0x4, offset = 0x4, fixed_abs, tag = 'smem constant byte address 0x4 - core index']
  #allocation1 [shape = 'u32[72,128]{1,0:T(1,128)}', space=vmem, size = 0x9000, scoped, tag = 'internal scratch']
  %s0 = inlined_call_operand.vmem [shape: bf16[768,12], index: 0, kind: input, shape index: {}]
  %s1 = inlined_call_operand.vmem [shape: bf16[12,32], index: 1, kind: input, shape index: {}]
  %s2 = inlined_call_operand.vmem [shape: f32[1,32], index: 2, kind: input, shape index: {}]
  %s3 = inlined_call_operand.vmem [shape: f32[768,32], index: 3, kind: output, shape index: {}]
  %s4 = sld [smem:[#allocation0]]
  $region45: #{forward.36} parent=0
    _
  %s6 = ssub.s32 1, %s4
  %s7 = scalar_select 0, %s6, %s4
  loop: start=0, step=1, limit=5
  $region2: #{forward.36} parent=0 // loop_pre_header
    _
  $region3: #{forward.36} parent=0 // loop_header
    %s9 = sphi 0, %s13
    %p10 = scmp.ge.s32.totalorder %s9, 5
    %s19 = sphi 0, %s21
    %s22 = sphi 0, %s19
    %s23 = sphi 0, %s22
    %s39 = sphi 0, %s23
    %s43 = sphi 0, %s43
    %s45 = sphi 0, %s43
    %s46 = sphi 0, %s45
    %s60 = sphi 0, %s46
    %s64 = sphi 0, %s64
    %s66 = sphi 0, %s64
    %s67 = sphi 0, %s66
    %s81 = sphi 0, %s67
    %s87 = sphi 0, %s89
    %s90 = sphi 0, %s87
    %s91 = sphi 0, %s90
    %s107 = sphi 0, %s91
  $region4: #{forward.36} parent=0 // loop_header_branch
    %12 = sbr.rel (%p10) target = $region8
  $region5: #{forward.36} parent=0 // loop_body
    %s14 = ssub.s32 %s9, 1
    %s15 = ssub.s32 %s9, 2
    %s16 = sadd.s32 %s9, 1
    %s17 = ssub.s32 %s9, %s16
    %p18 = scmp.eq.s32.totalorder %s17, 0
    %s20 = sadd.s32 %s19, 1
    %s21 = scalar_select %p18, %s19, %s20
    %p24 = pneg %p18
    %p25 = scmp.eq.s32.totalorder %s9, 2
    %p26 = por %p24, %p25
    %p27 = scmp.ne.s32.totalorder %s19, %s22
    %p28 = scmp.eq.s32.totalorder %s9, 0
    %p29 = por %p27, %p28
    %p30 = scmp.ne.s32.totalorder %s19, %s22
    %p31 = scmp.eq.s32.totalorder %s14, 2
    %p32 = por %p30, %p31
    %p33 = scmp.ne.s32.totalorder %s22, %s23
    %p34 = scmp.eq.s32.totalorder %s14, 0
    %p35 = por %p33, %p34
    %p36 = scmp.ne.s32.totalorder %s22, %s23
    %p37 = scmp.eq.s32.totalorder %s15, 2
    %p38 = por %p36, %p37
    %p40 = scmp.ne.s32.totalorder %s23, %s39
    %p41 = scmp.eq.s32.totalorder %s15, 0
    %p42 = por %p40, %p41
    %s44 = sadd.s32 %s43, 1
    %p47 = scmp.eq.s32.totalorder %s9, 2
    %p48 = scmp.ne.s32.totalorder %s43, %s45
    %p49 = scmp.eq.s32.totalorder %s9, 0
    %p50 = por %p48, %p49
    %p51 = scmp.ne.s32.totalorder %s43, %s45
    %p52 = scmp.eq.s32.totalorder %s14, 2
    %p53 = por %p51, %p52
    %p54 = scmp.ne.s32.totalorder %s45, %s46
    %p55 = scmp.eq.s32.totalorder %s14, 0
    %p56 = por %p54, %p55
    %p57 = scmp.ne.s32.totalorder %s45, %s46
    %p58 = scmp.eq.s32.totalorder %s15, 2
    %p59 = por %p57, %p58
    %p61 = scmp.ne.s32.totalorder %s46, %s60
    %p62 = scmp.eq.s32.totalorder %s15, 0
    %p63 = por %p61, %p62
    %s65 = sadd.s32 %s64, 1
    %p68 = scmp.eq.s32.totalorder %s9, 2
    %p69 = scmp.ne.s32.totalorder %s64, %s66
    %p70 = scmp.eq.s32.totalorder %s9, 0
    %p71 = por %p69, %p70
    %p72 = scmp.ne.s32.totalorder %s64, %s66
    %p73 = scmp.eq.s32.totalorder %s14, 2
    %p74 = por %p72, %p73
    %p75 = scmp.ne.s32.totalorder %s66, %s67
    %p76 = scmp.eq.s32.totalorder %s14, 0
    %p77 = por %p75, %p76
    %p78 = scmp.ne.s32.totalorder %s66, %s67
    %p79 = scmp.eq.s32.totalorder %s15, 2
    %p80 = por %p78, %p79
    %p82 = scmp.ne.s32.totalorder %s67, %s81
    %p83 = scmp.eq.s32.totalorder %s15, 0
    %p84 = por %p82, %p83
    %s85 = ssub.s32 %s9, %s16
    %p86 = scmp.eq.s32.totalorder %s85, 0
    %s88 = sadd.s32 %s87, 1
    %s89 = scalar_select %p86, %s87, %s88
    %p92 = pneg %p86
    %p93 = scmp.eq.s32.totalorder %s9, 2
    %p94 = por %p92, %p93
    %p95 = scmp.ne.s32.totalorder %s87, %s90
    %p96 = scmp.eq.s32.totalorder %s9, 0
    %p97 = por %p95, %p96
    %p98 = scmp.ne.s32.totalorder %s87, %s90
    %p99 = scmp.eq.s32.totalorder %s14, 2
    %p100 = por %p98, %p99
    %p101 = scmp.ne.s32.totalorder %s90, %s91
    %p102 = scmp.eq.s32.totalorder %s14, 0
    %p103 = por %p101, %p102
    %p104 = scmp.ne.s32.totalorder %s90, %s91
    %p105 = scmp.eq.s32.totalorder %s15, 2
    %p106 = por %p104, %p105
    %p108 = scmp.ne.s32.totalorder %s91, %s107
    %p109 = scmp.eq.s32.totalorder %s15, 0
    %p110 = por %p108, %p109
    %p111 = scmp.le.s32.totalorder 1, %s9
    %p112 = scmp.lt.s32.totalorder %s9, 4
    %p113 = pnand %p111, %p112
    %p114 = pneg %p113
    // Predicated region
    $region9: #{forward.36} parent=5 // pred_check
      _
    $region10: #{forward.36} parent=5 // pred_check_branch
      %116 = sbr.rel (%p113) target = $region12
    $region11: #{forward.36} parent=5 // pred_region
      %s117 = ssub.s32 %s9, 1
      // Predicated region
      $region13: #{forward.36} parent=11 // pred_check
        %p118 = pneg %p56
      $region14: #{forward.36} parent=11 // pred_check_branch
        %120 = sbr.rel (%p118) target = $region16
      $region15: #{forward.36} parent=11 // pred_region
        _
      $region16: #{forward.36} parent=11 // pred_fallthru
        _
      // Predicated region
      $region17: #{forward.36} parent=11 // pred_check
        %p121 = pneg %p77
      $region18: #{forward.36} parent=11 // pred_check_branch
        %123 = sbr.rel (%p121) target = $region20
      $region19: #{forward.36} parent=11 // pred_region
        _
      $region20: #{forward.36} parent=11 // pred_fallthru
        _
    $region12: #{forward.36} parent=5 // pred_fallthru
      _
    %p124 = scmp.lt.s32.totalorder %s9, 3
    // Predicated region
    $region21: #{forward.36} parent=5 // pred_check
      %p125 = pneg %p124
    $region22: #{forward.36} parent=5 // pred_check_branch
      %127 = sbr.rel (%p125) target = $region24
    $region23: #{forward.36} parent=5 // pred_region
      // Predicated region
      $region25: #{forward.36} parent=23 // pred_check
        %p128 = pneg %p29
      $region26: #{forward.36} parent=23 // pred_check_branch
        %130 = sbr.rel (%p128) target = $region28
      $region27: #{forward.36} parent=23 // pred_region
        %s131 = smul.u32 32, %s9
        %p132 = scmp.lt.s32.totalorder %s131, 95
        %s133 = scalar_select %p132, %s131, 95
        %s134 = smul.addr %s133, 4
        %s135 = scalar_lea.vmem %s0, %s134
        %s136 = smul.u32 32, %s9
      $region28: #{forward.36} parent=23 // pred_fallthru
        _
    $region24: #{forward.36} parent=5 // pred_fallthru
      _
    %p137 = scmp.le.s32.totalorder 1, %s9
    %p138 = scmp.lt.s32.totalorder %s9, 4
    %p139 = pnand %p137, %p138
    %p140 = pneg %p139
    // Predicated region
    $region29: #{forward.36} parent=5 // pred_check
      _
    $region30: #{forward.36} parent=5 // pred_check_branch
      %142 = sbr.rel (%p139) target = $region32
    $region31: #{forward.36} parent=5 // pred_region
      %s143 = ssub.s32 %s9, 1
      %s144 = smul.u32 32, %s14
      %p145 = scmp.lt.s32.totalorder %s144, 95
      %s146 = scalar_select %p145, %s144, 95
      %s147 = smul.addr %s146, 4
      %s148 = scalar_lea.vmem %s0, %s147
      %p149 = pneg %p35
      %p150 = pneg %p32
      %p151 = pneg %p56
      %p152 = pneg %p53
      %p153 = pneg %p77
      %p154 = pneg %p74
      %p155 = pneg %p103
      %p156 = pneg %p100
      %s157 = smul.u32 32, %s14
      %p158 = scmp.lt.s32.totalorder %s157, 95
      %s159 = scalar_select %p158, %s157, 95
      %s160 = smul.addr %s159, 8
      %s161 = scalar_lea.vmem %s3, %s160
      %s162 = smul.u32 32, %s14
      %p163 = scmp.lt.s32.totalorder %s162, 95
      %s164 = scalar_select %p163, %s162, 95
      %s165 = smul.addr %s164, 4
      %s166 = scalar_lea.vmem %s0, %s165
      %s167 = smul.u32 32, %s14
      %s168 = smul.u32 32, %s14
      %p169 = scmp.lt.s32.totalorder %s168, 95
      %s170 = scalar_select %p169, %s168, 95
      %s171 = smul.addr %s170, 8
      %s172 = scalar_lea.vmem %s3, %s171
      %s173 = smul.u32 32, %s14
      %v175 = vld [vmem:[%s166] sm:$0xf]
      %v176 = vld [vmem:[%s166 + $0x4] sm:$0xf]
      %v177 = vld [vmem:[%s166 + $0x8] sm:$0xf]
      %v178 = vld [vmem:[%s166 + $0xc] sm:$0xf]
      %v179 = vld [vmem:[%s166 + $0x10] sm:$0xf]
      %v180 = vld [vmem:[%s166 + $0x14] sm:$0xf]
      %v181 = vld [vmem:[%s166 + $0x18] sm:$0xf]
      %v182 = vld [vmem:[%s166 + $0x1c] sm:$0xf]
      %v183 = vld [vmem:[%s166 + $0x20] sm:$0xf]
      %v184 = vld [vmem:[%s166 + $0x24] sm:$0xf]
      %v185 = vld [vmem:[%s166 + $0x28] sm:$0xf]
      %v186 = vld [vmem:[%s166 + $0x2c] sm:$0xf]
      %v187 = vld [vmem:[%s166 + $0x30] sm:$0xf]
      %v188 = vld [vmem:[%s166 + $0x34] sm:$0xf]
      %v189 = vld [vmem:[%s166 + $0x38] sm:$0xf]
      %v190 = vld [vmem:[%s166 + $0x3c] sm:$0xf]
      %v191 = vld [vmem:[%s166 + $0x40] sm:$0xf]
      %v192 = vld [vmem:[%s166 + $0x44] sm:$0xf]
      %v193 = vld [vmem:[%s166 + $0x48] sm:$0xf]
      %v194 = vld [vmem:[%s166 + $0x4c] sm:$0xf]
      %v195 = vld [vmem:[%s166 + $0x50] sm:$0xf]
      %v196 = vld [vmem:[%s166 + $0x54] sm:$0xf]
      %v197 = vld [vmem:[%s166 + $0x58] sm:$0xf]
      %v198 = vld [vmem:[%s166 + $0x5c] sm:$0xf]
      %v199 = vld [vmem:[%s166 + $0x60] sm:$0xf]
      %v200 = vld [vmem:[%s166 + $0x64] sm:$0xf]
      %v201 = vld [vmem:[%s166 + $0x68] sm:$0xf]
      %v202 = vld [vmem:[%s166 + $0x6c] sm:$0xf]
      %v203 = vld [vmem:[%s166 + $0x70] sm:$0xf]
      %v204 = vld [vmem:[%s166 + $0x74] sm:$0xf]
      %v205 = vld [vmem:[%s166 + $0x78] sm:$0xf]
      %v206 = vld [vmem:[%s166 + $0x7c] sm:$0xf]
      %v207 = vld [vmem:[%s1] sm:$0xf]
      %v208 = vld [vmem:[%s1 + $0x4] sm:$0x3]
      %v209 = vld [vmem:[%s2] sm:$0x1]
      %v211 = vperm.slane %v209, 0
      %v245 = vunpack.c.l.b16 %v175
      %v246 = vunpack.c.l.b16 %v176
      %v247 = vunpack.c.l.b16 %v177
      %v248 = vunpack.c.l.b16 %v178
      %v249 = vunpack.c.l.b16 %v179
      %v250 = vunpack.c.l.b16 %v180
      %v251 = vunpack.c.l.b16 %v181
      %v252 = vunpack.c.l.b16 %v182
      %v253 = vunpack.c.l.b16 %v183
      %v254 = vunpack.c.l.b16 %v184
      %v255 = vunpack.c.l.b16 %v185
      %v256 = vunpack.c.l.b16 %v186
      %v257 = vunpack.c.l.b16 %v187
      %v258 = vunpack.c.l.b16 %v188
      %v259 = vunpack.c.l.b16 %v189
      %v260 = vunpack.c.l.b16 %v190
      %v261 = vunpack.c.l.b16 %v191
      %v262 = vunpack.c.l.b16 %v192
      %v263 = vunpack.c.l.b16 %v193
      %v264 = vunpack.c.l.b16 %v194
      %v265 = vunpack.c.l.b16 %v195
      %v266 = vunpack.c.l.b16 %v196
      %v267 = vunpack.c.l.b16 %v197
      %v268 = vunpack.c.l.b16 %v198
      %v269 = vunpack.c.l.b16 %v199
      %v270 = vunpack.c.l.b16 %v200
      %v271 = vunpack.c.l.b16 %v201
      %v272 = vunpack.c.l.b16 %v202
      %v273 = vunpack.c.l.b16 %v203
      %v274 = vunpack.c.l.b16 %v204
      %v275 = vunpack.c.l.b16 %v205
      %v276 = vunpack.c.l.b16 %v206
      %v277 = vpack.c.b16 %v246, %v245
      %v278 = vpack.c.b16 %v248, %v247
      %v279 = vpack.c.b16 %v250, %v249
      %v280 = vpack.c.b16 %v252, %v251
      %v281 = vpack.c.b16 %v254, %v253
      %v282 = vpack.c.b16 %v256, %v255
      %v283 = vpack.c.b16 %v258, %v257
      %v284 = vpack.c.b16 %v260, %v259
      %v285 = vpack.c.b16 %v262, %v261
      %v286 = vpack.c.b16 %v264, %v263
      %v287 = vpack.c.b16 %v266, %v265
      %v288 = vpack.c.b16 %v268, %v267
      %v289 = vpack.c.b16 %v270, %v269
      %v290 = vpack.c.b16 %v272, %v271
      %v291 = vpack.c.b16 %v274, %v273
      %v292 = vpack.c.b16 %v276, %v275
      %v295 = vunpack.c.l.b16 %v207
      %v296 = vunpack.c.l.b16 %v208
      %v297 = vpack.c.b16 %v296, %v295
      %vm298 = vcmask 97280
      %v300 = vsel %vm298, %v277, 0
      %v303 = vsel %vm298, %v278, 0
      %v306 = vsel %vm298, %v279, 0
      %v309 = vsel %vm298, %v280, 0
      %v312 = vsel %vm298, %v281, 0
      %v315 = vsel %vm298, %v282, 0
      %v318 = vsel %vm298, %v283, 0
      %v321 = vsel %vm298, %v284, 0
      %v324 = vsel %vm298, %v285, 0
      %v327 = vsel %vm298, %v286, 0
      %v330 = vsel %vm298, %v287, 0
      %v333 = vsel %vm298, %v288, 0
      %v336 = vsel %vm298, %v289, 0
      %v339 = vsel %vm298, %v290, 0
      %v342 = vsel %vm298, %v291, 0
      %v345 = vsel %vm298, %v292, 0
      %vm347 = vcmask 1045504
      %v349 = vsel %vm347, %v297, 0
      %351 = vmatpush.bf16.msra.mxu0 0
      %352 = vmatpush.bf16.msra.mxu0 0
      %353 = vmatpush.bf16.msra.mxu0 0
      %354 = vmatpush.bf16.msra.mxu0 0
      %355 = vmatpush.bf16.msra.mxu0 0
      %356 = vmatpush.bf16.msra.mxu0 0
      %357 = vmatpush.bf16.msra.mxu0 0
      %358 = vmatpush.bf16.msra.mxu0 %v349
      %359 = vmatmul.bf16.gmra.mxu0 %v300
      %v360 = vpop.f32.mrf.mxu0
      %v361 = vadd.f32 %v211, %v360
      %v362 = vpop.f32.mrf.mxu0
      %v363 = vadd.f32 %v211, %v362
      %364 = vmatmul.bf16.gmra.mxu0 %v303
      %v365 = vpop.f32.mrf.mxu0
      %v366 = vadd.f32 %v211, %v365
      %v367 = vpop.f32.mrf.mxu0
      %v368 = vadd.f32 %v211, %v367
      %369 = vmatmul.bf16.gmra.mxu0 %v306
      %v370 = vpop.f32.mrf.mxu0
      %v371 = vadd.f32 %v211, %v370
      %v372 = vpop.f32.mrf.mxu0
      %v373 = vadd.f32 %v211, %v372
      %374 = vmatmul.bf16.gmra.mxu0 %v309
      %v375 = vpop.f32.mrf.mxu0
      %v376 = vadd.f32 %v211, %v375
      %v377 = vpop.f32.mrf.mxu0
      %v378 = vadd.f32 %v211, %v377
      %379 = vmatmul.bf16.gmra.mxu0 %v312
      %v380 = vpop.f32.mrf.mxu0
      %v381 = vadd.f32 %v211, %v380
      %v382 = vpop.f32.mrf.mxu0
      %v383 = vadd.f32 %v211, %v382
      %384 = vmatmul.bf16.gmra.mxu0 %v315
      %v385 = vpop.f32.mrf.mxu0
      %v386 = vadd.f32 %v211, %v385
      %v387 = vpop.f32.mrf.mxu0
      %v388 = vadd.f32 %v211, %v387
      %389 = vmatmul.bf16.gmra.mxu0 %v318
      %v390 = vpop.f32.mrf.mxu0
      %v391 = vadd.f32 %v211, %v390
      %v392 = vpop.f32.mrf.mxu0
      %v393 = vadd.f32 %v211, %v392
      %394 = vmatmul.bf16.gmra.mxu0 %v321
      %v395 = vpop.f32.mrf.mxu0
      %v396 = vadd.f32 %v211, %v395
      %v397 = vpop.f32.mrf.mxu0
      %v398 = vadd.f32 %v211, %v397
      %399 = vmatmul.bf16.gmra.mxu0 %v324
      %v400 = vpop.f32.mrf.mxu0
      %v401 = vadd.f32 %v211, %v400
      %v402 = vpop.f32.mrf.mxu0
      %v403 = vadd.f32 %v211, %v402
      %404 = vmatmul.bf16.gmra.mxu0 %v327
      %v405 = vpop.f32.mrf.mxu0
      %v406 = vadd.f32 %v211, %v405
      %v407 = vpop.f32.mrf.mxu0
      %v408 = vadd.f32 %v211, %v407
      %409 = vmatmul.bf16.gmra.mxu0 %v330
      %v410 = vpop.f32.mrf.mxu0
      %v411 = vadd.f32 %v211, %v410
      %v412 = vpop.f32.mrf.mxu0
      %v413 = vadd.f32 %v211, %v412
      %414 = vmatmul.bf16.gmra.mxu0 %v333
      %v415 = vpop.f32.mrf.mxu0
      %v416 = vadd.f32 %v211, %v415
      %v417 = vpop.f32.mrf.mxu0
      %v418 = vadd.f32 %v211, %v417
      %419 = vmatmul.bf16.gmra.mxu0 %v336
      %v420 = vpop.f32.mrf.mxu0
      %v421 = vadd.f32 %v211, %v420
      %v422 = vpop.f32.mrf.mxu0
      %v423 = vadd.f32 %v211, %v422
      %424 = vmatmul.bf16.gmra.mxu0 %v339
      %v425 = vpop.f32.mrf.mxu0
      %v426 = vadd.f32 %v211, %v425
      %v427 = vpop.f32.mrf.mxu0
      %v428 = vadd.f32 %v211, %v427
      %429 = vmatmul.bf16.gmra.mxu0 %v342
      %v430 = vpop.f32.mrf.mxu0
      %v431 = vadd.f32 %v211, %v430
      %v432 = vpop.f32.mrf.mxu0
      %v433 = vadd.f32 %v211, %v432
      %434 = vmatmul.bf16.gmra.mxu0 %v345
      %v435 = vpop.f32.mrf.mxu0
      %v436 = vadd.f32 %v211, %v435
      %v437 = vpop.f32.mrf.mxu0
      %v438 = vadd.f32 %v211, %v437
      %439 = vdwg.mxu0
      %vm440 = vcmask 261120
      %441 = vst.msk [vmem:[%s172] sm:$0xff] %vm440, %v361
      %442 = vst.msk [vmem:[%s172 + $0x8] sm:$0xff] %vm440, %v363
      %443 = vst.msk [vmem:[%s172 + $0x10] sm:$0xff] %vm440, %v366
      %444 = vst.msk [vmem:[%s172 + $0x18] sm:$0xff] %vm440, %v368
      %445 = vst.msk [vmem:[%s172 + $0x20] sm:$0xff] %vm440, %v371
      %446 = vst.msk [vmem:[%s172 + $0x28] sm:$0xff] %vm440, %v373
      %447 = vst.msk [vmem:[%s172 + $0x30] sm:$0xff] %vm440, %v376
      %448 = vst.msk [vmem:[%s172 + $0x38] sm:$0xff] %vm440, %v378
      %449 = vst.msk [vmem:[%s172 + $0x40] sm:$0xff] %vm440, %v381
      %450 = vst.msk [vmem:[%s172 + $0x48] sm:$0xff] %vm440, %v383
      %451 = vst.msk [vmem:[%s172 + $0x50] sm:$0xff] %vm440, %v386
      %452 = vst.msk [vmem:[%s172 + $0x58] sm:$0xff] %vm440, %v388
      %453 = vst.msk [vmem:[%s172 + $0x60] sm:$0xff] %vm440, %v391
      %454 = vst.msk [vmem:[%s172 + $0x68] sm:$0xff] %vm440, %v393
      %455 = vst.msk [vmem:[%s172 + $0x70] sm:$0xff] %vm440, %v396
      %456 = vst.msk [vmem:[%s172 + $0x78] sm:$0xff] %vm440, %v398
      %457 = vst.msk [vmem:[%s172 + $0x80] sm:$0xff] %vm440, %v401
      %458 = vst.msk [vmem:[%s172 + $0x88] sm:$0xff] %vm440, %v403
      %459 = vst.msk [vmem:[%s172 + $0x90] sm:$0xff] %vm440, %v406
      %460 = vst.msk [vmem:[%s172 + $0x98] sm:$0xff] %vm440, %v408
      %461 = vst.msk [vmem:[%s172 + $0xa0] sm:$0xff] %vm440, %v411
      %462 = vst.msk [vmem:[%s172 + $0xa8] sm:$0xff] %vm440, %v413
      %463 = vst.msk [vmem:[%s172 + $0xb0] sm:$0xff] %vm440, %v416
      %464 = vst.msk [vmem:[%s172 + $0xb8] sm:$0xff] %vm440, %v418
      %465 = vst.msk [vmem:[%s172 + $0xc0] sm:$0xff] %vm440, %v421
      %466 = vst.msk [vmem:[%s172 + $0xc8] sm:$0xff] %vm440, %v423
      %467 = vst.msk [vmem:[%s172 + $0xd0] sm:$0xff] %vm440, %v426
      %468 = vst.msk [vmem:[%s172 + $0xd8] sm:$0xff] %vm440, %v428
      %469 = vst.msk [vmem:[%s172 + $0xe0] sm:$0xff] %vm440, %v431
      %470 = vst.msk [vmem:[%s172 + $0xe8] sm:$0xff] %vm440, %v433
      %471 = vst.msk [vmem:[%s172 + $0xf0] sm:$0xff] %vm440, %v436
      %472 = vst.msk [vmem:[%s172 + $0xf8] sm:$0xff] %vm440, %v438
      %s473 = smul.u32 32, %s14
      %p474 = scmp.lt.s32.totalorder %s473, 95
      %s475 = scalar_select %p474, %s473, 95
      %s476 = smul.addr %s475, 8
      %s477 = scalar_lea.vmem %s3, %s476
      // Predicated region
      $region33: #{forward.36} parent=31 // pred_check
        %p478 = pneg %p100
      $region34: #{forward.36} parent=31 // pred_check_branch
        %480 = sbr.rel (%p478) target = $region36
      $region35: #{forward.36} parent=31 // pred_region
        %s481 = smul.u32 32, %s14
      $region36: #{forward.36} parent=31 // pred_fallthru
        _
    $region32: #{forward.36} parent=5 // pred_fallthru
      _
    %p482 = scmp.le.s32.totalorder 2, %s9
    // Predicated region
    $region37: #{forward.36} parent=5 // pred_check
      %p483 = pneg %p482
    $region38: #{forward.36} parent=5 // pred_check_branch
      %485 = sbr.rel (%p483) target = $region40
    $region39: #{forward.36} parent=5 // pred_region
      %s486 = ssub.s32 %s9, 2
      // Predicated region
      $region41: #{forward.36} parent=39 // pred_check
        %p487 = pneg %p106
      $region42: #{forward.36} parent=39 // pred_check_branch
        %489 = sbr.rel (%p487) target = $region44
      $region43: #{forward.36} parent=39 // pred_region
        %s490 = smul.u32 32, %s15
        %p491 = scmp.lt.s32.totalorder %s490, 95
        %s492 = scalar_select %p491, %s490, 95
        %s493 = smul.addr %s492, 8
        %s494 = scalar_lea.vmem %s3, %s493
      $region44: #{forward.36} parent=39 // pred_fallthru
        _
    $region40: #{forward.36} parent=5 // pred_fallthru
      _
  $region6: #{forward.36} parent=0 // loop_footer
    %s13 = sadd.s32 1, %s9
  $region7: #{forward.36} parent=0 // loop_footer_branch
    %8 = sbr.rel target = $region3
  $region8: #{forward.36} parent=0 // loop_exit
    _

// kernel: forward.37
$region0: #{forward.37}
  #allocation0 [shape = 'u32[]', space=smem, size = 0x4, offset = 0x4, fixed_abs, tag = 'smem constant byte address 0x4 - core index']
  #allocation1 [shape = 'u32[72,128]{1,0:T(1,128)}', space=vmem, size = 0x9000, scoped, tag = 'internal scratch']
  %s0 = inlined_call_operand.vmem [shape: bf16[512,96], index: 0, kind: input, shape index: {}]
  %s1 = inlined_call_operand.vmem [shape: bf16[96,64], index: 1, kind: input, shape index: {}]
  %s2 = inlined_call_operand.vmem [shape: f32[1,64], index: 2, kind: input, shape index: {}]
  %s3 = inlined_call_operand.vmem [shape: f32[512,64], index: 3, kind: output, shape index: {}]
  %s4 = sld [smem:[#allocation0]]
  $region45: #{forward.37} parent=0
    _
  %s6 = ssub.s32 1, %s4
  %s7 = scalar_select 0, %s6, %s4
  loop: start=0, step=1, limit=4
  $region2: #{forward.37} parent=0 // loop_pre_header
    _
  $region3: #{forward.37} parent=0 // loop_header
    %s9 = sphi 0, %s13
    %p10 = scmp.ge.s32.totalorder %s9, 4
    %s19 = sphi 0, %s21
    %s22 = sphi 0, %s19
    %s23 = sphi 0, %s22
    %s39 = sphi 0, %s23
    %s43 = sphi 0, %s43
    %s45 = sphi 0, %s43
    %s46 = sphi 0, %s45
    %s60 = sphi 0, %s46
    %s64 = sphi 0, %s64
    %s66 = sphi 0, %s64
    %s67 = sphi 0, %s66
    %s81 = sphi 0, %s67
    %s87 = sphi 0, %s89
    %s90 = sphi 0, %s87
    %s91 = sphi 0, %s90
    %s107 = sphi 0, %s91
  $region4: #{forward.37} parent=0 // loop_header_branch
    %12 = sbr.rel (%p10) target = $region8
  $region5: #{forward.37} parent=0 // loop_body
    %s14 = ssub.s32 %s9, 1
    %s15 = ssub.s32 %s9, 2
    %s16 = sadd.s32 %s9, 1
    %s17 = ssub.s32 %s9, %s16
    %p18 = scmp.eq.s32.totalorder %s17, 0
    %s20 = sadd.s32 %s19, 1
    %s21 = scalar_select %p18, %s19, %s20
    %p24 = pneg %p18
    %p25 = scmp.eq.s32.totalorder %s9, 1
    %p26 = por %p24, %p25
    %p27 = scmp.ne.s32.totalorder %s19, %s22
    %p28 = scmp.eq.s32.totalorder %s9, 0
    %p29 = por %p27, %p28
    %p30 = scmp.ne.s32.totalorder %s19, %s22
    %p31 = scmp.eq.s32.totalorder %s14, 1
    %p32 = por %p30, %p31
    %p33 = scmp.ne.s32.totalorder %s22, %s23
    %p34 = scmp.eq.s32.totalorder %s14, 0
    %p35 = por %p33, %p34
    %p36 = scmp.ne.s32.totalorder %s22, %s23
    %p37 = scmp.eq.s32.totalorder %s15, 1
    %p38 = por %p36, %p37
    %p40 = scmp.ne.s32.totalorder %s23, %s39
    %p41 = scmp.eq.s32.totalorder %s15, 0
    %p42 = por %p40, %p41
    %s44 = sadd.s32 %s43, 1
    %p47 = scmp.eq.s32.totalorder %s9, 1
    %p48 = scmp.ne.s32.totalorder %s43, %s45
    %p49 = scmp.eq.s32.totalorder %s9, 0
    %p50 = por %p48, %p49
    %p51 = scmp.ne.s32.totalorder %s43, %s45
    %p52 = scmp.eq.s32.totalorder %s14, 1
    %p53 = por %p51, %p52
    %p54 = scmp.ne.s32.totalorder %s45, %s46
    %p55 = scmp.eq.s32.totalorder %s14, 0
    %p56 = por %p54, %p55
    %p57 = scmp.ne.s32.totalorder %s45, %s46
    %p58 = scmp.eq.s32.totalorder %s15, 1
    %p59 = por %p57, %p58
    %p61 = scmp.ne.s32.totalorder %s46, %s60
    %p62 = scmp.eq.s32.totalorder %s15, 0
    %p63 = por %p61, %p62
    %s65 = sadd.s32 %s64, 1
    %p68 = scmp.eq.s32.totalorder %s9, 1
    %p69 = scmp.ne.s32.totalorder %s64, %s66
    %p70 = scmp.eq.s32.totalorder %s9, 0
    %p71 = por %p69, %p70
    %p72 = scmp.ne.s32.totalorder %s64, %s66
    %p73 = scmp.eq.s32.totalorder %s14, 1
    %p74 = por %p72, %p73
    %p75 = scmp.ne.s32.totalorder %s66, %s67
    %p76 = scmp.eq.s32.totalorder %s14, 0
    %p77 = por %p75, %p76
    %p78 = scmp.ne.s32.totalorder %s66, %s67
    %p79 = scmp.eq.s32.totalorder %s15, 1
    %p80 = por %p78, %p79
    %p82 = scmp.ne.s32.totalorder %s67, %s81
    %p83 = scmp.eq.s32.totalorder %s15, 0
    %p84 = por %p82, %p83
    %s85 = ssub.s32 %s9, %s16
    %p86 = scmp.eq.s32.totalorder %s85, 0
    %s88 = sadd.s32 %s87, 1
    %s89 = scalar_select %p86, %s87, %s88
    %p92 = pneg %p86
    %p93 = scmp.eq.s32.totalorder %s9, 1
    %p94 = por %p92, %p93
    %p95 = scmp.ne.s32.totalorder %s87, %s90
    %p96 = scmp.eq.s32.totalorder %s9, 0
    %p97 = por %p95, %p96
    %p98 = scmp.ne.s32.totalorder %s87, %s90
    %p99 = scmp.eq.s32.totalorder %s14, 1
    %p100 = por %p98, %p99
    %p101 = scmp.ne.s32.totalorder %s90, %s91
    %p102 = scmp.eq.s32.totalorder %s14, 0
    %p103 = por %p101, %p102
    %p104 = scmp.ne.s32.totalorder %s90, %s91
    %p105 = scmp.eq.s32.totalorder %s15, 1
    %p106 = por %p104, %p105
    %p108 = scmp.ne.s32.totalorder %s91, %s107
    %p109 = scmp.eq.s32.totalorder %s15, 0
    %p110 = por %p108, %p109
    %p111 = scmp.le.s32.totalorder 1, %s9
    %p112 = scmp.lt.s32.totalorder %s9, 3
    %p113 = pnand %p111, %p112
    %p114 = pneg %p113
    // Predicated region
    $region9: #{forward.37} parent=5 // pred_check
      _
    $region10: #{forward.37} parent=5 // pred_check_branch
      %116 = sbr.rel (%p113) target = $region12
    $region11: #{forward.37} parent=5 // pred_region
      %s117 = ssub.s32 %s9, 1
      // Predicated region
      $region13: #{forward.37} parent=11 // pred_check
        %p118 = pneg %p56
      $region14: #{forward.37} parent=11 // pred_check_branch
        %120 = sbr.rel (%p118) target = $region16
      $region15: #{forward.37} parent=11 // pred_region
        _
      $region16: #{forward.37} parent=11 // pred_fallthru
        _
      // Predicated region
      $region17: #{forward.37} parent=11 // pred_check
        %p121 = pneg %p77
      $region18: #{forward.37} parent=11 // pred_check_branch
        %123 = sbr.rel (%p121) target = $region20
      $region19: #{forward.37} parent=11 // pred_region
        _
      $region20: #{forward.37} parent=11 // pred_fallthru
        _
    $region12: #{forward.37} parent=5 // pred_fallthru
      _
    %p124 = scmp.lt.s32.totalorder %s9, 2
    // Predicated region
    $region21: #{forward.37} parent=5 // pred_check
      %p125 = pneg %p124
    $region22: #{forward.37} parent=5 // pred_check_branch
      %127 = sbr.rel (%p125) target = $region24
    $region23: #{forward.37} parent=5 // pred_region
      // Predicated region
      $region25: #{forward.37} parent=23 // pred_check
        %p128 = pneg %p29
      $region26: #{forward.37} parent=23 // pred_check_branch
        %130 = sbr.rel (%p128) target = $region28
      $region27: #{forward.37} parent=23 // pred_region
        %s131 = smul.u32 32, %s9
        %p132 = scmp.lt.s32.totalorder %s131, 63
        %s133 = scalar_select %p132, %s131, 63
        %s134 = smul.addr %s133, 4
        %s135 = scalar_lea.vmem %s0, %s134
        %s136 = smul.u32 32, %s9
      $region28: #{forward.37} parent=23 // pred_fallthru
        _
    $region24: #{forward.37} parent=5 // pred_fallthru
      _
    %p137 = scmp.le.s32.totalorder 1, %s9
    %p138 = scmp.lt.s32.totalorder %s9, 3
    %p139 = pnand %p137, %p138
    %p140 = pneg %p139
    // Predicated region
    $region29: #{forward.37} parent=5 // pred_check
      _
    $region30: #{forward.37} parent=5 // pred_check_branch
      %142 = sbr.rel (%p139) target = $region32
    $region31: #{forward.37} parent=5 // pred_region
      %s143 = ssub.s32 %s9, 1
      %s144 = smul.u32 32, %s14
      %p145 = scmp.lt.s32.totalorder %s144, 63
      %s146 = scalar_select %p145, %s144, 63
      %s147 = smul.addr %s146, 4
      %s148 = scalar_lea.vmem %s0, %s147
      %p149 = pneg %p35
      %p150 = pneg %p32
      %p151 = pneg %p56
      %p152 = pneg %p53
      %p153 = pneg %p77
      %p154 = pneg %p74
      %p155 = pneg %p103
      %p156 = pneg %p100
      %s157 = smul.u32 32, %s14
      %p158 = scmp.lt.s32.totalorder %s157, 63
      %s159 = scalar_select %p158, %s157, 63
      %s160 = smul.addr %s159, 8
      %s161 = scalar_lea.vmem %s3, %s160
      %s162 = smul.u32 32, %s14
      %p163 = scmp.lt.s32.totalorder %s162, 63
      %s164 = scalar_select %p163, %s162, 63
      %s165 = smul.addr %s164, 4
      %s166 = scalar_lea.vmem %s0, %s165
      %s167 = smul.u32 32, %s14
      %s168 = smul.u32 32, %s14
      %p169 = scmp.lt.s32.totalorder %s168, 63
      %s170 = scalar_select %p169, %s168, 63
      %s171 = smul.addr %s170, 8
      %s172 = scalar_lea.vmem %s3, %s171
      %s173 = smul.u32 32, %s14
      %v175 = vld [vmem:[%s166] sm:$0xf]
      %v176 = vld [vmem:[%s166 + $0x4] sm:$0xf]
      %v177 = vld [vmem:[%s166 + $0x8] sm:$0xf]
      %v178 = vld [vmem:[%s166 + $0xc] sm:$0xf]
      %v179 = vld [vmem:[%s166 + $0x10] sm:$0xf]
      %v180 = vld [vmem:[%s166 + $0x14] sm:$0xf]
      %v181 = vld [vmem:[%s166 + $0x18] sm:$0xf]
      %v182 = vld [vmem:[%s166 + $0x1c] sm:$0xf]
      %v183 = vld [vmem:[%s166 + $0x20] sm:$0xf]
      %v184 = vld [vmem:[%s166 + $0x24] sm:$0xf]
      %v185 = vld [vmem:[%s166 + $0x28] sm:$0xf]
      %v186 = vld [vmem:[%s166 + $0x2c] sm:$0xf]
      %v187 = vld [vmem:[%s166 + $0x30] sm:$0xf]
      %v188 = vld [vmem:[%s166 + $0x34] sm:$0xf]
      %v189 = vld [vmem:[%s166 + $0x38] sm:$0xf]
      %v190 = vld [vmem:[%s166 + $0x3c] sm:$0xf]
      %v191 = vld [vmem:[%s166 + $0x40] sm:$0xf]
      %v192 = vld [vmem:[%s166 + $0x44] sm:$0xf]
      %v193 = vld [vmem:[%s166 + $0x48] sm:$0xf]
      %v194 = vld [vmem:[%s166 + $0x4c] sm:$0xf]
      %v195 = vld [vmem:[%s166 + $0x50] sm:$0xf]
      %v196 = vld [vmem:[%s166 + $0x54] sm:$0xf]
      %v197 = vld [vmem:[%s166 + $0x58] sm:$0xf]
      %v198 = vld [vmem:[%s166 + $0x5c] sm:$0xf]
      %v199 = vld [vmem:[%s166 + $0x60] sm:$0xf]
      %v200 = vld [vmem:[%s166 + $0x64] sm:$0xf]
      %v201 = vld [vmem:[%s166 + $0x68] sm:$0xf]
      %v202 = vld [vmem:[%s166 + $0x6c] sm:$0xf]
      %v203 = vld [vmem:[%s166 + $0x70] sm:$0xf]
      %v204 = vld [vmem:[%s166 + $0x74] sm:$0xf]
      %v205 = vld [vmem:[%s166 + $0x78] sm:$0xf]
      %v206 = vld [vmem:[%s166 + $0x7c] sm:$0xf]
      %v207 = vld [vmem:[%s1] sm:$0xf]
      %v208 = vld [vmem:[%s1 + $0x4] sm:$0xf]
      %v209 = vld [vmem:[%s1 + $0x8] sm:$0xf]
      %v210 = vld [vmem:[%s1 + $0xc] sm:$0xf]
      %v211 = vld [vmem:[%s1 + $0x10] sm:$0xf]
      %v212 = vld [vmem:[%s1 + $0x14] sm:$0xf]
      %v213 = vld [vmem:[%s1 + $0x18] sm:$0xf]
      %v214 = vld [vmem:[%s1 + $0x1c] sm:$0xf]
      %v215 = vld [vmem:[%s1 + $0x20] sm:$0xf]
      %v216 = vld [vmem:[%s1 + $0x24] sm:$0xf]
      %v217 = vld [vmem:[%s1 + $0x28] sm:$0xf]
      %v218 = vld [vmem:[%s1 + $0x2c] sm:$0xf]
      %v219 = vld [vmem:[%s2] sm:$0x1]
      %v221 = vperm.slane %v219, 0
      %v255 = vunpack.c.l.b16 %v175
      %v256 = vunpack.c.l.b16 %v176
      %v257 = vunpack.c.l.b16 %v177
      %v258 = vunpack.c.l.b16 %v178
      %v259 = vunpack.c.l.b16 %v179
      %v260 = vunpack.c.l.b16 %v180
      %v261 = vunpack.c.l.b16 %v181
      %v262 = vunpack.c.l.b16 %v182
      %v263 = vunpack.c.l.b16 %v183
      %v264 = vunpack.c.l.b16 %v184
      %v265 = vunpack.c.l.b16 %v185
      %v266 = vunpack.c.l.b16 %v186
      %v267 = vunpack.c.l.b16 %v187
      %v268 = vunpack.c.l.b16 %v188
      %v269 = vunpack.c.l.b16 %v189
      %v270 = vunpack.c.l.b16 %v190
      %v271 = vunpack.c.l.b16 %v191
      %v272 = vunpack.c.l.b16 %v192
      %v273 = vunpack.c.l.b16 %v193
      %v274 = vunpack.c.l.b16 %v194
      %v275 = vunpack.c.l.b16 %v195
      %v276 = vunpack.c.l.b16 %v196
      %v277 = vunpack.c.l.b16 %v197
      %v278 = vunpack.c.l.b16 %v198
      %v279 = vunpack.c.l.b16 %v199
      %v280 = vunpack.c.l.b16 %v200
      %v281 = vunpack.c.l.b16 %v201
      %v282 = vunpack.c.l.b16 %v202
      %v283 = vunpack.c.l.b16 %v203
      %v284 = vunpack.c.l.b16 %v204
      %v285 = vunpack.c.l.b16 %v205
      %v286 = vunpack.c.l.b16 %v206
      %v287 = vpack.c.b16 %v256, %v255
      %v288 = vpack.c.b16 %v258, %v257
      %v289 = vpack.c.b16 %v260, %v259
      %v290 = vpack.c.b16 %v262, %v261
      %v291 = vpack.c.b16 %v264, %v263
      %v292 = vpack.c.b16 %v266, %v265
      %v293 = vpack.c.b16 %v268, %v267
      %v294 = vpack.c.b16 %v270, %v269
      %v295 = vpack.c.b16 %v272, %v271
      %v296 = vpack.c.b16 %v274, %v273
      %v297 = vpack.c.b16 %v276, %v275
      %v298 = vpack.c.b16 %v278, %v277
      %v299 = vpack.c.b16 %v280, %v279
      %v300 = vpack.c.b16 %v282, %v281
      %v301 = vpack.c.b16 %v284, %v283
      %v302 = vpack.c.b16 %v286, %v285
      %v315 = vunpack.c.l.b16 %v207
      %v316 = vunpack.c.l.b16 %v208
      %v317 = vunpack.c.l.b16 %v209
      %v318 = vunpack.c.l.b16 %v210
      %v319 = vunpack.c.l.b16 %v211
      %v320 = vunpack.c.l.b16 %v212
      %v321 = vunpack.c.l.b16 %v213
      %v322 = vunpack.c.l.b16 %v214
      %v323 = vunpack.c.l.b16 %v215
      %v324 = vunpack.c.l.b16 %v216
      %v325 = vunpack.c.l.b16 %v217
      %v326 = vunpack.c.l.b16 %v218
      %v327 = vpack.c.b16 %v316, %v315
      %v328 = vpack.c.b16 %v318, %v317
      %v329 = vpack.c.b16 %v320, %v319
      %v330 = vpack.c.b16 %v322, %v321
      %v331 = vpack.c.b16 %v324, %v323
      %v332 = vpack.c.b16 %v326, %v325
      %vm339 = vcmask 785408
      %v341 = vsel %vm339, %v287, 0
      %v344 = vsel %vm339, %v288, 0
      %v347 = vsel %vm339, %v289, 0
      %v350 = vsel %vm339, %v290, 0
      %v353 = vsel %vm339, %v291, 0
      %v356 = vsel %vm339, %v292, 0
      %v359 = vsel %vm339, %v293, 0
      %v362 = vsel %vm339, %v294, 0
      %v365 = vsel %vm339, %v295, 0
      %v368 = vsel %vm339, %v296, 0
      %v371 = vsel %vm339, %v297, 0
      %v374 = vsel %vm339, %v298, 0
      %v377 = vsel %vm339, %v299, 0
      %v380 = vsel %vm339, %v300, 0
      %v383 = vsel %vm339, %v301, 0
      %v386 = vsel %vm339, %v302, 0
      %388 = vmatpush.bf16.msra.mxu0 0
      %389 = vmatpush.bf16.msra.mxu0 0
      %390 = vmatpush.bf16.msra.mxu0 %v332
      %391 = vmatpush.bf16.msra.mxu0 %v331
      %392 = vmatpush.bf16.msra.mxu0 %v330
      %393 = vmatpush.bf16.msra.mxu0 %v329
      %394 = vmatpush.bf16.msra.mxu0 %v328
      %395 = vmatpush.bf16.msra.mxu0 %v327
      %396 = vmatmul.bf16.gmra.mxu0 %v341
      %v397 = vpop.f32.mrf.mxu0
      %v398 = vadd.f32 %v221, %v397
      %v399 = vpop.f32.mrf.mxu0
      %v400 = vadd.f32 %v221, %v399
      %401 = vmatmul.bf16.gmra.mxu0 %v344
      %v402 = vpop.f32.mrf.mxu0
      %v403 = vadd.f32 %v221, %v402
      %v404 = vpop.f32.mrf.mxu0
      %v405 = vadd.f32 %v221, %v404
      %406 = vmatmul.bf16.gmra.mxu0 %v347
      %v407 = vpop.f32.mrf.mxu0
      %v408 = vadd.f32 %v221, %v407
      %v409 = vpop.f32.mrf.mxu0
      %v410 = vadd.f32 %v221, %v409
      %411 = vmatmul.bf16.gmra.mxu0 %v350
      %v412 = vpop.f32.mrf.mxu0
      %v413 = vadd.f32 %v221, %v412
      %v414 = vpop.f32.mrf.mxu0
      %v415 = vadd.f32 %v221, %v414
      %416 = vmatmul.bf16.gmra.mxu0 %v353
      %v417 = vpop.f32.mrf.mxu0
      %v418 = vadd.f32 %v221, %v417
      %v419 = vpop.f32.mrf.mxu0
      %v420 = vadd.f32 %v221, %v419
      %421 = vmatmul.bf16.gmra.mxu0 %v356
      %v422 = vpop.f32.mrf.mxu0
      %v423 = vadd.f32 %v221, %v422
      %v424 = vpop.f32.mrf.mxu0
      %v425 = vadd.f32 %v221, %v424
      %426 = vmatmul.bf16.gmra.mxu0 %v359
      %v427 = vpop.f32.mrf.mxu0
      %v428 = vadd.f32 %v221, %v427
      %v429 = vpop.f32.mrf.mxu0
      %v430 = vadd.f32 %v221, %v429
      %431 = vmatmul.bf16.gmra.mxu0 %v362
      %v432 = vpop.f32.mrf.mxu0
      %v433 = vadd.f32 %v221, %v432
      %v434 = vpop.f32.mrf.mxu0
      %v435 = vadd.f32 %v221, %v434
      %436 = vmatmul.bf16.gmra.mxu0 %v365
      %v437 = vpop.f32.mrf.mxu0
      %v438 = vadd.f32 %v221, %v437
      %v439 = vpop.f32.mrf.mxu0
      %v440 = vadd.f32 %v221, %v439
      %441 = vmatmul.bf16.gmra.mxu0 %v368
      %v442 = vpop.f32.mrf.mxu0
      %v443 = vadd.f32 %v221, %v442
      %v444 = vpop.f32.mrf.mxu0
      %v445 = vadd.f32 %v221, %v444
      %446 = vmatmul.bf16.gmra.mxu0 %v371
      %v447 = vpop.f32.mrf.mxu0
      %v448 = vadd.f32 %v221, %v447
      %v449 = vpop.f32.mrf.mxu0
      %v450 = vadd.f32 %v221, %v449
      %451 = vmatmul.bf16.gmra.mxu0 %v374
      %v452 = vpop.f32.mrf.mxu0
      %v453 = vadd.f32 %v221, %v452
      %v454 = vpop.f32.mrf.mxu0
      %v455 = vadd.f32 %v221, %v454
      %456 = vmatmul.bf16.gmra.mxu0 %v377
      %v457 = vpop.f32.mrf.mxu0
      %v458 = vadd.f32 %v221, %v457
      %v459 = vpop.f32.mrf.mxu0
      %v460 = vadd.f32 %v221, %v459
      %461 = vmatmul.bf16.gmra.mxu0 %v380
      %v462 = vpop.f32.mrf.mxu0
      %v463 = vadd.f32 %v221, %v462
      %v464 = vpop.f32.mrf.mxu0
      %v465 = vadd.f32 %v221, %v464
      %466 = vmatmul.bf16.gmra.mxu0 %v383
      %v467 = vpop.f32.mrf.mxu0
      %v468 = vadd.f32 %v221, %v467
      %v469 = vpop.f32.mrf.mxu0
      %v470 = vadd.f32 %v221, %v469
      %471 = vmatmul.bf16.gmra.mxu0 %v386
      %v472 = vpop.f32.mrf.mxu0
      %v473 = vadd.f32 %v221, %v472
      %v474 = vpop.f32.mrf.mxu0
      %v475 = vadd.f32 %v221, %v474
      %476 = vdwg.mxu0
      %vm477 = vcmask 523264
      %478 = vst.msk [vmem:[%s172] sm:$0xff] %vm477, %v398
      %479 = vst.msk [vmem:[%s172 + $0x8] sm:$0xff] %vm477, %v400
      %480 = vst.msk [vmem:[%s172 + $0x10] sm:$0xff] %vm477, %v403
      %481 = vst.msk [vmem:[%s172 + $0x18] sm:$0xff] %vm477, %v405
      %482 = vst.msk [vmem:[%s172 + $0x20] sm:$0xff] %vm477, %v408
      %483 = vst.msk [vmem:[%s172 + $0x28] sm:$0xff] %vm477, %v410
      %484 = vst.msk [vmem:[%s172 + $0x30] sm:$0xff] %vm477, %v413
      %485 = vst.msk [vmem:[%s172 + $0x38] sm:$0xff] %vm477, %v415
      %486 = vst.msk [vmem:[%s172 + $0x40] sm:$0xff] %vm477, %v418
      %487 = vst.msk [vmem:[%s172 + $0x48] sm:$0xff] %vm477, %v420
      %488 = vst.msk [vmem:[%s172 + $0x50] sm:$0xff] %vm477, %v423
      %489 = vst.msk [vmem:[%s172 + $0x58] sm:$0xff] %vm477, %v425
      %490 = vst.msk [vmem:[%s172 + $0x60] sm:$0xff] %vm477, %v428
      %491 = vst.msk [vmem:[%s172 + $0x68] sm:$0xff] %vm477, %v430
      %492 = vst.msk [vmem:[%s172 + $0x70] sm:$0xff] %vm477, %v433
      %493 = vst.msk [vmem:[%s172 + $0x78] sm:$0xff] %vm477, %v435
      %494 = vst.msk [vmem:[%s172 + $0x80] sm:$0xff] %vm477, %v438
      %495 = vst.msk [vmem:[%s172 + $0x88] sm:$0xff] %vm477, %v440
      %496 = vst.msk [vmem:[%s172 + $0x90] sm:$0xff] %vm477, %v443
      %497 = vst.msk [vmem:[%s172 + $0x98] sm:$0xff] %vm477, %v445
      %498 = vst.msk [vmem:[%s172 + $0xa0] sm:$0xff] %vm477, %v448
      %499 = vst.msk [vmem:[%s172 + $0xa8] sm:$0xff] %vm477, %v450
      %500 = vst.msk [vmem:[%s172 + $0xb0] sm:$0xff] %vm477, %v453
      %501 = vst.msk [vmem:[%s172 + $0xb8] sm:$0xff] %vm477, %v455
      %502 = vst.msk [vmem:[%s172 + $0xc0] sm:$0xff] %vm477, %v458
      %503 = vst.msk [vmem:[%s172 + $0xc8] sm:$0xff] %vm477, %v460
      %504 = vst.msk [vmem:[%s172 + $0xd0] sm:$0xff] %vm477, %v463
      %505 = vst.msk [vmem:[%s172 + $0xd8] sm:$0xff] %vm477, %v465
      %506 = vst.msk [vmem:[%s172 + $0xe0] sm:$0xff] %vm477, %v468
      %507 = vst.msk [vmem:[%s172 + $0xe8] sm:$0xff] %vm477, %v470
      %508 = vst.msk [vmem:[%s172 + $0xf0] sm:$0xff] %vm477, %v473
      %509 = vst.msk [vmem:[%s172 + $0xf8] sm:$0xff] %vm477, %v475
      %s510 = smul.u32 32, %s14
      %p511 = scmp.lt.s32.totalorder %s510, 63
      %s512 = scalar_select %p511, %s510, 63
      %s513 = smul.addr %s512, 8
      %s514 = scalar_lea.vmem %s3, %s513
      // Predicated region
      $region33: #{forward.37} parent=31 // pred_check
        %p515 = pneg %p100
      $region34: #{forward.37} parent=31 // pred_check_branch
        %517 = sbr.rel (%p515) target = $region36
      $region35: #{forward.37} parent=31 // pred_region
        %s518 = smul.u32 32, %s14
      $region36: #{forward.37} parent=31 // pred_fallthru
        _
    $region32: #{forward.37} parent=5 // pred_fallthru
      _
    %p519 = scmp.le.s32.totalorder 2, %s9
    // Predicated region
    $region37: #{forward.37} parent=5 // pred_check
      %p520 = pneg %p519
    $region38: #{forward.37} parent=5 // pred_check_branch
      %522 = sbr.rel (%p520) target = $region40
    $region39: #{forward.37} parent=5 // pred_region
      %s523 = ssub.s32 %s9, 2
      // Predicated region
      $region41: #{forward.37} parent=39 // pred_check
        %p524 = pneg %p106
      $region42: #{forward.37} parent=39 // pred_check_branch
        %526 = sbr.rel (%p524) target = $region44
      $region43: #{forward.37} parent=39 // pred_region
        %s527 = smul.u32 32, %s15
        %p528 = scmp.lt.s32.totalorder %s527, 63
        %s529 = scalar_select %p528, %s527, 63
        %s530 = smul.addr %s529, 8
        %s531 = scalar_lea.vmem %s3, %s530
      $region44: #{forward.37} parent=39 // pred_fallthru
        _
    $region40: #{forward.37} parent=5 // pred_fallthru
      _
  $region6: #{forward.37} parent=0 // loop_footer
    %s13 = sadd.s32 1, %s9
  $region7: #{forward.37} parent=0 // loop_footer_branch
    %8 = sbr.rel target = $region3
  $region8: #{forward.37} parent=0 // loop_exit
    _

// kernel: forward.38
$region0: #{forward.38}
  #allocation0 [shape = 'u32[]', space=smem, size = 0x4, offset = 0x4, fixed_abs, tag = 'smem constant byte address 0x4 - core index']
  #allocation1 [shape = 'u32[72,128]{1,0:T(1,128)}', space=vmem, size = 0x9000, scoped, tag = 'internal scratch']
  %s0 = inlined_call_operand.vmem [shape: bf16[160,192], index: 0, kind: input, shape index: {}]
  %s1 = inlined_call_operand.vmem [shape: bf16[192,128], index: 1, kind: input, shape index: {}]
  %s2 = inlined_call_operand.vmem [shape: f32[1,128], index: 2, kind: input, shape index: {}]
  %s3 = inlined_call_operand.vmem [shape: f32[160,128], index: 3, kind: output, shape index: {}]
  %s4 = sld [smem:[#allocation0]]
  $region22: #{forward.38} parent=0
    _
  %s6 = ssub.s32 1, %s4
  %s7 = scalar_select 0, %s6, %s4
  // Predicated region
  $region2: #{forward.38} parent=0 // pred_check
    _
  $region3: #{forward.38} parent=0 // pred_check_branch
    %9 = sbr.rel (0) target = $region5
  $region4: #{forward.38} parent=0 // pred_region
    _
  $region5: #{forward.38} parent=0 // pred_fallthru
    _
  // Predicated region
  $region6: #{forward.38} parent=0 // pred_check
    _
  $region7: #{forward.38} parent=0 // pred_check_branch
    %11 = sbr.rel (0) target = $region9
  $region8: #{forward.38} parent=0 // pred_region
    _
  $region9: #{forward.38} parent=0 // pred_fallthru
    _
  // Predicated region
  $region10: #{forward.38} parent=0 // pred_check
    _
  $region11: #{forward.38} parent=0 // pred_check_branch
    %13 = sbr.rel (0) target = $region13
  $region12: #{forward.38} parent=0 // pred_region
    _
  $region13: #{forward.38} parent=0 // pred_fallthru
    _
  %v15 = vld [vmem:[%s0] sm:$0xff]
  %v16 = vld [vmem:[%s0 + $0x8] sm:$0xff]
  %v17 = vld [vmem:[%s0 + $0x10] sm:$0xff]
  %v18 = vld [vmem:[%s0 + $0x18] sm:$0xff]
  %v19 = vld [vmem:[%s0 + $0x20] sm:$0xff]
  %v20 = vld [vmem:[%s0 + $0x28] sm:$0xff]
  %v21 = vld [vmem:[%s0 + $0x30] sm:$0xff]
  %v22 = vld [vmem:[%s0 + $0x38] sm:$0xff]
  %v23 = vld [vmem:[%s0 + $0x40] sm:$0xff]
  %v24 = vld [vmem:[%s0 + $0x48] sm:$0xff]
  %v25 = vld [vmem:[%s0 + $0x50] sm:$0xff]
  %v26 = vld [vmem:[%s0 + $0x58] sm:$0xff]
  %v27 = vld [vmem:[%s0 + $0x60] sm:$0xff]
  %v28 = vld [vmem:[%s0 + $0x68] sm:$0xff]
  %v29 = vld [vmem:[%s0 + $0x70] sm:$0xff]
  %v30 = vld [vmem:[%s0 + $0x78] sm:$0xff]
  %v31 = vld [vmem:[%s0 + $0x80] sm:$0xff]
  %v32 = vld [vmem:[%s0 + $0x88] sm:$0xff]
  %v33 = vld [vmem:[%s0 + $0x90] sm:$0xff]
  %v34 = vld [vmem:[%s0 + $0x98] sm:$0xff]
  %v35 = vld [vmem:[%s1] sm:$0xf]
  %v36 = vld [vmem:[%s1 + $0x4] sm:$0xf]
  %v37 = vld [vmem:[%s1 + $0x8] sm:$0xf]
  %v38 = vld [vmem:[%s1 + $0xc] sm:$0xf]
  %v39 = vld [vmem:[%s1 + $0x10] sm:$0xf]
  %v40 = vld [vmem:[%s1 + $0x14] sm:$0xf]
  %v41 = vld [vmem:[%s1 + $0x18] sm:$0xf]
  %v42 = vld [vmem:[%s1 + $0x1c] sm:$0xf]
  %v43 = vld [vmem:[%s1 + $0x20] sm:$0xf]
  %v44 = vld [vmem:[%s1 + $0x24] sm:$0xf]
  %v45 = vld [vmem:[%s1 + $0x28] sm:$0xf]
  %v46 = vld [vmem:[%s1 + $0x2c] sm:$0xf]
  %v47 = vld [vmem:[%s1 + $0x30] sm:$0xf]
  %v48 = vld [vmem:[%s1 + $0x34] sm:$0xf]
  %v49 = vld [vmem:[%s1 + $0x38] sm:$0xf]
  %v50 = vld [vmem:[%s1 + $0x3c] sm:$0xf]
  %v51 = vld [vmem:[%s1 + $0x40] sm:$0xf]
  %v52 = vld [vmem:[%s1 + $0x44] sm:$0xf]
  %v53 = vld [vmem:[%s1 + $0x48] sm:$0xf]
  %v54 = vld [vmem:[%s1 + $0x4c] sm:$0xf]
  %v55 = vld [vmem:[%s1 + $0x50] sm:$0xf]
  %v56 = vld [vmem:[%s1 + $0x54] sm:$0xf]
  %v57 = vld [vmem:[%s1 + $0x58] sm:$0xf]
  %v58 = vld [vmem:[%s1 + $0x5c] sm:$0xf]
  %v59 = vld [vmem:[%s2] sm:$0x1]
  %v61 = vperm.slane %v59, 0
  %v83 = vunpack.c.l.b16 %v15
  %v84 = vunpack.c.h.b16 %v15
  %v85 = vunpack.c.l.b16 %v16
  %v86 = vunpack.c.h.b16 %v16
  %v87 = vunpack.c.l.b16 %v17
  %v88 = vunpack.c.h.b16 %v17
  %v89 = vunpack.c.l.b16 %v18
  %v90 = vunpack.c.h.b16 %v18
  %v91 = vunpack.c.l.b16 %v19
  %v92 = vunpack.c.h.b16 %v19
  %v93 = vunpack.c.l.b16 %v20
  %v94 = vunpack.c.h.b16 %v20
  %v95 = vunpack.c.l.b16 %v21
  %v96 = vunpack.c.h.b16 %v21
  %v97 = vunpack.c.l.b16 %v22
  %v98 = vunpack.c.h.b16 %v22
  %v99 = vunpack.c.l.b16 %v23
  %v100 = vunpack.c.h.b16 %v23
  %v101 = vunpack.c.l.b16 %v24
  %v102 = vunpack.c.h.b16 %v24
  %v103 = vunpack.c.l.b16 %v25
  %v104 = vunpack.c.h.b16 %v25
  %v105 = vunpack.c.l.b16 %v26
  %v106 = vunpack.c.h.b16 %v26
  %v107 = vunpack.c.l.b16 %v27
  %v108 = vunpack.c.h.b16 %v27
  %v109 = vunpack.c.l.b16 %v28
  %v110 = vunpack.c.h.b16 %v28
  %v111 = vunpack.c.l.b16 %v29
  %v112 = vunpack.c.h.b16 %v29
  %v113 = vunpack.c.l.b16 %v30
  %v114 = vunpack.c.h.b16 %v30
  %v115 = vunpack.c.l.b16 %v31
  %v116 = vunpack.c.h.b16 %v31
  %v117 = vunpack.c.l.b16 %v32
  %v118 = vunpack.c.h.b16 %v32
  %v119 = vunpack.c.l.b16 %v33
  %v120 = vunpack.c.h.b16 %v33
  %v121 = vunpack.c.l.b16 %v34
  %v122 = vunpack.c.h.b16 %v34
  %v123 = vpack.c.b16 %v85, %v83
  %v124 = vpack.c.b16 %v86, %v84
  %v125 = vpack.c.b16 %v89, %v87
  %v126 = vpack.c.b16 %v90, %v88
  %v127 = vpack.c.b16 %v93, %v91
  %v128 = vpack.c.b16 %v94, %v92
  %v129 = vpack.c.b16 %v97, %v95
  %v130 = vpack.c.b16 %v98, %v96
  %v131 = vpack.c.b16 %v101, %v99
  %v132 = vpack.c.b16 %v102, %v100
  %v133 = vpack.c.b16 %v105, %v103
  %v134 = vpack.c.b16 %v106, %v104
  %v135 = vpack.c.b16 %v109, %v107
  %v136 = vpack.c.b16 %v110, %v108
  %v137 = vpack.c.b16 %v113, %v111
  %v138 = vpack.c.b16 %v114, %v112
  %v139 = vpack.c.b16 %v117, %v115
  %v140 = vpack.c.b16 %v118, %v116
  %v141 = vpack.c.b16 %v121, %v119
  %v142 = vpack.c.b16 %v122, %v120
  %v177 = vunpack.c.l.b16 %v35
  %v178 = vunpack.c.l.b16 %v36
  %v179 = vunpack.c.l.b16 %v37
  %v180 = vunpack.c.l.b16 %v38
  %v181 = vunpack.c.l.b16 %v39
  %v182 = vunpack.c.l.b16 %v40
  %v183 = vunpack.c.l.b16 %v41
  %v184 = vunpack.c.l.b16 %v42
  %v185 = vunpack.c.l.b16 %v43
  %v186 = vunpack.c.l.b16 %v44
  %v187 = vunpack.c.l.b16 %v45
  %v188 = vunpack.c.l.b16 %v46
  %v189 = vunpack.c.l.b16 %v47
  %v190 = vunpack.c.l.b16 %v48
  %v191 = vunpack.c.l.b16 %v49
  %v192 = vunpack.c.l.b16 %v50
  %v193 = vunpack.c.l.b16 %v51
  %v194 = vunpack.c.l.b16 %v52
  %v195 = vunpack.c.l.b16 %v53
  %v196 = vunpack.c.l.b16 %v54
  %v197 = vunpack.c.l.b16 %v55
  %v198 = vunpack.c.l.b16 %v56
  %v199 = vunpack.c.l.b16 %v57
  %v200 = vunpack.c.l.b16 %v58
  %v201 = vpack.c.b16 %v178, %v177
  %v202 = vpack.c.b16 %v180, %v179
  %v203 = vpack.c.b16 %v182, %v181
  %v204 = vpack.c.b16 %v184, %v183
  %v205 = vpack.c.b16 %v186, %v185
  %v206 = vpack.c.b16 %v188, %v187
  %v207 = vpack.c.b16 %v190, %v189
  %v208 = vpack.c.b16 %v192, %v191
  %v209 = vpack.c.b16 %v194, %v193
  %v210 = vpack.c.b16 %v196, %v195
  %v211 = vpack.c.b16 %v198, %v197
  %v212 = vpack.c.b16 %v200, %v199
  %vm225 = vcmask 523264
  %v227 = vsel %vm225, %v124, 0
  %v230 = vsel %vm225, %v126, 0
  %v233 = vsel %vm225, %v128, 0
  %v236 = vsel %vm225, %v130, 0
  %v239 = vsel %vm225, %v132, 0
  %v242 = vsel %vm225, %v134, 0
  %v245 = vsel %vm225, %v136, 0
  %v248 = vsel %vm225, %v138, 0
  %v251 = vsel %vm225, %v140, 0
  %v254 = vsel %vm225, %v142, 0
  %256 = vmatpush.bf16.msra.mxu0 %v208
  %257 = vmatpush.bf16.msra.mxu0 %v207
  %258 = vmatpush.bf16.msra.mxu0 %v206
  %259 = vmatpush.bf16.msra.mxu0 %v205
  %260 = vmatpush.bf16.msra.mxu0 %v204
  %261 = vmatpush.bf16.msra.mxu0 %v203
  %262 = vmatpush.bf16.msra.mxu0 %v202
  %263 = vmatpush.bf16.msra.mxu0 %v201
  %264 = vmatmul.bf16.gmra.mxu0 %v123
  %v265 = vpop.f32.mrf.mxu0
  %v266 = vadd.f32 %v61, %v265
  %v267 = vpop.f32.mrf.mxu0
  %v268 = vadd.f32 %v61, %v267
  %269 = vmatmul.bf16.gmra.mxu0 %v125
  %v270 = vpop.f32.mrf.mxu0
  %v271 = vadd.f32 %v61, %v270
  %v272 = vpop.f32.mrf.mxu0
  %v273 = vadd.f32 %v61, %v272
  %274 = vmatmul.bf16.gmra.mxu0 %v127
  %v275 = vpop.f32.mrf.mxu0
  %v276 = vadd.f32 %v61, %v275
  %v277 = vpop.f32.mrf.mxu0
  %v278 = vadd.f32 %v61, %v277
  %279 = vmatmul.bf16.gmra.mxu0 %v129
  %v280 = vpop.f32.mrf.mxu0
  %v281 = vadd.f32 %v61, %v280
  %v282 = vpop.f32.mrf.mxu0
  %v283 = vadd.f32 %v61, %v282
  %284 = vmatmul.bf16.gmra.mxu0 %v131
  %v285 = vpop.f32.mrf.mxu0
  %v286 = vadd.f32 %v61, %v285
  %v287 = vpop.f32.mrf.mxu0
  %v288 = vadd.f32 %v61, %v287
  %289 = vmatmul.bf16.gmra.mxu0 %v133
  %v290 = vpop.f32.mrf.mxu0
  %v291 = vadd.f32 %v61, %v290
  %v292 = vpop.f32.mrf.mxu0
  %v293 = vadd.f32 %v61, %v292
  %294 = vmatmul.bf16.gmra.mxu0 %v135
  %v295 = vpop.f32.mrf.mxu0
  %v296 = vadd.f32 %v61, %v295
  %v297 = vpop.f32.mrf.mxu0
  %v298 = vadd.f32 %v61, %v297
  %299 = vmatmul.bf16.gmra.mxu0 %v137
  %v300 = vpop.f32.mrf.mxu0
  %v301 = vadd.f32 %v61, %v300
  %v302 = vpop.f32.mrf.mxu0
  %v303 = vadd.f32 %v61, %v302
  %304 = vmatmul.bf16.gmra.mxu0 %v139
  %v305 = vpop.f32.mrf.mxu0
  %v306 = vadd.f32 %v61, %v305
  %v307 = vpop.f32.mrf.mxu0
  %v308 = vadd.f32 %v61, %v307
  %309 = vmatmul.bf16.gmra.mxu0 %v141
  %v310 = vpop.f32.mrf.mxu0
  %v311 = vadd.f32 %v61, %v310
  %v312 = vpop.f32.mrf.mxu0
  %v313 = vadd.f32 %v61, %v312
  %314 = vdwg.mxu0
  %315 = vmatpush.bf16.msra.mxu0 0
  %316 = vmatpush.bf16.msra.mxu0 0
  %317 = vmatpush.bf16.msra.mxu0 0
  %318 = vmatpush.bf16.msra.mxu0 0
  %319 = vmatpush.bf16.msra.mxu0 %v212
  %320 = vmatpush.bf16.msra.mxu0 %v211
  %321 = vmatpush.bf16.msra.mxu0 %v210
  %322 = vmatpush.bf16.msra.mxu0 %v209
  %323 = vmatmul.bf16.gmra.mxu0 %v227
  %v324 = vpop.f32.mrf.mxu0
  %v325 = vadd.f32 %v266, %v324
  %v326 = vpop.f32.mrf.mxu0
  %v327 = vadd.f32 %v268, %v326
  %328 = vmatmul.bf16.gmra.mxu0 %v230
  %v329 = vpop.f32.mrf.mxu0
  %v330 = vadd.f32 %v271, %v329
  %v331 = vpop.f32.mrf.mxu0
  %v332 = vadd.f32 %v273, %v331
  %333 = vmatmul.bf16.gmra.mxu0 %v233
  %v334 = vpop.f32.mrf.mxu0
  %v335 = vadd.f32 %v276, %v334
  %v336 = vpop.f32.mrf.mxu0
  %v337 = vadd.f32 %v278, %v336
  %338 = vmatmul.bf16.gmra.mxu0 %v236
  %v339 = vpop.f32.mrf.mxu0
  %v340 = vadd.f32 %v281, %v339
  %v341 = vpop.f32.mrf.mxu0
  %v342 = vadd.f32 %v283, %v341
  %343 = vmatmul.bf16.gmra.mxu0 %v239
  %v344 = vpop.f32.mrf.mxu0
  %v345 = vadd.f32 %v286, %v344
  %v346 = vpop.f32.mrf.mxu0
  %v347 = vadd.f32 %v288, %v346
  %348 = vmatmul.bf16.gmra.mxu0 %v242
  %v349 = vpop.f32.mrf.mxu0
  %v350 = vadd.f32 %v291, %v349
  %v351 = vpop.f32.mrf.mxu0
  %v352 = vadd.f32 %v293, %v351
  %353 = vmatmul.bf16.gmra.mxu0 %v245
  %v354 = vpop.f32.mrf.mxu0
  %v355 = vadd.f32 %v296, %v354
  %v356 = vpop.f32.mrf.mxu0
  %v357 = vadd.f32 %v298, %v356
  %358 = vmatmul.bf16.gmra.mxu0 %v248
  %v359 = vpop.f32.mrf.mxu0
  %v360 = vadd.f32 %v301, %v359
  %v361 = vpop.f32.mrf.mxu0
  %v362 = vadd.f32 %v303, %v361
  %363 = vmatmul.bf16.gmra.mxu0 %v251
  %v364 = vpop.f32.mrf.mxu0
  %v365 = vadd.f32 %v306, %v364
  %v366 = vpop.f32.mrf.mxu0
  %v367 = vadd.f32 %v308, %v366
  %368 = vmatmul.bf16.gmra.mxu0 %v254
  %v369 = vpop.f32.mrf.mxu0
  %v370 = vadd.f32 %v311, %v369
  %v371 = vpop.f32.mrf.mxu0
  %v372 = vadd.f32 %v313, %v371
  %373 = vdwg.mxu0
  %374 = vst [vmem:[%s3] sm:$0xff] %v325
  %375 = vst [vmem:[%s3 + $0x8] sm:$0xff] %v327
  %376 = vst [vmem:[%s3 + $0x10] sm:$0xff] %v330
  %377 = vst [vmem:[%s3 + $0x18] sm:$0xff] %v332
  %378 = vst [vmem:[%s3 + $0x20] sm:$0xff] %v335
  %379 = vst [vmem:[%s3 + $0x28] sm:$0xff] %v337
  %380 = vst [vmem:[%s3 + $0x30] sm:$0xff] %v340
  %381 = vst [vmem:[%s3 + $0x38] sm:$0xff] %v342
  %382 = vst [vmem:[%s3 + $0x40] sm:$0xff] %v345
  %383 = vst [vmem:[%s3 + $0x48] sm:$0xff] %v347
  %384 = vst [vmem:[%s3 + $0x50] sm:$0xff] %v350
  %385 = vst [vmem:[%s3 + $0x58] sm:$0xff] %v352
  %386 = vst [vmem:[%s3 + $0x60] sm:$0xff] %v355
  %387 = vst [vmem:[%s3 + $0x68] sm:$0xff] %v357
  %388 = vst [vmem:[%s3 + $0x70] sm:$0xff] %v360
  %389 = vst [vmem:[%s3 + $0x78] sm:$0xff] %v362
  %390 = vst [vmem:[%s3 + $0x80] sm:$0xff] %v365
  %391 = vst [vmem:[%s3 + $0x88] sm:$0xff] %v367
  %392 = vst [vmem:[%s3 + $0x90] sm:$0xff] %v370
  %393 = vst [vmem:[%s3 + $0x98] sm:$0xff] %v372
  // Predicated region
  $region14: #{forward.38} parent=0 // pred_check
    _
  $region15: #{forward.38} parent=0 // pred_check_branch
    %395 = sbr.rel (0) target = $region17
  $region16: #{forward.38} parent=0 // pred_region
    _
  $region17: #{forward.38} parent=0 // pred_fallthru
    _
  // Predicated region
  $region18: #{forward.38} parent=0 // pred_check
    _
  $region19: #{forward.38} parent=0 // pred_check_branch
    %397 = sbr.rel (0) target = $region21
  $region20: #{forward.38} parent=0 // pred_region
    _
  $region21: #{forward.38} parent=0 // pred_fallthru
    _

// kernel: forward.39
$region0: #{forward.39}
  #allocation0 [shape = 'u32[]', space=smem, size = 0x4, offset = 0x4, fixed_abs, tag = 'smem constant byte address 0x4 - core index']
  #allocation1 [shape = 'u32[72,128]{1,0:T(1,128)}', space=vmem, size = 0x9000, scoped, tag = 'internal scratch']
  %s0 = inlined_call_operand.vmem [shape: bf16[64,384], index: 0, kind: input, shape index: {}]
  %s1 = inlined_call_operand.vmem [shape: bf16[384,128], index: 1, kind: input, shape index: {}]
  %s2 = inlined_call_operand.vmem [shape: f32[1,128], index: 2, kind: input, shape index: {}]
  %s3 = inlined_call_operand.vmem [shape: f32[64,128], index: 3, kind: output, shape index: {}]
  %s4 = sld [smem:[#allocation0]]
  $region22: #{forward.39} parent=0
    _
  %s6 = ssub.s32 1, %s4
  %s7 = scalar_select 0, %s6, %s4
  // Predicated region
  $region2: #{forward.39} parent=0 // pred_check
    _
  $region3: #{forward.39} parent=0 // pred_check_branch
    %9 = sbr.rel (0) target = $region5
  $region4: #{forward.39} parent=0 // pred_region
    _
  $region5: #{forward.39} parent=0 // pred_fallthru
    _
  // Predicated region
  $region6: #{forward.39} parent=0 // pred_check
    _
  $region7: #{forward.39} parent=0 // pred_check_branch
    %11 = sbr.rel (0) target = $region9
  $region8: #{forward.39} parent=0 // pred_region
    _
  $region9: #{forward.39} parent=0 // pred_fallthru
    _
  // Predicated region
  $region10: #{forward.39} parent=0 // pred_check
    _
  $region11: #{forward.39} parent=0 // pred_check_branch
    %13 = sbr.rel (0) target = $region13
  $region12: #{forward.39} parent=0 // pred_region
    _
  $region13: #{forward.39} parent=0 // pred_fallthru
    _
  %v14 = vld [vmem:[%s0] sm:$0xff]
  %v15 = vld [vmem:[%s0 + $0x8] sm:$0xf]
  %v16 = vld [vmem:[%s0 + $0xc] sm:$0xff]
  %v17 = vld [vmem:[%s0 + $0x14] sm:$0xf]
  %v18 = vld [vmem:[%s0 + $0x18] sm:$0xff]
  %v19 = vld [vmem:[%s0 + $0x20] sm:$0xf]
  %v20 = vld [vmem:[%s0 + $0x24] sm:$0xff]
  %v21 = vld [vmem:[%s0 + $0x2c] sm:$0xf]
  %v22 = vld [vmem:[%s0 + $0x30] sm:$0xff]
  %v23 = vld [vmem:[%s0 + $0x38] sm:$0xf]
  %v24 = vld [vmem:[%s0 + $0x3c] sm:$0xff]
  %v25 = vld [vmem:[%s0 + $0x44] sm:$0xf]
  %v26 = vld [vmem:[%s0 + $0x48] sm:$0xff]
  %v27 = vld [vmem:[%s0 + $0x50] sm:$0xf]
  %v28 = vld [vmem:[%s0 + $0x54] sm:$0xff]
  %v29 = vld [vmem:[%s0 + $0x5c] sm:$0xf]
  %v30 = vld [vmem:[%s1] sm:$0xf]
  %v31 = vld [vmem:[%s1 + $0x4] sm:$0xf]
  %v32 = vld [vmem:[%s1 + $0x8] sm:$0xf]
  %v33 = vld [vmem:[%s1 + $0xc] sm:$0xf]
  %v34 = vld [vmem:[%s1 + $0x10] sm:$0xf]
  %v35 = vld [vmem:[%s1 + $0x14] sm:$0xf]
  %v36 = vld [vmem:[%s1 + $0x18] sm:$0xf]
  %v37 = vld [vmem:[%s1 + $0x1c] sm:$0xf]
  %v38 = vld [vmem:[%s1 + $0x20] sm:$0xf]
  %v39 = vld [vmem:[%s1 + $0x24] sm:$0xf]
  %v40 = vld [vmem:[%s1 + $0x28] sm:$0xf]
  %v41 = vld [vmem:[%s1 + $0x2c] sm:$0xf]
  %v42 = vld [vmem:[%s1 + $0x30] sm:$0xf]
  %v43 = vld [vmem:[%s1 + $0x34] sm:$0xf]
  %v44 = vld [vmem:[%s1 + $0x38] sm:$0xf]
  %v45 = vld [vmem:[%s1 + $0x3c] sm:$0xf]
  %v46 = vld [vmem:[%s1 + $0x40] sm:$0xf]
  %v47 = vld [vmem:[%s1 + $0x44] sm:$0xf]
  %v48 = vld [vmem:[%s1 + $0x48] sm:$0xf]
  %v49 = vld [vmem:[%s1 + $0x4c] sm:$0xf]
  %v50 = vld [vmem:[%s1 + $0x50] sm:$0xf]
  %v51 = vld [vmem:[%s1 + $0x54] sm:$0xf]
  %v52 = vld [vmem:[%s1 + $0x58] sm:$0xf]
  %v53 = vld [vmem:[%s1 + $0x5c] sm:$0xf]
  %v54 = vld [vmem:[%s1 + $0x60] sm:$0xf]
  %v55 = vld [vmem:[%s1 + $0x64] sm:$0xf]
  %v56 = vld [vmem:[%s1 + $0x68] sm:$0xf]
  %v57 = vld [vmem:[%s1 + $0x6c] sm:$0xf]
  %v58 = vld [vmem:[%s1 + $0x70] sm:$0xf]
  %v59 = vld [vmem:[%s1 + $0x74] sm:$0xf]
  %v60 = vld [vmem:[%s1 + $0x78] sm:$0xf]
  %v61 = vld [vmem:[%s1 + $0x7c] sm:$0xf]
  %v62 = vld [vmem:[%s1 + $0x80] sm:$0xf]
  %v63 = vld [vmem:[%s1 + $0x84] sm:$0xf]
  %v64 = vld [vmem:[%s1 + $0x88] sm:$0xf]
  %v65 = vld [vmem:[%s1 + $0x8c] sm:$0xf]
  %v66 = vld [vmem:[%s1 + $0x90] sm:$0xf]
  %v67 = vld [vmem:[%s1 + $0x94] sm:$0xf]
  %v68 = vld [vmem:[%s1 + $0x98] sm:$0xf]
  %v69 = vld [vmem:[%s1 + $0x9c] sm:$0xf]
  %v70 = vld [vmem:[%s1 + $0xa0] sm:$0xf]
  %v71 = vld [vmem:[%s1 + $0xa4] sm:$0xf]
  %v72 = vld [vmem:[%s1 + $0xa8] sm:$0xf]
  %v73 = vld [vmem:[%s1 + $0xac] sm:$0xf]
  %v74 = vld [vmem:[%s1 + $0xb0] sm:$0xf]
  %v75 = vld [vmem:[%s1 + $0xb4] sm:$0xf]
  %v76 = vld [vmem:[%s1 + $0xb8] sm:$0xf]
  %v77 = vld [vmem:[%s1 + $0xbc] sm:$0xf]
  %v78 = vld [vmem:[%s2] sm:$0x1]
  %v80 = vperm.slane %v78, 0
  %v98 = vunpack.c.l.b16 %v14
  %v99 = vunpack.c.h.b16 %v14
  %v100 = vunpack.c.l.b16 %v15
  %v101 = vunpack.c.l.b16 %v16
  %v102 = vunpack.c.h.b16 %v16
  %v103 = vunpack.c.l.b16 %v17
  %v104 = vunpack.c.l.b16 %v18
  %v105 = vunpack.c.h.b16 %v18
  %v106 = vunpack.c.l.b16 %v19
  %v107 = vunpack.c.l.b16 %v20
  %v108 = vunpack.c.h.b16 %v20
  %v109 = vunpack.c.l.b16 %v21
  %v110 = vunpack.c.l.b16 %v22
  %v111 = vunpack.c.h.b16 %v22
  %v112 = vunpack.c.l.b16 %v23
  %v113 = vunpack.c.l.b16 %v24
  %v114 = vunpack.c.h.b16 %v24
  %v115 = vunpack.c.l.b16 %v25
  %v116 = vunpack.c.l.b16 %v26
  %v117 = vunpack.c.h.b16 %v26
  %v118 = vunpack.c.l.b16 %v27
  %v119 = vunpack.c.l.b16 %v28
  %v120 = vunpack.c.h.b16 %v28
  %v121 = vunpack.c.l.b16 %v29
  %v122 = vpack.c.b16 %v101, %v98
  %v123 = vpack.c.b16 %v102, %v99
  %v124 = vpack.c.b16 %v103, %v100
  %v125 = vpack.c.b16 %v107, %v104
  %v126 = vpack.c.b16 %v108, %v105
  %v127 = vpack.c.b16 %v109, %v106
  %v128 = vpack.c.b16 %v113, %v110
  %v129 = vpack.c.b16 %v114, %v111
  %v130 = vpack.c.b16 %v115, %v112
  %v131 = vpack.c.b16 %v119, %v116
  %v132 = vpack.c.b16 %v120, %v117
  %v133 = vpack.c.b16 %v121, %v118
  %v194 = vunpack.c.l.b16 %v30
  %v195 = vunpack.c.l.b16 %v31
  %v196 = vunpack.c.l.b16 %v32
  %v197 = vunpack.c.l.b16 %v33
  %v198 = vunpack.c.l.b16 %v34
  %v199 = vunpack.c.l.b16 %v35
  %v200 = vunpack.c.l.b16 %v36
  %v201 = vunpack.c.l.b16 %v37
  %v202 = vunpack.c.l.b16 %v38
  %v203 = vunpack.c.l.b16 %v39
  %v204 = vunpack.c.l.b16 %v40
  %v205 = vunpack.c.l.b16 %v41
  %v206 = vunpack.c.l.b16 %v42
  %v207 = vunpack.c.l.b16 %v43
  %v208 = vunpack.c.l.b16 %v44
  %v209 = vunpack.c.l.b16 %v45
  %v210 = vunpack.c.l.b16 %v46
  %v211 = vunpack.c.l.b16 %v47
  %v212 = vunpack.c.l.b16 %v48
  %v213 = vunpack.c.l.b16 %v49
  %v214 = vunpack.c.l.b16 %v50
  %v215 = vunpack.c.l.b16 %v51
  %v216 = vunpack.c.l.b16 %v52
  %v217 = vunpack.c.l.b16 %v53
  %v218 = vunpack.c.l.b16 %v54
  %v219 = vunpack.c.l.b16 %v55
  %v220 = vunpack.c.l.b16 %v56
  %v221 = vunpack.c.l.b16 %v57
  %v222 = vunpack.c.l.b16 %v58
  %v223 = vunpack.c.l.b16 %v59
  %v224 = vunpack.c.l.b16 %v60
  %v225 = vunpack.c.l.b16 %v61
  %v226 = vunpack.c.l.b16 %v62
  %v227 = vunpack.c.l.b16 %v63
  %v228 = vunpack.c.l.b16 %v64
  %v229 = vunpack.c.l.b16 %v65
  %v230 = vunpack.c.l.b16 %v66
  %v231 = vunpack.c.l.b16 %v67
  %v232 = vunpack.c.l.b16 %v68
  %v233 = vunpack.c.l.b16 %v69
  %v234 = vunpack.c.l.b16 %v70
  %v235 = vunpack.c.l.b16 %v71
  %v236 = vunpack.c.l.b16 %v72
  %v237 = vunpack.c.l.b16 %v73
  %v238 = vunpack.c.l.b16 %v74
  %v239 = vunpack.c.l.b16 %v75
  %v240 = vunpack.c.l.b16 %v76
  %v241 = vunpack.c.l.b16 %v77
  %v242 = vpack.c.b16 %v195, %v194
  %v243 = vpack.c.b16 %v197, %v196
  %v244 = vpack.c.b16 %v199, %v198
  %v245 = vpack.c.b16 %v201, %v200
  %v246 = vpack.c.b16 %v203, %v202
  %v247 = vpack.c.b16 %v205, %v204
  %v248 = vpack.c.b16 %v207, %v206
  %v249 = vpack.c.b16 %v209, %v208
  %v250 = vpack.c.b16 %v211, %v210
  %v251 = vpack.c.b16 %v213, %v212
  %v252 = vpack.c.b16 %v215, %v214
  %v253 = vpack.c.b16 %v217, %v216
  %v254 = vpack.c.b16 %v219, %v218
  %v255 = vpack.c.b16 %v221, %v220
  %v256 = vpack.c.b16 %v223, %v222
  %v257 = vpack.c.b16 %v225, %v224
  %v258 = vpack.c.b16 %v227, %v226
  %v259 = vpack.c.b16 %v229, %v228
  %v260 = vpack.c.b16 %v231, %v230
  %v261 = vpack.c.b16 %v233, %v232
  %v262 = vpack.c.b16 %v235, %v234
  %v263 = vpack.c.b16 %v237, %v236
  %v264 = vpack.c.b16 %v239, %v238
  %v265 = vpack.c.b16 %v241, %v240
  %290 = vmatpush.bf16.msra.mxu0 %v249
  %291 = vmatpush.bf16.msra.mxu0 %v248
  %292 = vmatpush.bf16.msra.mxu0 %v247
  %293 = vmatpush.bf16.msra.mxu0 %v246
  %294 = vmatpush.bf16.msra.mxu0 %v245
  %295 = vmatpush.bf16.msra.mxu0 %v244
  %296 = vmatpush.bf16.msra.mxu0 %v243
  %297 = vmatpush.bf16.msra.mxu0 %v242
  %298 = vmatmul.bf16.gmra.mxu0 %v122
  %v299 = vpop.f32.mrf.mxu0
  %v300 = vadd.f32 %v80, %v299
  %v301 = vpop.f32.mrf.mxu0
  %v302 = vadd.f32 %v80, %v301
  %303 = vmatmul.bf16.gmra.mxu0 %v125
  %v304 = vpop.f32.mrf.mxu0
  %v305 = vadd.f32 %v80, %v304
  %v306 = vpop.f32.mrf.mxu0
  %v307 = vadd.f32 %v80, %v306
  %308 = vmatmul.bf16.gmra.mxu0 %v128
  %v309 = vpop.f32.mrf.mxu0
  %v310 = vadd.f32 %v80, %v309
  %v311 = vpop.f32.mrf.mxu0
  %v312 = vadd.f32 %v80, %v311
  %313 = vmatmul.bf16.gmra.mxu0 %v131
  %v314 = vpop.f32.mrf.mxu0
  %v315 = vadd.f32 %v80, %v314
  %v316 = vpop.f32.mrf.mxu0
  %v317 = vadd.f32 %v80, %v316
  %318 = vdwg.mxu0
  %319 = vmatpush.bf16.msra.mxu0 %v257
  %320 = vmatpush.bf16.msra.mxu0 %v256
  %321 = vmatpush.bf16.msra.mxu0 %v255
  %322 = vmatpush.bf16.msra.mxu0 %v254
  %323 = vmatpush.bf16.msra.mxu0 %v253
  %324 = vmatpush.bf16.msra.mxu0 %v252
  %325 = vmatpush.bf16.msra.mxu0 %v251
  %326 = vmatpush.bf16.msra.mxu0 %v250
  %327 = vmatmul.bf16.gmra.mxu0 %v123
  %v328 = vpop.f32.mrf.mxu0
  %v329 = vadd.f32 %v300, %v328
  %v330 = vpop.f32.mrf.mxu0
  %v331 = vadd.f32 %v302, %v330
  %332 = vmatmul.bf16.gmra.mxu0 %v126
  %v333 = vpop.f32.mrf.mxu0
  %v334 = vadd.f32 %v305, %v333
  %v335 = vpop.f32.mrf.mxu0
  %v336 = vadd.f32 %v307, %v335
  %337 = vmatmul.bf16.gmra.mxu0 %v129
  %v338 = vpop.f32.mrf.mxu0
  %v339 = vadd.f32 %v310, %v338
  %v340 = vpop.f32.mrf.mxu0
  %v341 = vadd.f32 %v312, %v340
  %342 = vmatmul.bf16.gmra.mxu0 %v132
  %v343 = vpop.f32.mrf.mxu0
  %v344 = vadd.f32 %v315, %v343
  %v345 = vpop.f32.mrf.mxu0
  %v346 = vadd.f32 %v317, %v345
  %347 = vdwg.mxu0
  %348 = vmatpush.bf16.msra.mxu0 %v265
  %349 = vmatpush.bf16.msra.mxu0 %v264
  %350 = vmatpush.bf16.msra.mxu0 %v263
  %351 = vmatpush.bf16.msra.mxu0 %v262
  %352 = vmatpush.bf16.msra.mxu0 %v261
  %353 = vmatpush.bf16.msra.mxu0 %v260
  %354 = vmatpush.bf16.msra.mxu0 %v259
  %355 = vmatpush.bf16.msra.mxu0 %v258
  %356 = vmatmul.bf16.gmra.mxu0 %v124
  %v357 = vpop.f32.mrf.mxu0
  %v358 = vadd.f32 %v329, %v357
  %v359 = vpop.f32.mrf.mxu0
  %v360 = vadd.f32 %v331, %v359
  %361 = vmatmul.bf16.gmra.mxu0 %v127
  %v362 = vpop.f32.mrf.mxu0
  %v363 = vadd.f32 %v334, %v362
  %v364 = vpop.f32.mrf.mxu0
  %v365 = vadd.f32 %v336, %v364
  %366 = vmatmul.bf16.gmra.mxu0 %v130
  %v367 = vpop.f32.mrf.mxu0
  %v368 = vadd.f32 %v339, %v367
  %v369 = vpop.f32.mrf.mxu0
  %v370 = vadd.f32 %v341, %v369
  %371 = vmatmul.bf16.gmra.mxu0 %v133
  %v372 = vpop.f32.mrf.mxu0
  %v373 = vadd.f32 %v344, %v372
  %v374 = vpop.f32.mrf.mxu0
  %v375 = vadd.f32 %v346, %v374
  %376 = vdwg.mxu0
  %377 = vst [vmem:[%s3] sm:$0xff] %v358
  %378 = vst [vmem:[%s3 + $0x8] sm:$0xff] %v360
  %379 = vst [vmem:[%s3 + $0x10] sm:$0xff] %v363
  %380 = vst [vmem:[%s3 + $0x18] sm:$0xff] %v365
  %381 = vst [vmem:[%s3 + $0x20] sm:$0xff] %v368
  %382 = vst [vmem:[%s3 + $0x28] sm:$0xff] %v370
  %383 = vst [vmem:[%s3 + $0x30] sm:$0xff] %v373
  %384 = vst [vmem:[%s3 + $0x38] sm:$0xff] %v375
  // Predicated region
  $region14: #{forward.39} parent=0 // pred_check
    _
  $region15: #{forward.39} parent=0 // pred_check_branch
    %386 = sbr.rel (0) target = $region17
  $region16: #{forward.39} parent=0 // pred_region
    _
  $region17: #{forward.39} parent=0 // pred_fallthru
    _
  // Predicated region
  $region18: #{forward.39} parent=0 // pred_check
    _
  $region19: #{forward.39} parent=0 // pred_check_branch
    %388 = sbr.rel (0) target = $region21
  $region20: #{forward.39} parent=0 // pred_region
    _
  $region21: #{forward.39} parent=0 // pred_fallthru
    _

// kernel: neg.34
$region0: #{neg.34}
  #allocation0 [shape = 's32[1]{0}', space=sflag, size = 0x4, scoped, tag = 'scoped memory for neg.34']
  %s0 = inlined_call_operand.vmem [shape: f32[128,32], index: 0, kind: input, shape index: {}]
  %s1 = inlined_call_operand.vmem [shape: bf16[128,32], index: 1, kind: output, shape index: {}]
  %v2 = vld [vmem:[%s0] sm:$0xff]
  %3 = xla_tuple %v2
  %4 = xla_tuple %3
  %v5 = vxor.u32 %v2, 2147483648
  %6 = xla_tuple %v5
  %v7 = vpack.c.bf16 0.0, %v5
  %8 = vst [vmem:[%s1] sm:$0xf] %v7
  %s9 = scalar_lea.vmem %s0, 8
  %v10 = vld [vmem:[%s9] sm:$0xff]
  %11 = xla_tuple %v10
  %12 = xla_tuple %11
  %v13 = vxor.u32 %v10, 2147483648
  %14 = xla_tuple %v13
  %s15 = scalar_lea.vmem %s1, 4
  %v16 = vpack.c.bf16 0.0, %v13
  %17 = vst [vmem:[%s15] sm:$0xf] %v16
  %s18 = scalar_lea.vmem %s0, 16
  %v19 = vld [vmem:[%s18] sm:$0xff]
  %20 = xla_tuple %v19
  %21 = xla_tuple %20
  %v22 = vxor.u32 %v19, 2147483648
  %23 = xla_tuple %v22
  %s24 = scalar_lea.vmem %s1, 8
  %v25 = vpack.c.bf16 0.0, %v22
  %26 = vst [vmem:[%s24] sm:$0xf] %v25
  %s27 = scalar_lea.vmem %s0, 24
  %v28 = vld [vmem:[%s27] sm:$0xff]
  %29 = xla_tuple %v28
  %30 = xla_tuple %29
  %v31 = vxor.u32 %v28, 2147483648
  %32 = xla_tuple %v31
  %s33 = scalar_lea.vmem %s1, 12
  %v34 = vpack.c.bf16 0.0, %v31
  %35 = vst [vmem:[%s33] sm:$0xf] %v34

// kernel: forward.40
$region0: #{forward.40}
  #allocation0 [shape = 'u32[]', space=smem, size = 0x4, offset = 0x4, fixed_abs, tag = 'smem constant byte address 0x4 - core index']
  #allocation1 [shape = 'u32[72,128]{1,0:T(1,128)}', space=vmem, size = 0x9000, scoped, tag = 'internal scratch']
  %s0 = inlined_call_operand.vmem [shape: bf16[16,384], index: 0, kind: input, shape index: {}]
  %s1 = inlined_call_operand.vmem [shape: bf16[384,256], index: 1, kind: input, shape index: {}]
  %s2 = inlined_call_operand.vmem [shape: f32[1,256], index: 2, kind: input, shape index: {}]
  %s3 = inlined_call_operand.vmem [shape: f32[16,256], index: 3, kind: output, shape index: {}]
  %s4 = sld [smem:[#allocation0]]
  $region22: #{forward.40} parent=0
    _
  %s6 = ssub.s32 1, %s4
  %s7 = scalar_select 0, %s6, %s4
  // Predicated region
  $region2: #{forward.40} parent=0 // pred_check
    _
  $region3: #{forward.40} parent=0 // pred_check_branch
    %9 = sbr.rel (0) target = $region5
  $region4: #{forward.40} parent=0 // pred_region
    _
  $region5: #{forward.40} parent=0 // pred_fallthru
    _
  // Predicated region
  $region6: #{forward.40} parent=0 // pred_check
    _
  $region7: #{forward.40} parent=0 // pred_check_branch
    %11 = sbr.rel (0) target = $region9
  $region8: #{forward.40} parent=0 // pred_region
    _
  $region9: #{forward.40} parent=0 // pred_fallthru
    _
  // Predicated region
  $region10: #{forward.40} parent=0 // pred_check
    _
  $region11: #{forward.40} parent=0 // pred_check_branch
    %13 = sbr.rel (0) target = $region13
  $region12: #{forward.40} parent=0 // pred_region
    _
  $region13: #{forward.40} parent=0 // pred_fallthru
    _
  %v14 = vld [vmem:[%s0] sm:$0xff]
  %v15 = vld [vmem:[%s0 + $0x8] sm:$0xf]
  %v16 = vld [vmem:[%s0 + $0xc] sm:$0xff]
  %v17 = vld [vmem:[%s0 + $0x14] sm:$0xf]
  %v18 = vld [vmem:[%s1] sm:$0xff]
  %v19 = vld [vmem:[%s1 + $0x8] sm:$0xff]
  %v20 = vld [vmem:[%s1 + $0x10] sm:$0xff]
  %v21 = vld [vmem:[%s1 + $0x18] sm:$0xff]
  %v22 = vld [vmem:[%s1 + $0x20] sm:$0xff]
  %v23 = vld [vmem:[%s1 + $0x28] sm:$0xff]
  %v24 = vld [vmem:[%s1 + $0x30] sm:$0xff]
  %v25 = vld [vmem:[%s1 + $0x38] sm:$0xff]
  %v26 = vld [vmem:[%s1 + $0x40] sm:$0xff]
  %v27 = vld [vmem:[%s1 + $0x48] sm:$0xff]
  %v28 = vld [vmem:[%s1 + $0x50] sm:$0xff]
  %v29 = vld [vmem:[%s1 + $0x58] sm:$0xff]
  %v30 = vld [vmem:[%s1 + $0x60] sm:$0xff]
  %v31 = vld [vmem:[%s1 + $0x68] sm:$0xff]
  %v32 = vld [vmem:[%s1 + $0x70] sm:$0xff]
  %v33 = vld [vmem:[%s1 + $0x78] sm:$0xff]
  %v34 = vld [vmem:[%s1 + $0x80] sm:$0xff]
  %v35 = vld [vmem:[%s1 + $0x88] sm:$0xff]
  %v36 = vld [vmem:[%s1 + $0x90] sm:$0xff]
  %v37 = vld [vmem:[%s1 + $0x98] sm:$0xff]
  %v38 = vld [vmem:[%s1 + $0xa0] sm:$0xff]
  %v39 = vld [vmem:[%s1 + $0xa8] sm:$0xff]
  %v40 = vld [vmem:[%s1 + $0xb0] sm:$0xff]
  %v41 = vld [vmem:[%s1 + $0xb8] sm:$0xff]
  %v42 = vld [vmem:[%s1 + $0xc0] sm:$0xff]
  %v43 = vld [vmem:[%s1 + $0xc8] sm:$0xff]
  %v44 = vld [vmem:[%s1 + $0xd0] sm:$0xff]
  %v45 = vld [vmem:[%s1 + $0xd8] sm:$0xff]
  %v46 = vld [vmem:[%s1 + $0xe0] sm:$0xff]
  %v47 = vld [vmem:[%s1 + $0xe8] sm:$0xff]
  %v48 = vld [vmem:[%s1 + $0xf0] sm:$0xff]
  %v49 = vld [vmem:[%s1 + $0xf8] sm:$0xff]
  %v50 = vld [vmem:[%s1 + $0x100] sm:$0xff]
  %v51 = vld [vmem:[%s1 + $0x108] sm:$0xff]
  %v52 = vld [vmem:[%s1 + $0x110] sm:$0xff]
  %v53 = vld [vmem:[%s1 + $0x118] sm:$0xff]
  %v54 = vld [vmem:[%s1 + $0x120] sm:$0xff]
  %v55 = vld [vmem:[%s1 + $0x128] sm:$0xff]
  %v56 = vld [vmem:[%s1 + $0x130] sm:$0xff]
  %v57 = vld [vmem:[%s1 + $0x138] sm:$0xff]
  %v58 = vld [vmem:[%s1 + $0x140] sm:$0xff]
  %v59 = vld [vmem:[%s1 + $0x148] sm:$0xff]
  %v60 = vld [vmem:[%s1 + $0x150] sm:$0xff]
  %v61 = vld [vmem:[%s1 + $0x158] sm:$0xff]
  %v62 = vld [vmem:[%s1 + $0x160] sm:$0xff]
  %v63 = vld [vmem:[%s1 + $0x168] sm:$0xff]
  %v64 = vld [vmem:[%s1 + $0x170] sm:$0xff]
  %v65 = vld [vmem:[%s1 + $0x178] sm:$0xff]
  %v66 = vld [vmem:[%s2] sm:$0x3]
  %v68 = vperm.slane %v66, 0
  %v69 = vperm.slane %v66, 1
  %v76 = vunpack.c.l.b16 %v14
  %v77 = vunpack.c.h.b16 %v14
  %v78 = vunpack.c.l.b16 %v15
  %v79 = vunpack.c.l.b16 %v16
  %v80 = vunpack.c.h.b16 %v16
  %v81 = vunpack.c.l.b16 %v17
  %v82 = vpack.c.b16 %v79, %v76
  %v83 = vpack.c.b16 %v80, %v77
  %v84 = vpack.c.b16 %v81, %v78
  %v136 = vunpack.c.l.b16 %v18
  %v137 = vunpack.c.h.b16 %v18
  %v138 = vunpack.c.l.b16 %v19
  %v139 = vunpack.c.h.b16 %v19
  %v140 = vunpack.c.l.b16 %v20
  %v141 = vunpack.c.h.b16 %v20
  %v142 = vunpack.c.l.b16 %v21
  %v143 = vunpack.c.h.b16 %v21
  %v144 = vunpack.c.l.b16 %v22
  %v145 = vunpack.c.h.b16 %v22
  %v146 = vunpack.c.l.b16 %v23
  %v147 = vunpack.c.h.b16 %v23
  %v148 = vunpack.c.l.b16 %v24
  %v149 = vunpack.c.h.b16 %v24
  %v150 = vunpack.c.l.b16 %v25
  %v151 = vunpack.c.h.b16 %v25
  %v152 = vunpack.c.l.b16 %v26
  %v153 = vunpack.c.h.b16 %v26
  %v154 = vunpack.c.l.b16 %v27
  %v155 = vunpack.c.h.b16 %v27
  %v156 = vunpack.c.l.b16 %v28
  %v157 = vunpack.c.h.b16 %v28
  %v158 = vunpack.c.l.b16 %v29
  %v159 = vunpack.c.h.b16 %v29
  %v160 = vunpack.c.l.b16 %v30
  %v161 = vunpack.c.h.b16 %v30
  %v162 = vunpack.c.l.b16 %v31
  %v163 = vunpack.c.h.b16 %v31
  %v164 = vunpack.c.l.b16 %v32
  %v165 = vunpack.c.h.b16 %v32
  %v166 = vunpack.c.l.b16 %v33
  %v167 = vunpack.c.h.b16 %v33
  %v168 = vunpack.c.l.b16 %v34
  %v169 = vunpack.c.h.b16 %v34
  %v170 = vunpack.c.l.b16 %v35
  %v171 = vunpack.c.h.b16 %v35
  %v172 = vunpack.c.l.b16 %v36
  %v173 = vunpack.c.h.b16 %v36
  %v174 = vunpack.c.l.b16 %v37
  %v175 = vunpack.c.h.b16 %v37
  %v176 = vunpack.c.l.b16 %v38
  %v177 = vunpack.c.h.b16 %v38
  %v178 = vunpack.c.l.b16 %v39
  %v179 = vunpack.c.h.b16 %v39
  %v180 = vunpack.c.l.b16 %v40
  %v181 = vunpack.c.h.b16 %v40
  %v182 = vunpack.c.l.b16 %v41
  %v183 = vunpack.c.h.b16 %v41
  %v184 = vunpack.c.l.b16 %v42
  %v185 = vunpack.c.h.b16 %v42
  %v186 = vunpack.c.l.b16 %v43
  %v187 = vunpack.c.h.b16 %v43
  %v188 = vunpack.c.l.b16 %v44
  %v189 = vunpack.c.h.b16 %v44
  %v190 = vunpack.c.l.b16 %v45
  %v191 = vunpack.c.h.b16 %v45
  %v192 = vunpack.c.l.b16 %v46
  %v193 = vunpack.c.h.b16 %v46
  %v194 = vunpack.c.l.b16 %v47
  %v195 = vunpack.c.h.b16 %v47
  %v196 = vunpack.c.l.b16 %v48
  %v197 = vunpack.c.h.b16 %v48
  %v198 = vunpack.c.l.b16 %v49
  %v199 = vunpack.c.h.b16 %v49
  %v200 = vunpack.c.l.b16 %v50
  %v201 = vunpack.c.h.b16 %v50
  %v202 = vunpack.c.l.b16 %v51
  %v203 = vunpack.c.h.b16 %v51
  %v204 = vunpack.c.l.b16 %v52
  %v205 = vunpack.c.h.b16 %v52
  %v206 = vunpack.c.l.b16 %v53
  %v207 = vunpack.c.h.b16 %v53
  %v208 = vunpack.c.l.b16 %v54
  %v209 = vunpack.c.h.b16 %v54
  %v210 = vunpack.c.l.b16 %v55
  %v211 = vunpack.c.h.b16 %v55
  %v212 = vunpack.c.l.b16 %v56
  %v213 = vunpack.c.h.b16 %v56
  %v214 = vunpack.c.l.b16 %v57
  %v215 = vunpack.c.h.b16 %v57
  %v216 = vunpack.c.l.b16 %v58
  %v217 = vunpack.c.h.b16 %v58
  %v218 = vunpack.c.l.b16 %v59
  %v219 = vunpack.c.h.b16 %v59
  %v220 = vunpack.c.l.b16 %v60
  %v221 = vunpack.c.h.b16 %v60
  %v222 = vunpack.c.l.b16 %v61
  %v223 = vunpack.c.h.b16 %v61
  %v224 = vunpack.c.l.b16 %v62
  %v225 = vunpack.c.h.b16 %v62
  %v226 = vunpack.c.l.b16 %v63
  %v227 = vunpack.c.h.b16 %v63
  %v228 = vunpack.c.l.b16 %v64
  %v229 = vunpack.c.h.b16 %v64
  %v230 = vunpack.c.l.b16 %v65
  %v231 = vunpack.c.h.b16 %v65
  %v232 = vpack.c.b16 %v138, %v136
  %v233 = vpack.c.b16 %v139, %v137
  %v234 = vpack.c.b16 %v142, %v140
  %v235 = vpack.c.b16 %v143, %v141
  %v236 = vpack.c.b16 %v146, %v144
  %v237 = vpack.c.b16 %v147, %v145
  %v238 = vpack.c.b16 %v150, %v148
  %v239 = vpack.c.b16 %v151, %v149
  %v240 = vpack.c.b16 %v154, %v152
  %v241 = vpack.c.b16 %v155, %v153
  %v242 = vpack.c.b16 %v158, %v156
  %v243 = vpack.c.b16 %v159, %v157
  %v244 = vpack.c.b16 %v162, %v160
  %v245 = vpack.c.b16 %v163, %v161
  %v246 = vpack.c.b16 %v166, %v164
  %v247 = vpack.c.b16 %v167, %v165
  %v248 = vpack.c.b16 %v170, %v168
  %v249 = vpack.c.b16 %v171, %v169
  %v250 = vpack.c.b16 %v174, %v172
  %v251 = vpack.c.b16 %v175, %v173
  %v252 = vpack.c.b16 %v178, %v176
  %v253 = vpack.c.b16 %v179, %v177
  %v254 = vpack.c.b16 %v182, %v180
  %v255 = vpack.c.b16 %v183, %v181
  %v256 = vpack.c.b16 %v186, %v184
  %v257 = vpack.c.b16 %v187, %v185
  %v258 = vpack.c.b16 %v190, %v188
  %v259 = vpack.c.b16 %v191, %v189
  %v260 = vpack.c.b16 %v194, %v192
  %v261 = vpack.c.b16 %v195, %v193
  %v262 = vpack.c.b16 %v198, %v196
  %v263 = vpack.c.b16 %v199, %v197
  %v264 = vpack.c.b16 %v202, %v200
  %v265 = vpack.c.b16 %v203, %v201
  %v266 = vpack.c.b16 %v206, %v204
  %v267 = vpack.c.b16 %v207, %v205
  %v268 = vpack.c.b16 %v210, %v208
  %v269 = vpack.c.b16 %v211, %v209
  %v270 = vpack.c.b16 %v214, %v212
  %v271 = vpack.c.b16 %v215, %v213
  %v272 = vpack.c.b16 %v218, %v216
  %v273 = vpack.c.b16 %v219, %v217
  %v274 = vpack.c.b16 %v222, %v220
  %v275 = vpack.c.b16 %v223, %v221
  %v276 = vpack.c.b16 %v226, %v224
  %v277 = vpack.c.b16 %v227, %v225
  %v278 = vpack.c.b16 %v230, %v228
  %v279 = vpack.c.b16 %v231, %v229
  %328 = vmatpush.bf16.msra.mxu0 %v246
  %329 = vmatpush.bf16.msra.mxu0 %v244
  %330 = vmatpush.bf16.msra.mxu0 %v242
  %331 = vmatpush.bf16.msra.mxu0 %v240
  %332 = vmatpush.bf16.msra.mxu0 %v238
  %333 = vmatpush.bf16.msra.mxu0 %v236
  %334 = vmatpush.bf16.msra.mxu0 %v234
  %335 = vmatpush.bf16.msra.mxu0 %v232
  %336 = vmatmul.bf16.gmra.mxu0 %v82
  %v337 = vpop.f32.mrf.mxu0
  %v338 = vadd.f32 %v68, %v337
  %v339 = vpop.f32.mrf.mxu0
  %v340 = vadd.f32 %v68, %v339
  %341 = vdwg.mxu0
  %342 = vmatpush.bf16.msra.mxu0 %v262
  %343 = vmatpush.bf16.msra.mxu0 %v260
  %344 = vmatpush.bf16.msra.mxu0 %v258
  %345 = vmatpush.bf16.msra.mxu0 %v256
  %346 = vmatpush.bf16.msra.mxu0 %v254
  %347 = vmatpush.bf16.msra.mxu0 %v252
  %348 = vmatpush.bf16.msra.mxu0 %v250
  %349 = vmatpush.bf16.msra.mxu0 %v248
  %350 = vmatmul.bf16.gmra.mxu0 %v83
  %v351 = vpop.f32.mrf.mxu0
  %v352 = vadd.f32 %v338, %v351
  %v353 = vpop.f32.mrf.mxu0
  %v354 = vadd.f32 %v340, %v353
  %355 = vdwg.mxu0
  %356 = vmatpush.bf16.msra.mxu0 %v278
  %357 = vmatpush.bf16.msra.mxu0 %v276
  %358 = vmatpush.bf16.msra.mxu0 %v274
  %359 = vmatpush.bf16.msra.mxu0 %v272
  %360 = vmatpush.bf16.msra.mxu0 %v270
  %361 = vmatpush.bf16.msra.mxu0 %v268
  %362 = vmatpush.bf16.msra.mxu0 %v266
  %363 = vmatpush.bf16.msra.mxu0 %v264
  %364 = vmatmul.bf16.gmra.mxu0 %v84
  %v365 = vpop.f32.mrf.mxu0
  %v366 = vadd.f32 %v352, %v365
  %v367 = vpop.f32.mrf.mxu0
  %v368 = vadd.f32 %v354, %v367
  %369 = vdwg.mxu0
  %370 = vmatpush.bf16.msra.mxu0 %v247
  %371 = vmatpush.bf16.msra.mxu0 %v245
  %372 = vmatpush.bf16.msra.mxu0 %v243
  %373 = vmatpush.bf16.msra.mxu0 %v241
  %374 = vmatpush.bf16.msra.mxu0 %v239
  %375 = vmatpush.bf16.msra.mxu0 %v237
  %376 = vmatpush.bf16.msra.mxu0 %v235
  %377 = vmatpush.bf16.msra.mxu0 %v233
  %378 = vmatmul.bf16.gmra.mxu0 %v82
  %v379 = vpop.f32.mrf.mxu0
  %v380 = vadd.f32 %v69, %v379
  %v381 = vpop.f32.mrf.mxu0
  %v382 = vadd.f32 %v69, %v381
  %383 = vdwg.mxu0
  %384 = vmatpush.bf16.msra.mxu0 %v263
  %385 = vmatpush.bf16.msra.mxu0 %v261
  %386 = vmatpush.bf16.msra.mxu0 %v259
  %387 = vmatpush.bf16.msra.mxu0 %v257
  %388 = vmatpush.bf16.msra.mxu0 %v255
  %389 = vmatpush.bf16.msra.mxu0 %v253
  %390 = vmatpush.bf16.msra.mxu0 %v251
  %391 = vmatpush.bf16.msra.mxu0 %v249
  %392 = vmatmul.bf16.gmra.mxu0 %v83
  %v393 = vpop.f32.mrf.mxu0
  %v394 = vadd.f32 %v380, %v393
  %v395 = vpop.f32.mrf.mxu0
  %v396 = vadd.f32 %v382, %v395
  %397 = vdwg.mxu0
  %398 = vmatpush.bf16.msra.mxu0 %v279
  %399 = vmatpush.bf16.msra.mxu0 %v277
  %400 = vmatpush.bf16.msra.mxu0 %v275
  %401 = vmatpush.bf16.msra.mxu0 %v273
  %402 = vmatpush.bf16.msra.mxu0 %v271
  %403 = vmatpush.bf16.msra.mxu0 %v269
  %404 = vmatpush.bf16.msra.mxu0 %v267
  %405 = vmatpush.bf16.msra.mxu0 %v265
  %406 = vmatmul.bf16.gmra.mxu0 %v84
  %v407 = vpop.f32.mrf.mxu0
  %v408 = vadd.f32 %v394, %v407
  %v409 = vpop.f32.mrf.mxu0
  %v410 = vadd.f32 %v396, %v409
  %411 = vdwg.mxu0
  %412 = vst [vmem:[%s3] sm:$0xff] %v366
  %413 = vst [vmem:[%s3 + $0x8] sm:$0xff] %v408
  %414 = vst [vmem:[%s3 + $0x10] sm:$0xff] %v368
  %415 = vst [vmem:[%s3 + $0x18] sm:$0xff] %v410
  // Predicated region
  $region14: #{forward.40} parent=0 // pred_check
    _
  $region15: #{forward.40} parent=0 // pred_check_branch
    %417 = sbr.rel (0) target = $region17
  $region16: #{forward.40} parent=0 // pred_region
    _
  $region17: #{forward.40} parent=0 // pred_fallthru
    _
  // Predicated region
  $region18: #{forward.40} parent=0 // pred_check
    _
  $region19: #{forward.40} parent=0 // pred_check_branch
    %419 = sbr.rel (0) target = $region21
  $region20: #{forward.40} parent=0 // pred_region
    _
  $region21: #{forward.40} parent=0 // pred_fallthru
    _

// kernel: forward.41
$region0: #{forward.41}
  #allocation0 [shape = 'u32[]', space=smem, size = 0x4, offset = 0x4, fixed_abs, tag = 'smem constant byte address 0x4 - core index']
  #allocation1 [shape = 'u32[72,128]{1,0:T(1,128)}', space=vmem, size = 0x9000, scoped, tag = 'internal scratch']
  %s0 = inlined_call_operand.vmem [shape: bf16[8,256], index: 0, kind: input, shape index: {}]
  %s1 = inlined_call_operand.vmem [shape: bf16[256,64], index: 1, kind: input, shape index: {}]
  %s2 = inlined_call_operand.vmem [shape: f32[1,64], index: 2, kind: input, shape index: {}]
  %s3 = inlined_call_operand.vmem [shape: f32[8,64], index: 3, kind: output, shape index: {}]
  %s4 = sld [smem:[#allocation0]]
  $region22: #{forward.41} parent=0
    _
  %s6 = ssub.s32 1, %s4
  %s7 = scalar_select 0, %s6, %s4
  // Predicated region
  $region2: #{forward.41} parent=0 // pred_check
    _
  $region3: #{forward.41} parent=0 // pred_check_branch
    %9 = sbr.rel (0) target = $region5
  $region4: #{forward.41} parent=0 // pred_region
    _
  $region5: #{forward.41} parent=0 // pred_fallthru
    _
  // Predicated region
  $region6: #{forward.41} parent=0 // pred_check
    _
  $region7: #{forward.41} parent=0 // pred_check_branch
    %11 = sbr.rel (0) target = $region9
  $region8: #{forward.41} parent=0 // pred_region
    _
  $region9: #{forward.41} parent=0 // pred_fallthru
    _
  // Predicated region
  $region10: #{forward.41} parent=0 // pred_check
    _
  $region11: #{forward.41} parent=0 // pred_check_branch
    %13 = sbr.rel (0) target = $region13
  $region12: #{forward.41} parent=0 // pred_region
    _
  $region13: #{forward.41} parent=0 // pred_fallthru
    _
  %v14 = vld [vmem:[%s0] sm:$0xff]
  %v15 = vld [vmem:[%s1] sm:$0xf]
  %v16 = vld [vmem:[%s1 + $0x4] sm:$0xf]
  %v17 = vld [vmem:[%s1 + $0x8] sm:$0xf]
  %v18 = vld [vmem:[%s1 + $0xc] sm:$0xf]
  %v19 = vld [vmem:[%s1 + $0x10] sm:$0xf]
  %v20 = vld [vmem:[%s1 + $0x14] sm:$0xf]
  %v21 = vld [vmem:[%s1 + $0x18] sm:$0xf]
  %v22 = vld [vmem:[%s1 + $0x1c] sm:$0xf]
  %v23 = vld [vmem:[%s1 + $0x20] sm:$0xf]
  %v24 = vld [vmem:[%s1 + $0x24] sm:$0xf]
  %v25 = vld [vmem:[%s1 + $0x28] sm:$0xf]
  %v26 = vld [vmem:[%s1 + $0x2c] sm:$0xf]
  %v27 = vld [vmem:[%s1 + $0x30] sm:$0xf]
  %v28 = vld [vmem:[%s1 + $0x34] sm:$0xf]
  %v29 = vld [vmem:[%s1 + $0x38] sm:$0xf]
  %v30 = vld [vmem:[%s1 + $0x3c] sm:$0xf]
  %v31 = vld [vmem:[%s1 + $0x40] sm:$0xf]
  %v32 = vld [vmem:[%s1 + $0x44] sm:$0xf]
  %v33 = vld [vmem:[%s1 + $0x48] sm:$0xf]
  %v34 = vld [vmem:[%s1 + $0x4c] sm:$0xf]
  %v35 = vld [vmem:[%s1 + $0x50] sm:$0xf]
  %v36 = vld [vmem:[%s1 + $0x54] sm:$0xf]
  %v37 = vld [vmem:[%s1 + $0x58] sm:$0xf]
  %v38 = vld [vmem:[%s1 + $0x5c] sm:$0xf]
  %v39 = vld [vmem:[%s1 + $0x60] sm:$0xf]
  %v40 = vld [vmem:[%s1 + $0x64] sm:$0xf]
  %v41 = vld [vmem:[%s1 + $0x68] sm:$0xf]
  %v42 = vld [vmem:[%s1 + $0x6c] sm:$0xf]
  %v43 = vld [vmem:[%s1 + $0x70] sm:$0xf]
  %v44 = vld [vmem:[%s1 + $0x74] sm:$0xf]
  %v45 = vld [vmem:[%s1 + $0x78] sm:$0xf]
  %v46 = vld [vmem:[%s1 + $0x7c] sm:$0xf]
  %v47 = vld [vmem:[%s2] sm:$0x1]
  %v49 = vperm.slane %v47, 0
  %v52 = vunpack.c.l.b16 %v14
  %v53 = vunpack.c.h.b16 %v14
  %v54 = vpack.c.b16 %v52, %v52
  %v55 = vpack.c.b16 %v53, %v53
  %v90 = vunpack.c.l.b16 %v15
  %v91 = vunpack.c.l.b16 %v16
  %v92 = vunpack.c.l.b16 %v17
  %v93 = vunpack.c.l.b16 %v18
  %v94 = vunpack.c.l.b16 %v19
  %v95 = vunpack.c.l.b16 %v20
  %v96 = vunpack.c.l.b16 %v21
  %v97 = vunpack.c.l.b16 %v22
  %v98 = vunpack.c.l.b16 %v23
  %v99 = vunpack.c.l.b16 %v24
  %v100 = vunpack.c.l.b16 %v25
  %v101 = vunpack.c.l.b16 %v26
  %v102 = vunpack.c.l.b16 %v27
  %v103 = vunpack.c.l.b16 %v28
  %v104 = vunpack.c.l.b16 %v29
  %v105 = vunpack.c.l.b16 %v30
  %v106 = vunpack.c.l.b16 %v31
  %v107 = vunpack.c.l.b16 %v32
  %v108 = vunpack.c.l.b16 %v33
  %v109 = vunpack.c.l.b16 %v34
  %v110 = vunpack.c.l.b16 %v35
  %v111 = vunpack.c.l.b16 %v36
  %v112 = vunpack.c.l.b16 %v37
  %v113 = vunpack.c.l.b16 %v38
  %v114 = vunpack.c.l.b16 %v39
  %v115 = vunpack.c.l.b16 %v40
  %v116 = vunpack.c.l.b16 %v41
  %v117 = vunpack.c.l.b16 %v42
  %v118 = vunpack.c.l.b16 %v43
  %v119 = vunpack.c.l.b16 %v44
  %v120 = vunpack.c.l.b16 %v45
  %v121 = vunpack.c.l.b16 %v46
  %v122 = vpack.c.b16 %v91, %v90
  %v123 = vpack.c.b16 %v93, %v92
  %v124 = vpack.c.b16 %v95, %v94
  %v125 = vpack.c.b16 %v97, %v96
  %v126 = vpack.c.b16 %v99, %v98
  %v127 = vpack.c.b16 %v101, %v100
  %v128 = vpack.c.b16 %v103, %v102
  %v129 = vpack.c.b16 %v105, %v104
  %v130 = vpack.c.b16 %v107, %v106
  %v131 = vpack.c.b16 %v109, %v108
  %v132 = vpack.c.b16 %v111, %v110
  %v133 = vpack.c.b16 %v113, %v112
  %v134 = vpack.c.b16 %v115, %v114
  %v135 = vpack.c.b16 %v117, %v116
  %v136 = vpack.c.b16 %v119, %v118
  %v137 = vpack.c.b16 %v121, %v120
  %154 = vmatpush.bf16.msra.mxu0 %v129
  %155 = vmatpush.bf16.msra.mxu0 %v128
  %156 = vmatpush.bf16.msra.mxu0 %v127
  %157 = vmatpush.bf16.msra.mxu0 %v126
  %158 = vmatpush.bf16.msra.mxu0 %v125
  %159 = vmatpush.bf16.msra.mxu0 %v124
  %160 = vmatpush.bf16.msra.mxu0 %v123
  %161 = vmatpush.bf16.msra.mxu0 %v122
  %162 = vmatmul.bf16.gmra.mxu0 %v54
  %v163 = vpop.f32.mrf.mxu0
  %v164 = vadd.f32 %v49, %v163
  %v165 = vpop.f32.mrf.mxu0
  %166 = vdwg.mxu0
  %167 = vmatpush.bf16.msra.mxu0 %v137
  %168 = vmatpush.bf16.msra.mxu0 %v136
  %169 = vmatpush.bf16.msra.mxu0 %v135
  %170 = vmatpush.bf16.msra.mxu0 %v134
  %171 = vmatpush.bf16.msra.mxu0 %v133
  %172 = vmatpush.bf16.msra.mxu0 %v132
  %173 = vmatpush.bf16.msra.mxu0 %v131
  %174 = vmatpush.bf16.msra.mxu0 %v130
  %175 = vmatmul.bf16.gmra.mxu0 %v55
  %v176 = vpop.f32.mrf.mxu0
  %v177 = vadd.f32 %v164, %v176
  %v178 = vpop.f32.mrf.mxu0
  %179 = vdwg.mxu0
  %vm180 = vcmask 523264
  %181 = vst.msk [vmem:[%s3] sm:$0xff] %vm180, %v177
  // Predicated region
  $region14: #{forward.41} parent=0 // pred_check
    _
  $region15: #{forward.41} parent=0 // pred_check_branch
    %183 = sbr.rel (0) target = $region17
  $region16: #{forward.41} parent=0 // pred_region
    _
  $region17: #{forward.41} parent=0 // pred_fallthru
    _
  // Predicated region
  $region18: #{forward.41} parent=0 // pred_check
    _
  $region19: #{forward.41} parent=0 // pred_check_branch
    %185 = sbr.rel (0) target = $region21
  $region20: #{forward.41} parent=0 // pred_region
    _
  $region21: #{forward.41} parent=0 // pred_fallthru
    _

// kernel: forward.42
$region0: #{forward.42}
  #allocation0 [shape = 'u32[]', space=smem, size = 0x4, offset = 0x4, fixed_abs, tag = 'smem constant byte address 0x4 - core index']
  #allocation1 [shape = 'u32[72,128]{1,0:T(1,128)}', space=vmem, size = 0x9000, scoped, tag = 'internal scratch']
  %s0 = inlined_call_operand.vmem [shape: bf16[8,64], index: 0, kind: input, shape index: {}]
  %s1 = inlined_call_operand.vmem [shape: bf16[64,192], index: 1, kind: input, shape index: {}]
  %s2 = inlined_call_operand.vmem [shape: f32[1,192], index: 2, kind: input, shape index: {}]
  %s3 = inlined_call_operand.vmem [shape: f32[8,192], index: 3, kind: output, shape index: {}]
  %s4 = sld [smem:[#allocation0]]
  $region22: #{forward.42} parent=0
    _
  %s6 = ssub.s32 1, %s4
  %s7 = scalar_select 0, %s6, %s4
  // Predicated region
  $region2: #{forward.42} parent=0 // pred_check
    _
  $region3: #{forward.42} parent=0 // pred_check_branch
    %9 = sbr.rel (0) target = $region5
  $region4: #{forward.42} parent=0 // pred_region
    _
  $region5: #{forward.42} parent=0 // pred_fallthru
    _
  // Predicated region
  $region6: #{forward.42} parent=0 // pred_check
    _
  $region7: #{forward.42} parent=0 // pred_check_branch
    %11 = sbr.rel (0) target = $region9
  $region8: #{forward.42} parent=0 // pred_region
    _
  $region9: #{forward.42} parent=0 // pred_fallthru
    _
  // Predicated region
  $region10: #{forward.42} parent=0 // pred_check
    _
  $region11: #{forward.42} parent=0 // pred_check_branch
    %13 = sbr.rel (0) target = $region13
  $region12: #{forward.42} parent=0 // pred_region
    _
  $region13: #{forward.42} parent=0 // pred_fallthru
    _
  %v15 = vld [vmem:[%s0] sm:$0xf]
  %v16 = vld [vmem:[%s1] sm:$0xff]
  %v17 = vld [vmem:[%s1 + $0x8] sm:$0xff]
  %v18 = vld [vmem:[%s1 + $0x10] sm:$0xff]
  %v19 = vld [vmem:[%s1 + $0x18] sm:$0xff]
  %v20 = vld [vmem:[%s1 + $0x20] sm:$0xff]
  %v21 = vld [vmem:[%s1 + $0x28] sm:$0xff]
  %v22 = vld [vmem:[%s1 + $0x30] sm:$0xff]
  %v23 = vld [vmem:[%s1 + $0x38] sm:$0xff]
  %v24 = vld [vmem:[%s2] sm:$0x3]
  %v26 = vperm.slane %v24, 0
  %v27 = vperm.slane %v24, 1
  %v38 = vunpack.c.l.b16 %v16
  %v39 = vunpack.c.h.b16 %v16
  %v40 = vunpack.c.l.b16 %v17
  %v41 = vunpack.c.h.b16 %v17
  %v42 = vunpack.c.l.b16 %v18
  %v43 = vunpack.c.h.b16 %v18
  %v44 = vunpack.c.l.b16 %v19
  %v45 = vunpack.c.h.b16 %v19
  %v46 = vunpack.c.l.b16 %v20
  %v47 = vunpack.c.h.b16 %v20
  %v48 = vunpack.c.l.b16 %v21
  %v49 = vunpack.c.h.b16 %v21
  %v50 = vunpack.c.l.b16 %v22
  %v51 = vunpack.c.h.b16 %v22
  %v52 = vunpack.c.l.b16 %v23
  %v53 = vunpack.c.h.b16 %v23
  %v54 = vpack.c.b16 %v40, %v38
  %v55 = vpack.c.b16 %v41, %v39
  %v56 = vpack.c.b16 %v44, %v42
  %v57 = vpack.c.b16 %v45, %v43
  %v58 = vpack.c.b16 %v48, %v46
  %v59 = vpack.c.b16 %v49, %v47
  %v60 = vpack.c.b16 %v52, %v50
  %v61 = vpack.c.b16 %v53, %v51
  %vm70 = vcmask 523264
  %v72 = vsel %vm70, %v15, 0
  %74 = vmatpush.bf16.msra.mxu0 0
  %75 = vmatpush.bf16.msra.mxu0 0
  %76 = vmatpush.bf16.msra.mxu0 0
  %77 = vmatpush.bf16.msra.mxu0 0
  %78 = vmatpush.bf16.msra.mxu0 %v60
  %79 = vmatpush.bf16.msra.mxu0 %v58
  %80 = vmatpush.bf16.msra.mxu0 %v56
  %81 = vmatpush.bf16.msra.mxu0 %v54
  %82 = vmatmul.bf16.gmra.mxu0 %v72
  %v83 = vpop.f32.mrf.mxu0
  %v84 = vadd.f32 %v26, %v83
  %v85 = vpop.f32.mrf.mxu0
  %86 = vdwg.mxu0
  %87 = vmatpush.bf16.msra.mxu0 0
  %88 = vmatpush.bf16.msra.mxu0 0
  %89 = vmatpush.bf16.msra.mxu0 0
  %90 = vmatpush.bf16.msra.mxu0 0
  %91 = vmatpush.bf16.msra.mxu0 %v61
  %92 = vmatpush.bf16.msra.mxu0 %v59
  %93 = vmatpush.bf16.msra.mxu0 %v57
  %94 = vmatpush.bf16.msra.mxu0 %v55
  %95 = vmatmul.bf16.gmra.mxu0 %v72
  %v96 = vpop.f32.mrf.mxu0
  %v97 = vadd.f32 %v27, %v96
  %v98 = vpop.f32.mrf.mxu0
  %99 = vdwg.mxu0
  %100 = vst [vmem:[%s3] sm:$0xff] %v84
  %101 = vst.msk [vmem:[%s3 + $0x8] sm:$0xff] %vm70, %v97
  // Predicated region
  $region14: #{forward.42} parent=0 // pred_check
    _
  $region15: #{forward.42} parent=0 // pred_check_branch
    %103 = sbr.rel (0) target = $region17
  $region16: #{forward.42} parent=0 // pred_region
    _
  $region17: #{forward.42} parent=0 // pred_fallthru
    _
  // Predicated region
  $region18: #{forward.42} parent=0 // pred_check
    _
  $region19: #{forward.42} parent=0 // pred_check_branch
    %105 = sbr.rel (0) target = $region21
  $region20: #{forward.42} parent=0 // pred_region
    _
  $region21: #{forward.42} parent=0 // pred_fallthru
    _

// kernel: forward.43
$region0: #{forward.43}
  #allocation0 [shape = 'u32[]', space=smem, size = 0x4, offset = 0x4, fixed_abs, tag = 'smem constant byte address 0x4 - core index']
  #allocation1 [shape = 'u32[72,128]{1,0:T(1,128)}', space=vmem, size = 0x9000, scoped, tag = 'internal scratch']
  %s0 = inlined_call_operand.vmem [shape: bf16[2,4,4,16], index: 0, kind: input, shape index: {}]
  %s1 = inlined_call_operand.vmem [shape: bf16[2,4,4,16], index: 1, kind: input, shape index: {}]
  %s2 = inlined_call_operand.vmem [shape: bf16[2,4,4,16], index: 2, kind: input, shape index: {}]
  %s3 = inlined_call_operand.vmem [shape: f32[2,4,4,16], index: 3, kind: output, shape index: {}]
  %s4 = sld [smem:[#allocation0]]
  $region45: #{forward.43} parent=0
    _
  %s6 = ssub.s32 1, %s4
  %s7 = scalar_select 0, %s6, %s4
  loop: start=0, step=1, limit=4
  $region2: #{forward.43} parent=0 // loop_pre_header
    _
  $region3: #{forward.43} parent=0 // loop_header
    %s9 = sphi 0, %s13
    %p10 = scmp.ge.s32.totalorder %s9, 4
    %s19 = sphi 0, %s21
    %s22 = sphi 0, %s19
    %s23 = sphi 0, %s22
    %s39 = sphi 0, %s23
    %s45 = sphi 0, %s47
    %s48 = sphi 0, %s45
    %s49 = sphi 0, %s48
    %s65 = sphi 0, %s49
    %s71 = sphi 0, %s73
    %s74 = sphi 0, %s71
    %s75 = sphi 0, %s74
    %s91 = sphi 0, %s75
    %s97 = sphi 0, %s99
    %s100 = sphi 0, %s97
    %s101 = sphi 0, %s100
    %s117 = sphi 0, %s101
  $region4: #{forward.43} parent=0 // loop_header_branch
    %12 = sbr.rel (%p10) target = $region8
  $region5: #{forward.43} parent=0 // loop_body
    %s14 = ssub.s32 %s9, 1
    %s15 = ssub.s32 %s9, 2
    %s16 = sadd.s32 %s9, 1
    %s17 = ssub.s32 %s9, %s16
    %p18 = scmp.eq.s32.totalorder %s17, 0
    %s20 = sadd.s32 %s19, 1
    %s21 = scalar_select %p18, %s19, %s20
    %p24 = pneg %p18
    %p25 = scmp.eq.s32.totalorder %s9, 1
    %p26 = por %p24, %p25
    %p27 = scmp.ne.s32.totalorder %s19, %s22
    %p28 = scmp.eq.s32.totalorder %s9, 0
    %p29 = por %p27, %p28
    %p30 = scmp.ne.s32.totalorder %s19, %s22
    %p31 = scmp.eq.s32.totalorder %s14, 1
    %p32 = por %p30, %p31
    %p33 = scmp.ne.s32.totalorder %s22, %s23
    %p34 = scmp.eq.s32.totalorder %s14, 0
    %p35 = por %p33, %p34
    %p36 = scmp.ne.s32.totalorder %s22, %s23
    %p37 = scmp.eq.s32.totalorder %s15, 1
    %p38 = por %p36, %p37
    %p40 = scmp.ne.s32.totalorder %s23, %s39
    %p41 = scmp.eq.s32.totalorder %s15, 0
    %p42 = por %p40, %p41
    %s43 = ssub.s32 %s9, %s16
    %p44 = scmp.eq.s32.totalorder %s43, 0
    %s46 = sadd.s32 %s45, 1
    %s47 = scalar_select %p44, %s45, %s46
    %p50 = pneg %p44
    %p51 = scmp.eq.s32.totalorder %s9, 1
    %p52 = por %p50, %p51
    %p53 = scmp.ne.s32.totalorder %s45, %s48
    %p54 = scmp.eq.s32.totalorder %s9, 0
    %p55 = por %p53, %p54
    %p56 = scmp.ne.s32.totalorder %s45, %s48
    %p57 = scmp.eq.s32.totalorder %s14, 1
    %p58 = por %p56, %p57
    %p59 = scmp.ne.s32.totalorder %s48, %s49
    %p60 = scmp.eq.s32.totalorder %s14, 0
    %p61 = por %p59, %p60
    %p62 = scmp.ne.s32.totalorder %s48, %s49
    %p63 = scmp.eq.s32.totalorder %s15, 1
    %p64 = por %p62, %p63
    %p66 = scmp.ne.s32.totalorder %s49, %s65
    %p67 = scmp.eq.s32.totalorder %s15, 0
    %p68 = por %p66, %p67
    %s69 = ssub.s32 %s9, %s16
    %p70 = scmp.eq.s32.totalorder %s69, 0
    %s72 = sadd.s32 %s71, 1
    %s73 = scalar_select %p70, %s71, %s72
    %p76 = pneg %p70
    %p77 = scmp.eq.s32.totalorder %s9, 1
    %p78 = por %p76, %p77
    %p79 = scmp.ne.s32.totalorder %s71, %s74
    %p80 = scmp.eq.s32.totalorder %s9, 0
    %p81 = por %p79, %p80
    %p82 = scmp.ne.s32.totalorder %s71, %s74
    %p83 = scmp.eq.s32.totalorder %s14, 1
    %p84 = por %p82, %p83
    %p85 = scmp.ne.s32.totalorder %s74, %s75
    %p86 = scmp.eq.s32.totalorder %s14, 0
    %p87 = por %p85, %p86
    %p88 = scmp.ne.s32.totalorder %s74, %s75
    %p89 = scmp.eq.s32.totalorder %s15, 1
    %p90 = por %p88, %p89
    %p92 = scmp.ne.s32.totalorder %s75, %s91
    %p93 = scmp.eq.s32.totalorder %s15, 0
    %p94 = por %p92, %p93
    %s95 = ssub.s32 %s9, %s16
    %p96 = scmp.eq.s32.totalorder %s95, 0
    %s98 = sadd.s32 %s97, 1
    %s99 = scalar_select %p96, %s97, %s98
    %p102 = pneg %p96
    %p103 = scmp.eq.s32.totalorder %s9, 1
    %p104 = por %p102, %p103
    %p105 = scmp.ne.s32.totalorder %s97, %s100
    %p106 = scmp.eq.s32.totalorder %s9, 0
    %p107 = por %p105, %p106
    %p108 = scmp.ne.s32.totalorder %s97, %s100
    %p109 = scmp.eq.s32.totalorder %s14, 1
    %p110 = por %p108, %p109
    %p111 = scmp.ne.s32.totalorder %s100, %s101
    %p112 = scmp.eq.s32.totalorder %s14, 0
    %p113 = por %p111, %p112
    %p114 = scmp.ne.s32.totalorder %s100, %s101
    %p115 = scmp.eq.s32.totalorder %s15, 1
    %p116 = por %p114, %p115
    %p118 = scmp.ne.s32.totalorder %s101, %s117
    %p119 = scmp.eq.s32.totalorder %s15, 0
    %p120 = por %p118, %p119
    %p121 = scmp.le.s32.totalorder 1, %s9
    %p122 = scmp.lt.s32.totalorder %s9, 3
    %p123 = pnand %p121, %p122
    %p124 = pneg %p123
    // Predicated region
    $region9: #{forward.43} parent=5 // pred_check
      _
    $region10: #{forward.43} parent=5 // pred_check_branch
      %126 = sbr.rel (%p123) target = $region12
    $region11: #{forward.43} parent=5 // pred_region
      %s127 = ssub.s32 %s9, 1
    $region12: #{forward.43} parent=5 // pred_fallthru
      _
    %p128 = scmp.lt.s32.totalorder %s9, 2
    // Predicated region
    $region13: #{forward.43} parent=5 // pred_check
      %p129 = pneg %p128
    $region14: #{forward.43} parent=5 // pred_check_branch
      %131 = sbr.rel (%p129) target = $region16
    $region15: #{forward.43} parent=5 // pred_region
      // Predicated region
      $region17: #{forward.43} parent=15 // pred_check
        %p132 = pneg %p29
      $region18: #{forward.43} parent=15 // pred_check_branch
        %134 = sbr.rel (%p132) target = $region20
      $region19: #{forward.43} parent=15 // pred_region
        %p135 = scmp.lt.s32.totalorder %s9, 1
        %s136 = scalar_select %p135, %s9, 1
        %s137 = smul.addr %s136, 4
        %s138 = smul.addr %s137, 2
        %s139 = scalar_lea.vmem %s0, %s138
      $region20: #{forward.43} parent=15 // pred_fallthru
        _
      // Predicated region
      $region21: #{forward.43} parent=15 // pred_check
        %p140 = pneg %p55
      $region22: #{forward.43} parent=15 // pred_check_branch
        %142 = sbr.rel (%p140) target = $region24
      $region23: #{forward.43} parent=15 // pred_region
        %p143 = scmp.lt.s32.totalorder %s9, 1
        %s144 = scalar_select %p143, %s9, 1
        %s145 = smul.addr %s144, 4
        %s146 = smul.addr %s145, 2
        %s147 = scalar_lea.vmem %s1, %s146
      $region24: #{forward.43} parent=15 // pred_fallthru
        _
      // Predicated region
      $region25: #{forward.43} parent=15 // pred_check
        %p148 = pneg %p81
      $region26: #{forward.43} parent=15 // pred_check_branch
        %150 = sbr.rel (%p148) target = $region28
      $region27: #{forward.43} parent=15 // pred_region
        %p151 = scmp.lt.s32.totalorder %s9, 1
        %s152 = scalar_select %p151, %s9, 1
        %s153 = smul.addr %s152, 4
        %s154 = smul.addr %s153, 2
        %s155 = scalar_lea.vmem %s2, %s154
      $region28: #{forward.43} parent=15 // pred_fallthru
        _
    $region16: #{forward.43} parent=5 // pred_fallthru
      _
    %p156 = scmp.le.s32.totalorder 1, %s9
    %p157 = scmp.lt.s32.totalorder %s9, 3
    %p158 = pnand %p156, %p157
    %p159 = pneg %p158
    // Predicated region
    $region29: #{forward.43} parent=5 // pred_check
      _
    $region30: #{forward.43} parent=5 // pred_check_branch
      %161 = sbr.rel (%p158) target = $region32
    $region31: #{forward.43} parent=5 // pred_region
      %s162 = ssub.s32 %s9, 1
      %p163 = scmp.lt.s32.totalorder %s14, 1
      %s164 = scalar_select %p163, %s14, 1
      %s165 = smul.addr %s164, 4
      %s166 = smul.addr %s165, 2
      %s167 = scalar_lea.vmem %s0, %s166
      %p168 = pneg %p35
      %p169 = pneg %p32
      %p170 = scmp.lt.s32.totalorder %s14, 1
      %s171 = scalar_select %p170, %s14, 1
      %s172 = smul.addr %s171, 4
      %s173 = smul.addr %s172, 2
      %s174 = scalar_lea.vmem %s1, %s173
      %p175 = pneg %p61
      %p176 = pneg %p58
      %p177 = scmp.lt.s32.totalorder %s14, 1
      %s178 = scalar_select %p177, %s14, 1
      %s179 = smul.addr %s178, 4
      %s180 = smul.addr %s179, 2
      %s181 = scalar_lea.vmem %s2, %s180
      %p182 = pneg %p87
      %p183 = pneg %p84
      %p184 = pneg %p113
      %p185 = pneg %p110
      %p186 = scmp.lt.s32.totalorder %s14, 1
      %s187 = scalar_select %p186, %s14, 1
      %s188 = smul.addr %s187, 4
      %s189 = smul.addr %s188, 4
      %s190 = scalar_lea.vmem %s3, %s189
      %p191 = scmp.lt.s32.totalorder %s14, 1
      %s192 = scalar_select %p191, %s14, 1
      %s193 = smul.addr %s192, 4
      %s194 = smul.addr %s193, 2
      %s195 = scalar_lea.vmem %s0, %s194
      %p196 = scmp.lt.s32.totalorder %s14, 1
      %s197 = scalar_select %p196, %s14, 1
      %s198 = smul.addr %s197, 4
      %s199 = smul.addr %s198, 2
      %s200 = scalar_lea.vmem %s1, %s199
      %p201 = scmp.lt.s32.totalorder %s14, 1
      %s202 = scalar_select %p201, %s14, 1
      %s203 = smul.addr %s202, 4
      %s204 = smul.addr %s203, 2
      %s205 = scalar_lea.vmem %s2, %s204
      %p206 = scmp.lt.s32.totalorder %s14, 1
      %s207 = scalar_select %p206, %s14, 1
      %s208 = smul.addr %s207, 4
      %s209 = smul.addr %s208, 4
      %s210 = scalar_lea.vmem %s3, %s209
      %v212 = vld [vmem:[%s195] sm:$0x3]
      %v213 = vld [vmem:[%s195 + $0x2] sm:$0x3]
      %v214 = vld [vmem:[%s195 + $0x4] sm:$0x3]
      %v215 = vld [vmem:[%s195 + $0x6] sm:$0x3]
      %v216 = vld [vmem:[%s200] sm:$0x3]
      %v217 = vld [vmem:[%s200 + $0x2] sm:$0x3]
      %v218 = vld [vmem:[%s200 + $0x4] sm:$0x3]
      %v219 = vld [vmem:[%s200 + $0x6] sm:$0x3]
      %v220 = vld [vmem:[%s205] sm:$0x3]
      %v221 = vld [vmem:[%s205 + $0x2] sm:$0x3]
      %v222 = vld [vmem:[%s205 + $0x4] sm:$0x3]
      %v223 = vld [vmem:[%s205 + $0x6] sm:$0x3]
      %vm224 = vcmask 130048
      %v226 = vsel %vm224, %v212, 0
      %v229 = vsel %vm224, %v216, 0
      %231 = vmatpush.bf16.xpose.msra.mxu0 0
      %232 = vmatpush.bf16.xpose.msra.mxu0 0
      %233 = vmatpush.bf16.xpose.msra.mxu0 0
      %234 = vmatpush.bf16.xpose.msra.mxu0 0
      %235 = vmatpush.bf16.xpose.msra.mxu0 0
      %236 = vmatpush.bf16.xpose.msra.mxu0 0
      %237 = vmatpush.bf16.xpose.msra.mxu0 0
      %238 = vmatpush.bf16.xpose.msra.mxu0 %v229
      %239 = vmatmul.bf16.gmra.mxu0 %v226
      %v240 = vpop.f32.mrf.mxu0
      %v241 = vadd.f32 0.0, %v240
      %v242 = vpop.f32.mrf.mxu0
      %243 = vdwg.mxu0
      %v245 = vsel %vm224, %v213, 0
      %v248 = vsel %vm224, %v217, 0
      %250 = vmatpush.bf16.xpose.msra.mxu0 0
      %251 = vmatpush.bf16.xpose.msra.mxu0 0
      %252 = vmatpush.bf16.xpose.msra.mxu0 0
      %253 = vmatpush.bf16.xpose.msra.mxu0 0
      %254 = vmatpush.bf16.xpose.msra.mxu0 0
      %255 = vmatpush.bf16.xpose.msra.mxu0 0
      %256 = vmatpush.bf16.xpose.msra.mxu0 0
      %257 = vmatpush.bf16.xpose.msra.mxu0 %v248
      %258 = vmatmul.bf16.gmra.mxu0 %v245
      %v259 = vpop.f32.mrf.mxu0
      %v260 = vadd.f32 0.0, %v259
      %v261 = vpop.f32.mrf.mxu0
      %262 = vdwg.mxu0
      %v264 = vsel %vm224, %v214, 0
      %v267 = vsel %vm224, %v218, 0
      %269 = vmatpush.bf16.xpose.msra.mxu0 0
      %270 = vmatpush.bf16.xpose.msra.mxu0 0
      %271 = vmatpush.bf16.xpose.msra.mxu0 0
      %272 = vmatpush.bf16.xpose.msra.mxu0 0
      %273 = vmatpush.bf16.xpose.msra.mxu0 0
      %274 = vmatpush.bf16.xpose.msra.mxu0 0
      %275 = vmatpush.bf16.xpose.msra.mxu0 0
      %276 = vmatpush.bf16.xpose.msra.mxu0 %v267
      %277 = vmatmul.bf16.gmra.mxu0 %v264
      %v278 = vpop.f32.mrf.mxu0
      %v279 = vadd.f32 0.0, %v278
      %v280 = vpop.f32.mrf.mxu0
      %281 = vdwg.mxu0
      %v283 = vsel %vm224, %v215, 0
      %v286 = vsel %vm224, %v219, 0
      %288 = vmatpush.bf16.xpose.msra.mxu0 0
      %289 = vmatpush.bf16.xpose.msra.mxu0 0
      %290 = vmatpush.bf16.xpose.msra.mxu0 0
      %291 = vmatpush.bf16.xpose.msra.mxu0 0
      %292 = vmatpush.bf16.xpose.msra.mxu0 0
      %293 = vmatpush.bf16.xpose.msra.mxu0 0
      %294 = vmatpush.bf16.xpose.msra.mxu0 0
      %295 = vmatpush.bf16.xpose.msra.mxu0 %v286
      %296 = vmatmul.bf16.gmra.mxu0 %v283
      %v297 = vpop.f32.mrf.mxu0
      %v298 = vadd.f32 0.0, %v297
      %v299 = vpop.f32.mrf.mxu0
      %300 = vdwg.mxu0
      %v301 = vmul.f32 %v241, 0.35355338
      %v302 = vmul.f32 %v260, 0.35355338
      %v303 = vmul.f32 %v279, 0.35355338
      %v304 = vmul.f32 %v298, 0.35355338
      %vm305 = vcmask 27648
      %v306 = vsel %vm305, %v301, -inf
      %307 = vmax.xlane.f32.xlu0 %v306
      %v308 = vpop.xlane.xlu0 %307
      %v309 = vsel %vm305, %v302, -inf
      %310 = vmax.xlane.f32.xlu0 %v309
      %v311 = vpop.xlane.xlu0 %310
      %v312 = vsel %vm305, %v303, -inf
      %313 = vmax.xlane.f32.xlu0 %v312
      %v314 = vpop.xlane.xlu0 %313
      %v315 = vsel %vm305, %v304, -inf
      %316 = vmax.xlane.f32.xlu0 %v315
      %v317 = vpop.xlane.xlu0 %316
      %v318 = vsub.f32 %v301, %v308
      %v319 = vsub.f32 %v302, %v311
      %v320 = vsub.f32 %v303, %v314
      %v321 = vsub.f32 %v304, %v317
      %v322 = vmul.f32 %v318, 1.442695
      %v323 = vpow.pop %v322
      %v324 = vmul.f32 %v319, 1.442695
      %v325 = vpow.pop %v324
      %v326 = vmul.f32 %v320, 1.442695
      %v327 = vpow.pop %v326
      %v328 = vmul.f32 %v321, 1.442695
      %v329 = vpow.pop %v328
      %v330 = vsel %vm305, %v323, 0.0
      %331 = vadd.xlane.f32.xlu0 %v330
      %v332 = vpop.xlane.xlu0 %331
      %v333 = vsel %vm305, %v325, 0.0
      %334 = vadd.xlane.f32.xlu0 %v333
      %v335 = vpop.xlane.xlu0 %334
      %v336 = vsel %vm305, %v327, 0.0
      %337 = vadd.xlane.f32.xlu0 %v336
      %v338 = vpop.xlane.xlu0 %337
      %v339 = vsel %vm305, %v329, 0.0
      %340 = vadd.xlane.f32.xlu0 %v339
      %v341 = vpop.xlane.xlu0 %340
      %v342 = vrcp.pop %v332
      %v343 = vrcp.pop %v335
      %v344 = vrcp.pop %v338
      %v345 = vrcp.pop %v341
      %v346 = vmul.f32 %v323, %v342
      %v347 = vmul.f32 %v325, %v343
      %v348 = vmul.f32 %v327, %v344
      %v349 = vmul.f32 %v329, %v345
      %v350 = vpack.c.bf16 %v346, %v346
      %v351 = vpack.c.bf16 %v347, %v347
      %v352 = vpack.c.bf16 %v348, %v348
      %v353 = vpack.c.bf16 %v349, %v349
      %vm354 = vcmask 31744
      %v356 = vsel %vm354, %v350, 0
      %vm358 = vcmask 1041408
      %v360 = vsel %vm358, %v220, 0
      %362 = vmatpush.bf16.msra.mxu0 0
      %363 = vmatpush.bf16.msra.mxu0 0
      %364 = vmatpush.bf16.msra.mxu0 0
      %365 = vmatpush.bf16.msra.mxu0 0
      %366 = vmatpush.bf16.msra.mxu0 0
      %367 = vmatpush.bf16.msra.mxu0 0
      %368 = vmatpush.bf16.msra.mxu0 0
      %369 = vmatpush.bf16.msra.mxu0 %v360
      %370 = vmatmul.bf16.gmra.mxu0 %v356
      %v371 = vpop.f32.mrf.mxu0
      %v372 = vadd.f32 0.0, %v371
      %v373 = vpop.f32.mrf.mxu0
      %374 = vdwg.mxu0
      %v376 = vsel %vm354, %v351, 0
      %v379 = vsel %vm358, %v221, 0
      %381 = vmatpush.bf16.msra.mxu0 0
      %382 = vmatpush.bf16.msra.mxu0 0
      %383 = vmatpush.bf16.msra.mxu0 0
      %384 = vmatpush.bf16.msra.mxu0 0
      %385 = vmatpush.bf16.msra.mxu0 0
      %386 = vmatpush.bf16.msra.mxu0 0
      %387 = vmatpush.bf16.msra.mxu0 0
      %388 = vmatpush.bf16.msra.mxu0 %v379
      %389 = vmatmul.bf16.gmra.mxu0 %v376
      %v390 = vpop.f32.mrf.mxu0
      %v391 = vadd.f32 0.0, %v390
      %v392 = vpop.f32.mrf.mxu0
      %393 = vdwg.mxu0
      %v395 = vsel %vm354, %v352, 0
      %v398 = vsel %vm358, %v222, 0
      %400 = vmatpush.bf16.msra.mxu0 0
      %401 = vmatpush.bf16.msra.mxu0 0
      %402 = vmatpush.bf16.msra.mxu0 0
      %403 = vmatpush.bf16.msra.mxu0 0
      %404 = vmatpush.bf16.msra.mxu0 0
      %405 = vmatpush.bf16.msra.mxu0 0
      %406 = vmatpush.bf16.msra.mxu0 0
      %407 = vmatpush.bf16.msra.mxu0 %v398
      %408 = vmatmul.bf16.gmra.mxu0 %v395
      %v409 = vpop.f32.mrf.mxu0
      %v410 = vadd.f32 0.0, %v409
      %v411 = vpop.f32.mrf.mxu0
      %412 = vdwg.mxu0
      %v414 = vsel %vm354, %v353, 0
      %v417 = vsel %vm358, %v223, 0
      %419 = vmatpush.bf16.msra.mxu0 0
      %420 = vmatpush.bf16.msra.mxu0 0
      %421 = vmatpush.bf16.msra.mxu0 0
      %422 = vmatpush.bf16.msra.mxu0 0
      %423 = vmatpush.bf16.msra.mxu0 0
      %424 = vmatpush.bf16.msra.mxu0 0
      %425 = vmatpush.bf16.msra.mxu0 0
      %426 = vmatpush.bf16.msra.mxu0 %v417
      %427 = vmatmul.bf16.gmra.mxu0 %v414
      %v428 = vpop.f32.mrf.mxu0
      %v429 = vadd.f32 0.0, %v428
      %v430 = vpop.f32.mrf.mxu0
      %431 = vdwg.mxu0
      %vm432 = vcmask 125952
      %433 = vst.msk [vmem:[%s210] sm:$0xf] %vm432, %v372
      %434 = vst.msk [vmem:[%s210 + $0x4] sm:$0xf] %vm432, %v391
      %435 = vst.msk [vmem:[%s210 + $0x8] sm:$0xf] %vm432, %v410
      %436 = vst.msk [vmem:[%s210 + $0xc] sm:$0xf] %vm432, %v429
      %p437 = scmp.lt.s32.totalorder %s14, 1
      %s438 = scalar_select %p437, %s14, 1
      %s439 = smul.addr %s438, 4
      %s440 = smul.addr %s439, 4
      %s441 = scalar_lea.vmem %s3, %s440
      // Predicated region
      $region33: #{forward.43} parent=31 // pred_check
        %p442 = pneg %p110
      $region34: #{forward.43} parent=31 // pred_check_branch
        %444 = sbr.rel (%p442) target = $region36
      $region35: #{forward.43} parent=31 // pred_region
        _
      $region36: #{forward.43} parent=31 // pred_fallthru
        _
    $region32: #{forward.43} parent=5 // pred_fallthru
      _
    %p445 = scmp.le.s32.totalorder 2, %s9
    // Predicated region
    $region37: #{forward.43} parent=5 // pred_check
      %p446 = pneg %p445
    $region38: #{forward.43} parent=5 // pred_check_branch
      %448 = sbr.rel (%p446) target = $region40
    $region39: #{forward.43} parent=5 // pred_region
      %s449 = ssub.s32 %s9, 2
      // Predicated region
      $region41: #{forward.43} parent=39 // pred_check
        %p450 = pneg %p116
      $region42: #{forward.43} parent=39 // pred_check_branch
        %452 = sbr.rel (%p450) target = $region44
      $region43: #{forward.43} parent=39 // pred_region
        %p453 = scmp.lt.s32.totalorder %s15, 1
        %s454 = scalar_select %p453, %s15, 1
        %s455 = smul.addr %s454, 4
        %s456 = smul.addr %s455, 4
        %s457 = scalar_lea.vmem %s3, %s456
      $region44: #{forward.43} parent=39 // pred_fallthru
        _
    $region40: #{forward.43} parent=5 // pred_fallthru
      _
  $region6: #{forward.43} parent=0 // loop_footer
    %s13 = sadd.s32 1, %s9
  $region7: #{forward.43} parent=0 // loop_footer_branch
    %8 = sbr.rel target = $region3
  $region8: #{forward.43} parent=0 // loop_exit
    _

// kernel: forward.44
$region0: #{forward.44}
  #allocation0 [shape = 'u32[]', space=smem, size = 0x4, offset = 0x4, fixed_abs, tag = 'smem constant byte address 0x4 - core index']
  #allocation1 [shape = 'u32[72,128]{1,0:T(1,128)}', space=vmem, size = 0x9000, scoped, tag = 'internal scratch']
  %s0 = inlined_call_operand.vmem [shape: bf16[8,64], index: 0, kind: input, shape index: {}]
  %s1 = inlined_call_operand.vmem [shape: bf16[64,64], index: 1, kind: input, shape index: {}]
  %s2 = inlined_call_operand.vmem [shape: f32[1,64], index: 2, kind: input, shape index: {}]
  %s3 = inlined_call_operand.vmem [shape: f32[8,64], index: 3, kind: output, shape index: {}]
  %s4 = sld [smem:[#allocation0]]
  $region22: #{forward.44} parent=0
    _
  %s6 = ssub.s32 1, %s4
  %s7 = scalar_select 0, %s6, %s4
  // Predicated region
  $region2: #{forward.44} parent=0 // pred_check
    _
  $region3: #{forward.44} parent=0 // pred_check_branch
    %9 = sbr.rel (0) target = $region5
  $region4: #{forward.44} parent=0 // pred_region
    _
  $region5: #{forward.44} parent=0 // pred_fallthru
    _
  // Predicated region
  $region6: #{forward.44} parent=0 // pred_check
    _
  $region7: #{forward.44} parent=0 // pred_check_branch
    %11 = sbr.rel (0) target = $region9
  $region8: #{forward.44} parent=0 // pred_region
    _
  $region9: #{forward.44} parent=0 // pred_fallthru
    _
  // Predicated region
  $region10: #{forward.44} parent=0 // pred_check
    _
  $region11: #{forward.44} parent=0 // pred_check_branch
    %13 = sbr.rel (0) target = $region13
  $region12: #{forward.44} parent=0 // pred_region
    _
  $region13: #{forward.44} parent=0 // pred_fallthru
    _
  %v15 = vld [vmem:[%s0] sm:$0xf]
  %v16 = vld [vmem:[%s1] sm:$0xf]
  %v17 = vld [vmem:[%s1 + $0x4] sm:$0xf]
  %v18 = vld [vmem:[%s1 + $0x8] sm:$0xf]
  %v19 = vld [vmem:[%s1 + $0xc] sm:$0xf]
  %v20 = vld [vmem:[%s1 + $0x10] sm:$0xf]
  %v21 = vld [vmem:[%s1 + $0x14] sm:$0xf]
  %v22 = vld [vmem:[%s1 + $0x18] sm:$0xf]
  %v23 = vld [vmem:[%s1 + $0x1c] sm:$0xf]
  %v24 = vld [vmem:[%s2] sm:$0x1]
  %v26 = vperm.slane %v24, 0
  %v36 = vunpack.c.l.b16 %v16
  %v37 = vunpack.c.l.b16 %v17
  %v38 = vunpack.c.l.b16 %v18
  %v39 = vunpack.c.l.b16 %v19
  %v40 = vunpack.c.l.b16 %v20
  %v41 = vunpack.c.l.b16 %v21
  %v42 = vunpack.c.l.b16 %v22
  %v43 = vunpack.c.l.b16 %v23
  %v44 = vpack.c.b16 %v37, %v36
  %v45 = vpack.c.b16 %v39, %v38
  %v46 = vpack.c.b16 %v41, %v40
  %v47 = vpack.c.b16 %v43, %v42
  %vm52 = vcmask 523264
  %v54 = vsel %vm52, %v15, 0
  %56 = vmatpush.bf16.msra.mxu0 0
  %57 = vmatpush.bf16.msra.mxu0 0
  %58 = vmatpush.bf16.msra.mxu0 0
  %59 = vmatpush.bf16.msra.mxu0 0
  %60 = vmatpush.bf16.msra.mxu0 %v47
  %61 = vmatpush.bf16.msra.mxu0 %v46
  %62 = vmatpush.bf16.msra.mxu0 %v45
  %63 = vmatpush.bf16.msra.mxu0 %v44
  %64 = vmatmul.bf16.gmra.mxu0 %v54
  %v65 = vpop.f32.mrf.mxu0
  %v66 = vadd.f32 %v26, %v65
  %v67 = vpop.f32.mrf.mxu0
  %68 = vdwg.mxu0
  %69 = vst.msk [vmem:[%s3] sm:$0xff] %vm52, %v66
  // Predicated region
  $region14: #{forward.44} parent=0 // pred_check
    _
  $region15: #{forward.44} parent=0 // pred_check_branch
    %71 = sbr.rel (0) target = $region17
  $region16: #{forward.44} parent=0 // pred_region
    _
  $region17: #{forward.44} parent=0 // pred_fallthru
    _
  // Predicated region
  $region18: #{forward.44} parent=0 // pred_check
    _
  $region19: #{forward.44} parent=0 // pred_check_branch
    %73 = sbr.rel (0) target = $region21
  $region20: #{forward.44} parent=0 // pred_region
    _
  $region21: #{forward.44} parent=0 // pred_fallthru
    _

// kernel: forward.45
$region0: #{forward.45}
  #allocation0 [shape = 'u32[]', space=smem, size = 0x4, offset = 0x4, fixed_abs, tag = 'smem constant byte address 0x4 - core index']
  #allocation1 [shape = 'u32[72,128]{1,0:T(1,128)}', space=vmem, size = 0x9000, scoped, tag = 'internal scratch']
  %s0 = inlined_call_operand.vmem [shape: bf16[8,64], index: 0, kind: input, shape index: {}]
  %s1 = inlined_call_operand.vmem [shape: bf16[64,256], index: 1, kind: input, shape index: {}]
  %s2 = inlined_call_operand.vmem [shape: f32[1,256], index: 2, kind: input, shape index: {}]
  %s3 = inlined_call_operand.vmem [shape: f32[8,256], index: 3, kind: output, shape index: {}]
  %s4 = sld [smem:[#allocation0]]
  $region22: #{forward.45} parent=0
    _
  %s6 = ssub.s32 1, %s4
  %s7 = scalar_select 0, %s6, %s4
  // Predicated region
  $region2: #{forward.45} parent=0 // pred_check
    _
  $region3: #{forward.45} parent=0 // pred_check_branch
    %9 = sbr.rel (0) target = $region5
  $region4: #{forward.45} parent=0 // pred_region
    _
  $region5: #{forward.45} parent=0 // pred_fallthru
    _
  // Predicated region
  $region6: #{forward.45} parent=0 // pred_check
    _
  $region7: #{forward.45} parent=0 // pred_check_branch
    %11 = sbr.rel (0) target = $region9
  $region8: #{forward.45} parent=0 // pred_region
    _
  $region9: #{forward.45} parent=0 // pred_fallthru
    _
  // Predicated region
  $region10: #{forward.45} parent=0 // pred_check
    _
  $region11: #{forward.45} parent=0 // pred_check_branch
    %13 = sbr.rel (0) target = $region13
  $region12: #{forward.45} parent=0 // pred_region
    _
  $region13: #{forward.45} parent=0 // pred_fallthru
    _
  %v15 = vld [vmem:[%s0] sm:$0xf]
  %v16 = vld [vmem:[%s1] sm:$0xff]
  %v17 = vld [vmem:[%s1 + $0x8] sm:$0xff]
  %v18 = vld [vmem:[%s1 + $0x10] sm:$0xff]
  %v19 = vld [vmem:[%s1 + $0x18] sm:$0xff]
  %v20 = vld [vmem:[%s1 + $0x20] sm:$0xff]
  %v21 = vld [vmem:[%s1 + $0x28] sm:$0xff]
  %v22 = vld [vmem:[%s1 + $0x30] sm:$0xff]
  %v23 = vld [vmem:[%s1 + $0x38] sm:$0xff]
  %v24 = vld [vmem:[%s2] sm:$0x3]
  %v26 = vperm.slane %v24, 0
  %v27 = vperm.slane %v24, 1
  %v38 = vunpack.c.l.b16 %v16
  %v39 = vunpack.c.h.b16 %v16
  %v40 = vunpack.c.l.b16 %v17
  %v41 = vunpack.c.h.b16 %v17
  %v42 = vunpack.c.l.b16 %v18
  %v43 = vunpack.c.h.b16 %v18
  %v44 = vunpack.c.l.b16 %v19
  %v45 = vunpack.c.h.b16 %v19
  %v46 = vunpack.c.l.b16 %v20
  %v47 = vunpack.c.h.b16 %v20
  %v48 = vunpack.c.l.b16 %v21
  %v49 = vunpack.c.h.b16 %v21
  %v50 = vunpack.c.l.b16 %v22
  %v51 = vunpack.c.h.b16 %v22
  %v52 = vunpack.c.l.b16 %v23
  %v53 = vunpack.c.h.b16 %v23
  %v54 = vpack.c.b16 %v40, %v38
  %v55 = vpack.c.b16 %v41, %v39
  %v56 = vpack.c.b16 %v44, %v42
  %v57 = vpack.c.b16 %v45, %v43
  %v58 = vpack.c.b16 %v48, %v46
  %v59 = vpack.c.b16 %v49, %v47
  %v60 = vpack.c.b16 %v52, %v50
  %v61 = vpack.c.b16 %v53, %v51
  %vm70 = vcmask 523264
  %v72 = vsel %vm70, %v15, 0
  %74 = vmatpush.bf16.msra.mxu0 0
  %75 = vmatpush.bf16.msra.mxu0 0
  %76 = vmatpush.bf16.msra.mxu0 0
  %77 = vmatpush.bf16.msra.mxu0 0
  %78 = vmatpush.bf16.msra.mxu0 %v60
  %79 = vmatpush.bf16.msra.mxu0 %v58
  %80 = vmatpush.bf16.msra.mxu0 %v56
  %81 = vmatpush.bf16.msra.mxu0 %v54
  %82 = vmatmul.bf16.gmra.mxu0 %v72
  %v83 = vpop.f32.mrf.mxu0
  %v84 = vadd.f32 %v26, %v83
  %v85 = vpop.f32.mrf.mxu0
  %86 = vdwg.mxu0
  %87 = vmatpush.bf16.msra.mxu0 0
  %88 = vmatpush.bf16.msra.mxu0 0
  %89 = vmatpush.bf16.msra.mxu0 0
  %90 = vmatpush.bf16.msra.mxu0 0
  %91 = vmatpush.bf16.msra.mxu0 %v61
  %92 = vmatpush.bf16.msra.mxu0 %v59
  %93 = vmatpush.bf16.msra.mxu0 %v57
  %94 = vmatpush.bf16.msra.mxu0 %v55
  %95 = vmatmul.bf16.gmra.mxu0 %v72
  %v96 = vpop.f32.mrf.mxu0
  %v97 = vadd.f32 %v27, %v96
  %v98 = vpop.f32.mrf.mxu0
  %99 = vdwg.mxu0
  %v100 = vmax.f32 %v84, 0.0
  %v101 = vmax.f32 %v97, 0.0
  %102 = vst [vmem:[%s3] sm:$0xff] %v100
  %103 = vst [vmem:[%s3 + $0x8] sm:$0xff] %v101
  // Predicated region
  $region14: #{forward.45} parent=0 // pred_check
    _
  $region15: #{forward.45} parent=0 // pred_check_branch
    %105 = sbr.rel (0) target = $region17
  $region16: #{forward.45} parent=0 // pred_region
    _
  $region17: #{forward.45} parent=0 // pred_fallthru
    _
  // Predicated region
  $region18: #{forward.45} parent=0 // pred_check
    _
  $region19: #{forward.45} parent=0 // pred_check_branch
    %107 = sbr.rel (0) target = $region21
  $region20: #{forward.45} parent=0 // pred_region
    _
  $region21: #{forward.45} parent=0 // pred_fallthru
    _

// kernel: neg.43
$region0: #{neg.43}
  #allocation0 [shape = 's32[1]{0}', space=sflag, size = 0x4, scoped, tag = 'scoped memory for neg.43']
  %s0 = inlined_call_operand.vmem [shape: f32[100,32], index: 0, kind: input, shape index: {}]
  %s1 = inlined_call_operand.vmem [shape: bf16[100,32], index: 1, kind: output, shape index: {}]
  %v2 = vld [vmem:[%s0] sm:$0xff]
  %3 = xla_tuple %v2
  %4 = xla_tuple %3
  %v5 = vxor.u32 %v2, 2147483648
  %6 = xla_tuple %v5
  %v7 = vpack.c.bf16 0.0, %v5
  %8 = vst [vmem:[%s1] sm:$0xf] %v7
  %s9 = scalar_lea.vmem %s0, 8
  %v10 = vld [vmem:[%s9] sm:$0xff]
  %11 = xla_tuple %v10
  %12 = xla_tuple %11
  %v13 = vxor.u32 %v10, 2147483648
  %14 = xla_tuple %v13
  %s15 = scalar_lea.vmem %s1, 4
  %v16 = vpack.c.bf16 0.0, %v13
  %17 = vst [vmem:[%s15] sm:$0xf] %v16
  %s18 = scalar_lea.vmem %s0, 16
  %v19 = vld [vmem:[%s18] sm:$0xff]
  %20 = xla_tuple %v19
  %21 = xla_tuple %20
  %v22 = vxor.u32 %v19, 2147483648
  %23 = xla_tuple %v22
  %s24 = scalar_lea.vmem %s1, 8
  %v25 = vpack.c.bf16 0.0, %v22
  %26 = vst [vmem:[%s24] sm:$0xf] %v25
  %s27 = scalar_lea.vmem %s0, 24
  %v28 = vld [vmem:[%s27] sm:$0xff]
  %29 = xla_tuple %v28
  %30 = xla_tuple %29
  %v31 = vxor.u32 %v28, 2147483648
  %32 = xla_tuple %v31
  %s33 = scalar_lea.vmem %s1, 12
  %v34 = vpack.c.bf16 0.0, %v31
  %35 = vst [vmem:[%s33] sm:$0xf] %v34

// kernel: forward.66
$region0: #{forward.66}
  #allocation0 [shape = 'u32[]', space=smem, size = 0x4, offset = 0x4, fixed_abs, tag = 'smem constant byte address 0x4 - core index']
  #allocation1 [shape = 'u32[72,128]{1,0:T(1,128)}', space=vmem, size = 0x9000, scoped, tag = 'internal scratch']
  %s0 = inlined_call_operand.vmem [shape: bf16[8,64], index: 0, kind: input, shape index: {}]
  %s1 = inlined_call_operand.vmem [shape: bf16[64,128], index: 1, kind: input, shape index: {}]
  %s2 = inlined_call_operand.vmem [shape: f32[1,128], index: 2, kind: input, shape index: {}]
  %s3 = inlined_call_operand.vmem [shape: f32[8,128], index: 3, kind: output, shape index: {}]
  %s4 = sld [smem:[#allocation0]]
  $region22: #{forward.66} parent=0
    _
  %s6 = ssub.s32 1, %s4
  %s7 = scalar_select 0, %s6, %s4
  // Predicated region
  $region2: #{forward.66} parent=0 // pred_check
    _
  $region3: #{forward.66} parent=0 // pred_check_branch
    %9 = sbr.rel (0) target = $region5
  $region4: #{forward.66} parent=0 // pred_region
    _
  $region5: #{forward.66} parent=0 // pred_fallthru
    _
  // Predicated region
  $region6: #{forward.66} parent=0 // pred_check
    _
  $region7: #{forward.66} parent=0 // pred_check_branch
    %11 = sbr.rel (0) target = $region9
  $region8: #{forward.66} parent=0 // pred_region
    _
  $region9: #{forward.66} parent=0 // pred_fallthru
    _
  // Predicated region
  $region10: #{forward.66} parent=0 // pred_check
    _
  $region11: #{forward.66} parent=0 // pred_check_branch
    %13 = sbr.rel (0) target = $region13
  $region12: #{forward.66} parent=0 // pred_region
    _
  $region13: #{forward.66} parent=0 // pred_fallthru
    _
  %v15 = vld [vmem:[%s0] sm:$0xf]
  %v16 = vld [vmem:[%s1] sm:$0xf]
  %v17 = vld [vmem:[%s1 + $0x4] sm:$0xf]
  %v18 = vld [vmem:[%s1 + $0x8] sm:$0xf]
  %v19 = vld [vmem:[%s1 + $0xc] sm:$0xf]
  %v20 = vld [vmem:[%s1 + $0x10] sm:$0xf]
  %v21 = vld [vmem:[%s1 + $0x14] sm:$0xf]
  %v22 = vld [vmem:[%s1 + $0x18] sm:$0xf]
  %v23 = vld [vmem:[%s1 + $0x1c] sm:$0xf]
  %v24 = vld [vmem:[%s2] sm:$0x1]
  %v26 = vperm.slane %v24, 0
  %v36 = vunpack.c.l.b16 %v16
  %v37 = vunpack.c.l.b16 %v17
  %v38 = vunpack.c.l.b16 %v18
  %v39 = vunpack.c.l.b16 %v19
  %v40 = vunpack.c.l.b16 %v20
  %v41 = vunpack.c.l.b16 %v21
  %v42 = vunpack.c.l.b16 %v22
  %v43 = vunpack.c.l.b16 %v23
  %v44 = vpack.c.b16 %v37, %v36
  %v45 = vpack.c.b16 %v39, %v38
  %v46 = vpack.c.b16 %v41, %v40
  %v47 = vpack.c.b16 %v43, %v42
  %vm52 = vcmask 523264
  %v54 = vsel %vm52, %v15, 0
  %56 = vmatpush.bf16.msra.mxu0 0
  %57 = vmatpush.bf16.msra.mxu0 0
  %58 = vmatpush.bf16.msra.mxu0 0
  %59 = vmatpush.bf16.msra.mxu0 0
  %60 = vmatpush.bf16.msra.mxu0 %v47
  %61 = vmatpush.bf16.msra.mxu0 %v46
  %62 = vmatpush.bf16.msra.mxu0 %v45
  %63 = vmatpush.bf16.msra.mxu0 %v44
  %64 = vmatmul.bf16.gmra.mxu0 %v54
  %v65 = vpop.f32.mrf.mxu0
  %v66 = vadd.f32 %v26, %v65
  %v67 = vpop.f32.mrf.mxu0
  %68 = vdwg.mxu0
  %69 = vst [vmem:[%s3] sm:$0xff] %v66
  // Predicated region
  $region14: #{forward.66} parent=0 // pred_check
    _
  $region15: #{forward.66} parent=0 // pred_check_branch
    %71 = sbr.rel (0) target = $region17
  $region16: #{forward.66} parent=0 // pred_region
    _
  $region17: #{forward.66} parent=0 // pred_fallthru
    _
  // Predicated region
  $region18: #{forward.66} parent=0 // pred_check
    _
  $region19: #{forward.66} parent=0 // pred_check_branch
    %73 = sbr.rel (0) target = $region21
  $region20: #{forward.66} parent=0 // pred_region
    _
  $region21: #{forward.66} parent=0 // pred_fallthru
    _

// kernel: forward.52
$region0: #{forward.52}
  #allocation0 [shape = 'u32[]', space=smem, size = 0x4, offset = 0x4, fixed_abs, tag = 'smem constant byte address 0x4 - core index']
  #allocation1 [shape = 'u32[72,128]{1,0:T(1,128)}', space=vmem, size = 0x9000, scoped, tag = 'internal scratch']
  %s0 = inlined_call_operand.vmem [shape: bf16[8,200], index: 0, kind: input, shape index: {}]
  %s1 = inlined_call_operand.vmem [shape: bf16[200,64], index: 1, kind: input, shape index: {}]
  %s2 = inlined_call_operand.vmem [shape: f32[1,64], index: 2, kind: input, shape index: {}]
  %s3 = inlined_call_operand.vmem [shape: f32[8,64], index: 3, kind: output, shape index: {}]
  %s4 = sld [smem:[#allocation0]]
  $region22: #{forward.52} parent=0
    _
  %s6 = ssub.s32 1, %s4
  %s7 = scalar_select 0, %s6, %s4
  // Predicated region
  $region2: #{forward.52} parent=0 // pred_check
    _
  $region3: #{forward.52} parent=0 // pred_check_branch
    %9 = sbr.rel (0) target = $region5
  $region4: #{forward.52} parent=0 // pred_region
    _
  $region5: #{forward.52} parent=0 // pred_fallthru
    _
  // Predicated region
  $region6: #{forward.52} parent=0 // pred_check
    _
  $region7: #{forward.52} parent=0 // pred_check_branch
    %11 = sbr.rel (0) target = $region9
  $region8: #{forward.52} parent=0 // pred_region
    _
  $region9: #{forward.52} parent=0 // pred_fallthru
    _
  // Predicated region
  $region10: #{forward.52} parent=0 // pred_check
    _
  $region11: #{forward.52} parent=0 // pred_check_branch
    %13 = sbr.rel (0) target = $region13
  $region12: #{forward.52} parent=0 // pred_region
    _
  $region13: #{forward.52} parent=0 // pred_fallthru
    _
  %v15 = vld [vmem:[%s0] sm:$0xff]
  %v16 = vld [vmem:[%s1] sm:$0xf]
  %v17 = vld [vmem:[%s1 + $0x4] sm:$0xf]
  %v18 = vld [vmem:[%s1 + $0x8] sm:$0xf]
  %v19 = vld [vmem:[%s1 + $0xc] sm:$0xf]
  %v20 = vld [vmem:[%s1 + $0x10] sm:$0xf]
  %v21 = vld [vmem:[%s1 + $0x14] sm:$0xf]
  %v22 = vld [vmem:[%s1 + $0x18] sm:$0xf]
  %v23 = vld [vmem:[%s1 + $0x1c] sm:$0xf]
  %v24 = vld [vmem:[%s1 + $0x20] sm:$0xf]
  %v25 = vld [vmem:[%s1 + $0x24] sm:$0xf]
  %v26 = vld [vmem:[%s1 + $0x28] sm:$0xf]
  %v27 = vld [vmem:[%s1 + $0x2c] sm:$0xf]
  %v28 = vld [vmem:[%s1 + $0x30] sm:$0xf]
  %v29 = vld [vmem:[%s1 + $0x34] sm:$0xf]
  %v30 = vld [vmem:[%s1 + $0x38] sm:$0xf]
  %v31 = vld [vmem:[%s1 + $0x3c] sm:$0xf]
  %v32 = vld [vmem:[%s1 + $0x40] sm:$0xf]
  %v33 = vld [vmem:[%s1 + $0x44] sm:$0xf]
  %v34 = vld [vmem:[%s1 + $0x48] sm:$0xf]
  %v35 = vld [vmem:[%s1 + $0x4c] sm:$0xf]
  %v36 = vld [vmem:[%s1 + $0x50] sm:$0xf]
  %v37 = vld [vmem:[%s1 + $0x54] sm:$0xf]
  %v38 = vld [vmem:[%s1 + $0x58] sm:$0xf]
  %v39 = vld [vmem:[%s1 + $0x5c] sm:$0xf]
  %v40 = vld [vmem:[%s1 + $0x60] sm:$0xf]
  %v41 = vld [vmem:[%s2] sm:$0x1]
  %v43 = vperm.slane %v41, 0
  %v46 = vunpack.c.l.b16 %v15
  %v47 = vunpack.c.h.b16 %v15
  %v48 = vpack.c.b16 %v46, %v46
  %v49 = vpack.c.b16 %v47, %v47
  %v76 = vunpack.c.l.b16 %v16
  %v77 = vunpack.c.l.b16 %v17
  %v78 = vunpack.c.l.b16 %v18
  %v79 = vunpack.c.l.b16 %v19
  %v80 = vunpack.c.l.b16 %v20
  %v81 = vunpack.c.l.b16 %v21
  %v82 = vunpack.c.l.b16 %v22
  %v83 = vunpack.c.l.b16 %v23
  %v84 = vunpack.c.l.b16 %v24
  %v85 = vunpack.c.l.b16 %v25
  %v86 = vunpack.c.l.b16 %v26
  %v87 = vunpack.c.l.b16 %v27
  %v88 = vunpack.c.l.b16 %v28
  %v89 = vunpack.c.l.b16 %v29
  %v90 = vunpack.c.l.b16 %v30
  %v91 = vunpack.c.l.b16 %v31
  %v92 = vunpack.c.l.b16 %v32
  %v93 = vunpack.c.l.b16 %v33
  %v94 = vunpack.c.l.b16 %v34
  %v95 = vunpack.c.l.b16 %v35
  %v96 = vunpack.c.l.b16 %v36
  %v97 = vunpack.c.l.b16 %v37
  %v98 = vunpack.c.l.b16 %v38
  %v99 = vunpack.c.l.b16 %v39
  %v100 = vunpack.c.l.b16 %v40
  %v101 = vpack.c.b16 %v77, %v76
  %v102 = vpack.c.b16 %v79, %v78
  %v103 = vpack.c.b16 %v81, %v80
  %v104 = vpack.c.b16 %v83, %v82
  %v105 = vpack.c.b16 %v85, %v84
  %v106 = vpack.c.b16 %v87, %v86
  %v107 = vpack.c.b16 %v89, %v88
  %v108 = vpack.c.b16 %v91, %v90
  %v109 = vpack.c.b16 %v93, %v92
  %v110 = vpack.c.b16 %v95, %v94
  %v111 = vpack.c.b16 %v97, %v96
  %v112 = vpack.c.b16 %v99, %v98
  %v113 = vpack.c.b16 %v100, %v100
  %vm126 = vcmask 588800
  %v128 = vsel %vm126, %v49, 0
  %vm130 = vcmask 1043456
  %v132 = vsel %vm130, %v113, 0
  %134 = vmatpush.bf16.msra.mxu0 %v108
  %135 = vmatpush.bf16.msra.mxu0 %v107
  %136 = vmatpush.bf16.msra.mxu0 %v106
  %137 = vmatpush.bf16.msra.mxu0 %v105
  %138 = vmatpush.bf16.msra.mxu0 %v104
  %139 = vmatpush.bf16.msra.mxu0 %v103
  %140 = vmatpush.bf16.msra.mxu0 %v102
  %141 = vmatpush.bf16.msra.mxu0 %v101
  %142 = vmatmul.bf16.gmra.mxu0 %v48
  %v143 = vpop.f32.mrf.mxu0
  %v144 = vadd.f32 %v43, %v143
  %v145 = vpop.f32.mrf.mxu0
  %146 = vdwg.mxu0
  %147 = vmatpush.bf16.msra.mxu0 0
  %148 = vmatpush.bf16.msra.mxu0 0
  %149 = vmatpush.bf16.msra.mxu0 0
  %150 = vmatpush.bf16.msra.mxu0 %v132
  %151 = vmatpush.bf16.msra.mxu0 %v112
  %152 = vmatpush.bf16.msra.mxu0 %v111
  %153 = vmatpush.bf16.msra.mxu0 %v110
  %154 = vmatpush.bf16.msra.mxu0 %v109
  %155 = vmatmul.bf16.gmra.mxu0 %v128
  %v156 = vpop.f32.mrf.mxu0
  %v157 = vadd.f32 %v144, %v156
  %v158 = vpop.f32.mrf.mxu0
  %159 = vdwg.mxu0
  %vm160 = vcmask 523264
  %161 = vst.msk [vmem:[%s3] sm:$0xff] %vm160, %v157
  // Predicated region
  $region14: #{forward.52} parent=0 // pred_check
    _
  $region15: #{forward.52} parent=0 // pred_check_branch
    %163 = sbr.rel (0) target = $region17
  $region16: #{forward.52} parent=0 // pred_region
    _
  $region17: #{forward.52} parent=0 // pred_fallthru
    _
  // Predicated region
  $region18: #{forward.52} parent=0 // pred_check
    _
  $region19: #{forward.52} parent=0 // pred_check_branch
    %165 = sbr.rel (0) target = $region21
  $region20: #{forward.52} parent=0 // pred_region
    _
  $region21: #{forward.52} parent=0 // pred_fallthru
    _

// kernel: forward.54
$region0: #{forward.54}
  #allocation0 [shape = 'u32[]', space=smem, size = 0x4, offset = 0x4, fixed_abs, tag = 'smem constant byte address 0x4 - core index']
  #allocation1 [shape = 'u32[72,128]{1,0:T(1,128)}', space=vmem, size = 0x9000, scoped, tag = 'internal scratch']
  %s0 = inlined_call_operand.vmem [shape: bf16[2,4,3,16], index: 0, kind: input, shape index: {}]
  %s1 = inlined_call_operand.vmem [shape: bf16[2,4,3,16], index: 1, kind: input, shape index: {}]
  %s2 = inlined_call_operand.vmem [shape: bf16[2,4,3,16], index: 2, kind: input, shape index: {}]
  %s3 = inlined_call_operand.vmem [shape: f32[2,4,3,16], index: 3, kind: output, shape index: {}]
  %s4 = sld [smem:[#allocation0]]
  $region45: #{forward.54} parent=0
    _
  %s6 = ssub.s32 1, %s4
  %s7 = scalar_select 0, %s6, %s4
  loop: start=0, step=1, limit=4
  $region2: #{forward.54} parent=0 // loop_pre_header
    _
  $region3: #{forward.54} parent=0 // loop_header
    %s9 = sphi 0, %s13
    %p10 = scmp.ge.s32.totalorder %s9, 4
    %s19 = sphi 0, %s21
    %s22 = sphi 0, %s19
    %s23 = sphi 0, %s22
    %s39 = sphi 0, %s23
    %s45 = sphi 0, %s47
    %s48 = sphi 0, %s45
    %s49 = sphi 0, %s48
    %s65 = sphi 0, %s49
    %s71 = sphi 0, %s73
    %s74 = sphi 0, %s71
    %s75 = sphi 0, %s74
    %s91 = sphi 0, %s75
    %s97 = sphi 0, %s99
    %s100 = sphi 0, %s97
    %s101 = sphi 0, %s100
    %s117 = sphi 0, %s101
  $region4: #{forward.54} parent=0 // loop_header_branch
    %12 = sbr.rel (%p10) target = $region8
  $region5: #{forward.54} parent=0 // loop_body
    %s14 = ssub.s32 %s9, 1
    %s15 = ssub.s32 %s9, 2
    %s16 = sadd.s32 %s9, 1
    %s17 = ssub.s32 %s9, %s16
    %p18 = scmp.eq.s32.totalorder %s17, 0
    %s20 = sadd.s32 %s19, 1
    %s21 = scalar_select %p18, %s19, %s20
    %p24 = pneg %p18
    %p25 = scmp.eq.s32.totalorder %s9, 1
    %p26 = por %p24, %p25
    %p27 = scmp.ne.s32.totalorder %s19, %s22
    %p28 = scmp.eq.s32.totalorder %s9, 0
    %p29 = por %p27, %p28
    %p30 = scmp.ne.s32.totalorder %s19, %s22
    %p31 = scmp.eq.s32.totalorder %s14, 1
    %p32 = por %p30, %p31
    %p33 = scmp.ne.s32.totalorder %s22, %s23
    %p34 = scmp.eq.s32.totalorder %s14, 0
    %p35 = por %p33, %p34
    %p36 = scmp.ne.s32.totalorder %s22, %s23
    %p37 = scmp.eq.s32.totalorder %s15, 1
    %p38 = por %p36, %p37
    %p40 = scmp.ne.s32.totalorder %s23, %s39
    %p41 = scmp.eq.s32.totalorder %s15, 0
    %p42 = por %p40, %p41
    %s43 = ssub.s32 %s9, %s16
    %p44 = scmp.eq.s32.totalorder %s43, 0
    %s46 = sadd.s32 %s45, 1
    %s47 = scalar_select %p44, %s45, %s46
    %p50 = pneg %p44
    %p51 = scmp.eq.s32.totalorder %s9, 1
    %p52 = por %p50, %p51
    %p53 = scmp.ne.s32.totalorder %s45, %s48
    %p54 = scmp.eq.s32.totalorder %s9, 0
    %p55 = por %p53, %p54
    %p56 = scmp.ne.s32.totalorder %s45, %s48
    %p57 = scmp.eq.s32.totalorder %s14, 1
    %p58 = por %p56, %p57
    %p59 = scmp.ne.s32.totalorder %s48, %s49
    %p60 = scmp.eq.s32.totalorder %s14, 0
    %p61 = por %p59, %p60
    %p62 = scmp.ne.s32.totalorder %s48, %s49
    %p63 = scmp.eq.s32.totalorder %s15, 1
    %p64 = por %p62, %p63
    %p66 = scmp.ne.s32.totalorder %s49, %s65
    %p67 = scmp.eq.s32.totalorder %s15, 0
    %p68 = por %p66, %p67
    %s69 = ssub.s32 %s9, %s16
    %p70 = scmp.eq.s32.totalorder %s69, 0
    %s72 = sadd.s32 %s71, 1
    %s73 = scalar_select %p70, %s71, %s72
    %p76 = pneg %p70
    %p77 = scmp.eq.s32.totalorder %s9, 1
    %p78 = por %p76, %p77
    %p79 = scmp.ne.s32.totalorder %s71, %s74
    %p80 = scmp.eq.s32.totalorder %s9, 0
    %p81 = por %p79, %p80
    %p82 = scmp.ne.s32.totalorder %s71, %s74
    %p83 = scmp.eq.s32.totalorder %s14, 1
    %p84 = por %p82, %p83
    %p85 = scmp.ne.s32.totalorder %s74, %s75
    %p86 = scmp.eq.s32.totalorder %s14, 0
    %p87 = por %p85, %p86
    %p88 = scmp.ne.s32.totalorder %s74, %s75
    %p89 = scmp.eq.s32.totalorder %s15, 1
    %p90 = por %p88, %p89
    %p92 = scmp.ne.s32.totalorder %s75, %s91
    %p93 = scmp.eq.s32.totalorder %s15, 0
    %p94 = por %p92, %p93
    %s95 = ssub.s32 %s9, %s16
    %p96 = scmp.eq.s32.totalorder %s95, 0
    %s98 = sadd.s32 %s97, 1
    %s99 = scalar_select %p96, %s97, %s98
    %p102 = pneg %p96
    %p103 = scmp.eq.s32.totalorder %s9, 1
    %p104 = por %p102, %p103
    %p105 = scmp.ne.s32.totalorder %s97, %s100
    %p106 = scmp.eq.s32.totalorder %s9, 0
    %p107 = por %p105, %p106
    %p108 = scmp.ne.s32.totalorder %s97, %s100
    %p109 = scmp.eq.s32.totalorder %s14, 1
    %p110 = por %p108, %p109
    %p111 = scmp.ne.s32.totalorder %s100, %s101
    %p112 = scmp.eq.s32.totalorder %s14, 0
    %p113 = por %p111, %p112
    %p114 = scmp.ne.s32.totalorder %s100, %s101
    %p115 = scmp.eq.s32.totalorder %s15, 1
    %p116 = por %p114, %p115
    %p118 = scmp.ne.s32.totalorder %s101, %s117
    %p119 = scmp.eq.s32.totalorder %s15, 0
    %p120 = por %p118, %p119
    %p121 = scmp.le.s32.totalorder 1, %s9
    %p122 = scmp.lt.s32.totalorder %s9, 3
    %p123 = pnand %p121, %p122
    %p124 = pneg %p123
    // Predicated region
    $region9: #{forward.54} parent=5 // pred_check
      _
    $region10: #{forward.54} parent=5 // pred_check_branch
      %126 = sbr.rel (%p123) target = $region12
    $region11: #{forward.54} parent=5 // pred_region
      %s127 = ssub.s32 %s9, 1
    $region12: #{forward.54} parent=5 // pred_fallthru
      _
    %p128 = scmp.lt.s32.totalorder %s9, 2
    // Predicated region
    $region13: #{forward.54} parent=5 // pred_check
      %p129 = pneg %p128
    $region14: #{forward.54} parent=5 // pred_check_branch
      %131 = sbr.rel (%p129) target = $region16
    $region15: #{forward.54} parent=5 // pred_region
      // Predicated region
      $region17: #{forward.54} parent=15 // pred_check
        %p132 = pneg %p29
      $region18: #{forward.54} parent=15 // pred_check_branch
        %134 = sbr.rel (%p132) target = $region20
      $region19: #{forward.54} parent=15 // pred_region
        %p135 = scmp.lt.s32.totalorder %s9, 1
        %s136 = scalar_select %p135, %s9, 1
        %s137 = smul.addr %s136, 4
        %s138 = smul.addr %s137, 2
        %s139 = scalar_lea.vmem %s0, %s138
      $region20: #{forward.54} parent=15 // pred_fallthru
        _
      // Predicated region
      $region21: #{forward.54} parent=15 // pred_check
        %p140 = pneg %p55
      $region22: #{forward.54} parent=15 // pred_check_branch
        %142 = sbr.rel (%p140) target = $region24
      $region23: #{forward.54} parent=15 // pred_region
        %p143 = scmp.lt.s32.totalorder %s9, 1
        %s144 = scalar_select %p143, %s9, 1
        %s145 = smul.addr %s144, 4
        %s146 = smul.addr %s145, 2
        %s147 = scalar_lea.vmem %s1, %s146
      $region24: #{forward.54} parent=15 // pred_fallthru
        _
      // Predicated region
      $region25: #{forward.54} parent=15 // pred_check
        %p148 = pneg %p81
      $region26: #{forward.54} parent=15 // pred_check_branch
        %150 = sbr.rel (%p148) target = $region28
      $region27: #{forward.54} parent=15 // pred_region
        %p151 = scmp.lt.s32.totalorder %s9, 1
        %s152 = scalar_select %p151, %s9, 1
        %s153 = smul.addr %s152, 4
        %s154 = smul.addr %s153, 2
        %s155 = scalar_lea.vmem %s2, %s154
      $region28: #{forward.54} parent=15 // pred_fallthru
        _
    $region16: #{forward.54} parent=5 // pred_fallthru
      _
    %p156 = scmp.le.s32.totalorder 1, %s9
    %p157 = scmp.lt.s32.totalorder %s9, 3
    %p158 = pnand %p156, %p157
    %p159 = pneg %p158
    // Predicated region
    $region29: #{forward.54} parent=5 // pred_check
      _
    $region30: #{forward.54} parent=5 // pred_check_branch
      %161 = sbr.rel (%p158) target = $region32
    $region31: #{forward.54} parent=5 // pred_region
      %s162 = ssub.s32 %s9, 1
      %p163 = scmp.lt.s32.totalorder %s14, 1
      %s164 = scalar_select %p163, %s14, 1
      %s165 = smul.addr %s164, 4
      %s166 = smul.addr %s165, 2
      %s167 = scalar_lea.vmem %s0, %s166
      %p168 = pneg %p35
      %p169 = pneg %p32
      %p170 = scmp.lt.s32.totalorder %s14, 1
      %s171 = scalar_select %p170, %s14, 1
      %s172 = smul.addr %s171, 4
      %s173 = smul.addr %s172, 2
      %s174 = scalar_lea.vmem %s1, %s173
      %p175 = pneg %p61
      %p176 = pneg %p58
      %p177 = scmp.lt.s32.totalorder %s14, 1
      %s178 = scalar_select %p177, %s14, 1
      %s179 = smul.addr %s178, 4
      %s180 = smul.addr %s179, 2
      %s181 = scalar_lea.vmem %s2, %s180
      %p182 = pneg %p87
      %p183 = pneg %p84
      %p184 = pneg %p113
      %p185 = pneg %p110
      %p186 = scmp.lt.s32.totalorder %s14, 1
      %s187 = scalar_select %p186, %s14, 1
      %s188 = smul.addr %s187, 4
      %s189 = smul.addr %s188, 4
      %s190 = scalar_lea.vmem %s3, %s189
      %p191 = scmp.lt.s32.totalorder %s14, 1
      %s192 = scalar_select %p191, %s14, 1
      %s193 = smul.addr %s192, 4
      %s194 = smul.addr %s193, 2
      %s195 = scalar_lea.vmem %s0, %s194
      %p196 = scmp.lt.s32.totalorder %s14, 1
      %s197 = scalar_select %p196, %s14, 1
      %s198 = smul.addr %s197, 4
      %s199 = smul.addr %s198, 2
      %s200 = scalar_lea.vmem %s1, %s199
      %p201 = scmp.lt.s32.totalorder %s14, 1
      %s202 = scalar_select %p201, %s14, 1
      %s203 = smul.addr %s202, 4
      %s204 = smul.addr %s203, 2
      %s205 = scalar_lea.vmem %s2, %s204
      %p206 = scmp.lt.s32.totalorder %s14, 1
      %s207 = scalar_select %p206, %s14, 1
      %s208 = smul.addr %s207, 4
      %s209 = smul.addr %s208, 4
      %s210 = scalar_lea.vmem %s3, %s209
      %v212 = vld [vmem:[%s195] sm:$0x3]
      %v213 = vld [vmem:[%s195 + $0x2] sm:$0x3]
      %v214 = vld [vmem:[%s195 + $0x4] sm:$0x3]
      %v215 = vld [vmem:[%s195 + $0x6] sm:$0x3]
      %v216 = vld [vmem:[%s200] sm:$0x3]
      %v217 = vld [vmem:[%s200 + $0x2] sm:$0x3]
      %v218 = vld [vmem:[%s200 + $0x4] sm:$0x3]
      %v219 = vld [vmem:[%s200 + $0x6] sm:$0x3]
      %v220 = vld [vmem:[%s205] sm:$0x3]
      %v221 = vld [vmem:[%s205 + $0x2] sm:$0x3]
      %v222 = vld [vmem:[%s205 + $0x4] sm:$0x3]
      %v223 = vld [vmem:[%s205 + $0x6] sm:$0x3]
      %vm224 = vcmask 130048
      %v226 = vsel %vm224, %v212, 0
      %v229 = vsel %vm224, %v216, 0
      %231 = vmatpush.bf16.xpose.msra.mxu0 0
      %232 = vmatpush.bf16.xpose.msra.mxu0 0
      %233 = vmatpush.bf16.xpose.msra.mxu0 0
      %234 = vmatpush.bf16.xpose.msra.mxu0 0
      %235 = vmatpush.bf16.xpose.msra.mxu0 0
      %236 = vmatpush.bf16.xpose.msra.mxu0 0
      %237 = vmatpush.bf16.xpose.msra.mxu0 0
      %238 = vmatpush.bf16.xpose.msra.mxu0 %v229
      %239 = vmatmul.bf16.gmra.mxu0 %v226
      %v240 = vpop.f32.mrf.mxu0
      %v241 = vadd.f32 0.0, %v240
      %v242 = vpop.f32.mrf.mxu0
      %243 = vdwg.mxu0
      %v245 = vsel %vm224, %v213, 0
      %v248 = vsel %vm224, %v217, 0
      %250 = vmatpush.bf16.xpose.msra.mxu0 0
      %251 = vmatpush.bf16.xpose.msra.mxu0 0
      %252 = vmatpush.bf16.xpose.msra.mxu0 0
      %253 = vmatpush.bf16.xpose.msra.mxu0 0
      %254 = vmatpush.bf16.xpose.msra.mxu0 0
      %255 = vmatpush.bf16.xpose.msra.mxu0 0
      %256 = vmatpush.bf16.xpose.msra.mxu0 0
      %257 = vmatpush.bf16.xpose.msra.mxu0 %v248
      %258 = vmatmul.bf16.gmra.mxu0 %v245
      %v259 = vpop.f32.mrf.mxu0
      %v260 = vadd.f32 0.0, %v259
      %v261 = vpop.f32.mrf.mxu0
      %262 = vdwg.mxu0
      %v264 = vsel %vm224, %v214, 0
      %v267 = vsel %vm224, %v218, 0
      %269 = vmatpush.bf16.xpose.msra.mxu0 0
      %270 = vmatpush.bf16.xpose.msra.mxu0 0
      %271 = vmatpush.bf16.xpose.msra.mxu0 0
      %272 = vmatpush.bf16.xpose.msra.mxu0 0
      %273 = vmatpush.bf16.xpose.msra.mxu0 0
      %274 = vmatpush.bf16.xpose.msra.mxu0 0
      %275 = vmatpush.bf16.xpose.msra.mxu0 0
      %276 = vmatpush.bf16.xpose.msra.mxu0 %v267
      %277 = vmatmul.bf16.gmra.mxu0 %v264
      %v278 = vpop.f32.mrf.mxu0
      %v279 = vadd.f32 0.0, %v278
      %v280 = vpop.f32.mrf.mxu0
      %281 = vdwg.mxu0
      %v283 = vsel %vm224, %v215, 0
      %v286 = vsel %vm224, %v219, 0
      %288 = vmatpush.bf16.xpose.msra.mxu0 0
      %289 = vmatpush.bf16.xpose.msra.mxu0 0
      %290 = vmatpush.bf16.xpose.msra.mxu0 0
      %291 = vmatpush.bf16.xpose.msra.mxu0 0
      %292 = vmatpush.bf16.xpose.msra.mxu0 0
      %293 = vmatpush.bf16.xpose.msra.mxu0 0
      %294 = vmatpush.bf16.xpose.msra.mxu0 0
      %295 = vmatpush.bf16.xpose.msra.mxu0 %v286
      %296 = vmatmul.bf16.gmra.mxu0 %v283
      %v297 = vpop.f32.mrf.mxu0
      %v298 = vadd.f32 0.0, %v297
      %v299 = vpop.f32.mrf.mxu0
      %300 = vdwg.mxu0
      %v301 = vmul.f32 %v241, 0.35355338
      %v302 = vmul.f32 %v260, 0.35355338
      %v303 = vmul.f32 %v279, 0.35355338
      %v304 = vmul.f32 %v298, 0.35355338
      %v305 = vlaneseq
      %v306 = vshrl.u32 %v305, 7
      %v307 = vlaneseq
      %v308 = vand.u32 %v307, 127
      %vm309 = vcmp.le.s32.totalorder %v308, %v306
      %v310 = vsel %vm309, %v301, -1e+30
      %v311 = vsel %vm309, %v302, -1e+30
      %v312 = vsel %vm309, %v303, -1e+30
      %v313 = vsel %vm309, %v304, -1e+30
      %vm314 = vcmask 18432
      %v315 = vsel %vm314, %v310, -inf
      %316 = vmax.xlane.f32.xlu0 %v315
      %v317 = vpop.xlane.xlu0 %316
      %v318 = vsel %vm314, %v311, -inf
      %319 = vmax.xlane.f32.xlu0 %v318
      %v320 = vpop.xlane.xlu0 %319
      %v321 = vsel %vm314, %v312, -inf
      %322 = vmax.xlane.f32.xlu0 %v321
      %v323 = vpop.xlane.xlu0 %322
      %v324 = vsel %vm314, %v313, -inf
      %325 = vmax.xlane.f32.xlu0 %v324
      %v326 = vpop.xlane.xlu0 %325
      %v327 = vsub.f32 %v310, %v317
      %v328 = vsub.f32 %v311, %v320
      %v329 = vsub.f32 %v312, %v323
      %v330 = vsub.f32 %v313, %v326
      %v331 = vmul.f32 %v327, 1.442695
      %v332 = vpow.pop %v331
      %v333 = vmul.f32 %v328, 1.442695
      %v334 = vpow.pop %v333
      %v335 = vmul.f32 %v329, 1.442695
      %v336 = vpow.pop %v335
      %v337 = vmul.f32 %v330, 1.442695
      %v338 = vpow.pop %v337
      %v339 = vsel %vm314, %v332, 0.0
      %340 = vadd.xlane.f32.xlu0 %v339
      %v341 = vpop.xlane.xlu0 %340
      %v342 = vsel %vm314, %v334, 0.0
      %343 = vadd.xlane.f32.xlu0 %v342
      %v344 = vpop.xlane.xlu0 %343
      %v345 = vsel %vm314, %v336, 0.0
      %346 = vadd.xlane.f32.xlu0 %v345
      %v347 = vpop.xlane.xlu0 %346
      %v348 = vsel %vm314, %v338, 0.0
      %349 = vadd.xlane.f32.xlu0 %v348
      %v350 = vpop.xlane.xlu0 %349
      %v351 = vrcp.pop %v341
      %v352 = vrcp.pop %v344
      %v353 = vrcp.pop %v347
      %v354 = vrcp.pop %v350
      %v355 = vmul.f32 %v332, %v351
      %v356 = vmul.f32 %v334, %v352
      %v357 = vmul.f32 %v336, %v353
      %v358 = vmul.f32 %v338, %v354
      %v359 = vpack.c.bf16 %v355, %v355
      %v360 = vpack.c.bf16 %v356, %v356
      %v361 = vpack.c.bf16 %v357, %v357
      %v362 = vpack.c.bf16 %v358, %v358
      %vm363 = vcmask 23552
      %v365 = vsel %vm363, %v359, 0
      %vm367 = vcmask 1040384
      %vm368 = vcmask 1041408
      %v369 = vsel %vm367, 4294967295, 65535
      %v370 = vsel %vm368, %v369, 0
      %v372 = vand.u32 %v220, %v370
      %374 = vmatpush.bf16.msra.mxu0 0
      %375 = vmatpush.bf16.msra.mxu0 0
      %376 = vmatpush.bf16.msra.mxu0 0
      %377 = vmatpush.bf16.msra.mxu0 0
      %378 = vmatpush.bf16.msra.mxu0 0
      %379 = vmatpush.bf16.msra.mxu0 0
      %380 = vmatpush.bf16.msra.mxu0 0
      %381 = vmatpush.bf16.msra.mxu0 %v372
      %382 = vmatmul.bf16.gmra.mxu0 %v365
      %v383 = vpop.f32.mrf.mxu0
      %v384 = vadd.f32 0.0, %v383
      %v385 = vpop.f32.mrf.mxu0
      %386 = vdwg.mxu0
      %v388 = vsel %vm363, %v360, 0
      %v391 = vand.u32 %v221, %v370
      %393 = vmatpush.bf16.msra.mxu0 0
      %394 = vmatpush.bf16.msra.mxu0 0
      %395 = vmatpush.bf16.msra.mxu0 0
      %396 = vmatpush.bf16.msra.mxu0 0
      %397 = vmatpush.bf16.msra.mxu0 0
      %398 = vmatpush.bf16.msra.mxu0 0
      %399 = vmatpush.bf16.msra.mxu0 0
      %400 = vmatpush.bf16.msra.mxu0 %v391
      %401 = vmatmul.bf16.gmra.mxu0 %v388
      %v402 = vpop.f32.mrf.mxu0
      %v403 = vadd.f32 0.0, %v402
      %v404 = vpop.f32.mrf.mxu0
      %405 = vdwg.mxu0
      %v407 = vsel %vm363, %v361, 0
      %v410 = vand.u32 %v222, %v370
      %412 = vmatpush.bf16.msra.mxu0 0
      %413 = vmatpush.bf16.msra.mxu0 0
      %414 = vmatpush.bf16.msra.mxu0 0
      %415 = vmatpush.bf16.msra.mxu0 0
      %416 = vmatpush.bf16.msra.mxu0 0
      %417 = vmatpush.bf16.msra.mxu0 0
      %418 = vmatpush.bf16.msra.mxu0 0
      %419 = vmatpush.bf16.msra.mxu0 %v410
      %420 = vmatmul.bf16.gmra.mxu0 %v407
      %v421 = vpop.f32.mrf.mxu0
      %v422 = vadd.f32 0.0, %v421
      %v423 = vpop.f32.mrf.mxu0
      %424 = vdwg.mxu0
      %v426 = vsel %vm363, %v362, 0
      %v429 = vand.u32 %v223, %v370
      %431 = vmatpush.bf16.msra.mxu0 0
      %432 = vmatpush.bf16.msra.mxu0 0
      %433 = vmatpush.bf16.msra.mxu0 0
      %434 = vmatpush.bf16.msra.mxu0 0
      %435 = vmatpush.bf16.msra.mxu0 0
      %436 = vmatpush.bf16.msra.mxu0 0
      %437 = vmatpush.bf16.msra.mxu0 0
      %438 = vmatpush.bf16.msra.mxu0 %v429
      %439 = vmatmul.bf16.gmra.mxu0 %v426
      %v440 = vpop.f32.mrf.mxu0
      %v441 = vadd.f32 0.0, %v440
      %v442 = vpop.f32.mrf.mxu0
      %443 = vdwg.mxu0
      %vm444 = vcmask 124928
      %445 = vst.msk [vmem:[%s210] sm:$0x7] %vm444, %v384
      %446 = vst.msk [vmem:[%s210 + $0x4] sm:$0x7] %vm444, %v403
      %447 = vst.msk [vmem:[%s210 + $0x8] sm:$0x7] %vm444, %v422
      %448 = vst.msk [vmem:[%s210 + $0xc] sm:$0x7] %vm444, %v441
      %p449 = scmp.lt.s32.totalorder %s14, 1
      %s450 = scalar_select %p449, %s14, 1
      %s451 = smul.addr %s450, 4
      %s452 = smul.addr %s451, 4
      %s453 = scalar_lea.vmem %s3, %s452
      // Predicated region
      $region33: #{forward.54} parent=31 // pred_check
        %p454 = pneg %p110
      $region34: #{forward.54} parent=31 // pred_check_branch
        %456 = sbr.rel (%p454) target = $region36
      $region35: #{forward.54} parent=31 // pred_region
        _
      $region36: #{forward.54} parent=31 // pred_fallthru
        _
    $region32: #{forward.54} parent=5 // pred_fallthru
      _
    %p457 = scmp.le.s32.totalorder 2, %s9
    // Predicated region
    $region37: #{forward.54} parent=5 // pred_check
      %p458 = pneg %p457
    $region38: #{forward.54} parent=5 // pred_check_branch
      %460 = sbr.rel (%p458) target = $region40
    $region39: #{forward.54} parent=5 // pred_region
      %s461 = ssub.s32 %s9, 2
      // Predicated region
      $region41: #{forward.54} parent=39 // pred_check
        %p462 = pneg %p116
      $region42: #{forward.54} parent=39 // pred_check_branch
        %464 = sbr.rel (%p462) target = $region44
      $region43: #{forward.54} parent=39 // pred_region
        %p465 = scmp.lt.s32.totalorder %s15, 1
        %s466 = scalar_select %p465, %s15, 1
        %s467 = smul.addr %s466, 4
        %s468 = smul.addr %s467, 4
        %s469 = scalar_lea.vmem %s3, %s468
      $region44: #{forward.54} parent=39 // pred_fallthru
        _
    $region40: #{forward.54} parent=5 // pred_fallthru
      _
  $region6: #{forward.54} parent=0 // loop_footer
    %s13 = sadd.s32 1, %s9
  $region7: #{forward.54} parent=0 // loop_footer_branch
    %8 = sbr.rel target = $region3
  $region8: #{forward.54} parent=0 // loop_exit
    _

// kernel: forward.58
$region0: #{forward.58}
  #allocation0 [shape = 'u32[]', space=smem, size = 0x4, offset = 0x4, fixed_abs, tag = 'smem constant byte address 0x4 - core index']
  #allocation1 [shape = 'u32[72,128]{1,0:T(1,128)}', space=vmem, size = 0x9000, scoped, tag = 'internal scratch']
  %s0 = inlined_call_operand.vmem [shape: bf16[2,4,3,16], index: 0, kind: input, shape index: {}]
  %s1 = inlined_call_operand.vmem [shape: bf16[2,4,4,16], index: 1, kind: input, shape index: {}]
  %s2 = inlined_call_operand.vmem [shape: bf16[2,4,4,16], index: 2, kind: input, shape index: {}]
  %s3 = inlined_call_operand.vmem [shape: f32[2,4,3,16], index: 3, kind: output, shape index: {}]
  %s4 = sld [smem:[#allocation0]]
  $region45: #{forward.58} parent=0
    _
  %s6 = ssub.s32 1, %s4
  %s7 = scalar_select 0, %s6, %s4
  loop: start=0, step=1, limit=4
  $region2: #{forward.58} parent=0 // loop_pre_header
    _
  $region3: #{forward.58} parent=0 // loop_header
    %s9 = sphi 0, %s13
    %p10 = scmp.ge.s32.totalorder %s9, 4
    %s19 = sphi 0, %s21
    %s22 = sphi 0, %s19
    %s23 = sphi 0, %s22
    %s39 = sphi 0, %s23
    %s45 = sphi 0, %s47
    %s48 = sphi 0, %s45
    %s49 = sphi 0, %s48
    %s65 = sphi 0, %s49
    %s71 = sphi 0, %s73
    %s74 = sphi 0, %s71
    %s75 = sphi 0, %s74
    %s91 = sphi 0, %s75
    %s97 = sphi 0, %s99
    %s100 = sphi 0, %s97
    %s101 = sphi 0, %s100
    %s117 = sphi 0, %s101
  $region4: #{forward.58} parent=0 // loop_header_branch
    %12 = sbr.rel (%p10) target = $region8
  $region5: #{forward.58} parent=0 // loop_body
    %s14 = ssub.s32 %s9, 1
    %s15 = ssub.s32 %s9, 2
    %s16 = sadd.s32 %s9, 1
    %s17 = ssub.s32 %s9, %s16
    %p18 = scmp.eq.s32.totalorder %s17, 0
    %s20 = sadd.s32 %s19, 1
    %s21 = scalar_select %p18, %s19, %s20
    %p24 = pneg %p18
    %p25 = scmp.eq.s32.totalorder %s9, 1
    %p26 = por %p24, %p25
    %p27 = scmp.ne.s32.totalorder %s19, %s22
    %p28 = scmp.eq.s32.totalorder %s9, 0
    %p29 = por %p27, %p28
    %p30 = scmp.ne.s32.totalorder %s19, %s22
    %p31 = scmp.eq.s32.totalorder %s14, 1
    %p32 = por %p30, %p31
    %p33 = scmp.ne.s32.totalorder %s22, %s23
    %p34 = scmp.eq.s32.totalorder %s14, 0
    %p35 = por %p33, %p34
    %p36 = scmp.ne.s32.totalorder %s22, %s23
    %p37 = scmp.eq.s32.totalorder %s15, 1
    %p38 = por %p36, %p37
    %p40 = scmp.ne.s32.totalorder %s23, %s39
    %p41 = scmp.eq.s32.totalorder %s15, 0
    %p42 = por %p40, %p41
    %s43 = ssub.s32 %s9, %s16
    %p44 = scmp.eq.s32.totalorder %s43, 0
    %s46 = sadd.s32 %s45, 1
    %s47 = scalar_select %p44, %s45, %s46
    %p50 = pneg %p44
    %p51 = scmp.eq.s32.totalorder %s9, 1
    %p52 = por %p50, %p51
    %p53 = scmp.ne.s32.totalorder %s45, %s48
    %p54 = scmp.eq.s32.totalorder %s9, 0
    %p55 = por %p53, %p54
    %p56 = scmp.ne.s32.totalorder %s45, %s48
    %p57 = scmp.eq.s32.totalorder %s14, 1
    %p58 = por %p56, %p57
    %p59 = scmp.ne.s32.totalorder %s48, %s49
    %p60 = scmp.eq.s32.totalorder %s14, 0
    %p61 = por %p59, %p60
    %p62 = scmp.ne.s32.totalorder %s48, %s49
    %p63 = scmp.eq.s32.totalorder %s15, 1
    %p64 = por %p62, %p63
    %p66 = scmp.ne.s32.totalorder %s49, %s65
    %p67 = scmp.eq.s32.totalorder %s15, 0
    %p68 = por %p66, %p67
    %s69 = ssub.s32 %s9, %s16
    %p70 = scmp.eq.s32.totalorder %s69, 0
    %s72 = sadd.s32 %s71, 1
    %s73 = scalar_select %p70, %s71, %s72
    %p76 = pneg %p70
    %p77 = scmp.eq.s32.totalorder %s9, 1
    %p78 = por %p76, %p77
    %p79 = scmp.ne.s32.totalorder %s71, %s74
    %p80 = scmp.eq.s32.totalorder %s9, 0
    %p81 = por %p79, %p80
    %p82 = scmp.ne.s32.totalorder %s71, %s74
    %p83 = scmp.eq.s32.totalorder %s14, 1
    %p84 = por %p82, %p83
    %p85 = scmp.ne.s32.totalorder %s74, %s75
    %p86 = scmp.eq.s32.totalorder %s14, 0
    %p87 = por %p85, %p86
    %p88 = scmp.ne.s32.totalorder %s74, %s75
    %p89 = scmp.eq.s32.totalorder %s15, 1
    %p90 = por %p88, %p89
    %p92 = scmp.ne.s32.totalorder %s75, %s91
    %p93 = scmp.eq.s32.totalorder %s15, 0
    %p94 = por %p92, %p93
    %s95 = ssub.s32 %s9, %s16
    %p96 = scmp.eq.s32.totalorder %s95, 0
    %s98 = sadd.s32 %s97, 1
    %s99 = scalar_select %p96, %s97, %s98
    %p102 = pneg %p96
    %p103 = scmp.eq.s32.totalorder %s9, 1
    %p104 = por %p102, %p103
    %p105 = scmp.ne.s32.totalorder %s97, %s100
    %p106 = scmp.eq.s32.totalorder %s9, 0
    %p107 = por %p105, %p106
    %p108 = scmp.ne.s32.totalorder %s97, %s100
    %p109 = scmp.eq.s32.totalorder %s14, 1
    %p110 = por %p108, %p109
    %p111 = scmp.ne.s32.totalorder %s100, %s101
    %p112 = scmp.eq.s32.totalorder %s14, 0
    %p113 = por %p111, %p112
    %p114 = scmp.ne.s32.totalorder %s100, %s101
    %p115 = scmp.eq.s32.totalorder %s15, 1
    %p116 = por %p114, %p115
    %p118 = scmp.ne.s32.totalorder %s101, %s117
    %p119 = scmp.eq.s32.totalorder %s15, 0
    %p120 = por %p118, %p119
    %p121 = scmp.le.s32.totalorder 1, %s9
    %p122 = scmp.lt.s32.totalorder %s9, 3
    %p123 = pnand %p121, %p122
    %p124 = pneg %p123
    // Predicated region
    $region9: #{forward.58} parent=5 // pred_check
      _
    $region10: #{forward.58} parent=5 // pred_check_branch
      %126 = sbr.rel (%p123) target = $region12
    $region11: #{forward.58} parent=5 // pred_region
      %s127 = ssub.s32 %s9, 1
    $region12: #{forward.58} parent=5 // pred_fallthru
      _
    %p128 = scmp.lt.s32.totalorder %s9, 2
    // Predicated region
    $region13: #{forward.58} parent=5 // pred_check
      %p129 = pneg %p128
    $region14: #{forward.58} parent=5 // pred_check_branch
      %131 = sbr.rel (%p129) target = $region16
    $region15: #{forward.58} parent=5 // pred_region
      // Predicated region
      $region17: #{forward.58} parent=15 // pred_check
        %p132 = pneg %p29
      $region18: #{forward.58} parent=15 // pred_check_branch
        %134 = sbr.rel (%p132) target = $region20
      $region19: #{forward.58} parent=15 // pred_region
        %p135 = scmp.lt.s32.totalorder %s9, 1
        %s136 = scalar_select %p135, %s9, 1
        %s137 = smul.addr %s136, 4
        %s138 = smul.addr %s137, 2
        %s139 = scalar_lea.vmem %s0, %s138
      $region20: #{forward.58} parent=15 // pred_fallthru
        _
      // Predicated region
      $region21: #{forward.58} parent=15 // pred_check
        %p140 = pneg %p55
      $region22: #{forward.58} parent=15 // pred_check_branch
        %142 = sbr.rel (%p140) target = $region24
      $region23: #{forward.58} parent=15 // pred_region
        %p143 = scmp.lt.s32.totalorder %s9, 1
        %s144 = scalar_select %p143, %s9, 1
        %s145 = smul.addr %s144, 4
        %s146 = smul.addr %s145, 2
        %s147 = scalar_lea.vmem %s1, %s146
      $region24: #{forward.58} parent=15 // pred_fallthru
        _
      // Predicated region
      $region25: #{forward.58} parent=15 // pred_check
        %p148 = pneg %p81
      $region26: #{forward.58} parent=15 // pred_check_branch
        %150 = sbr.rel (%p148) target = $region28
      $region27: #{forward.58} parent=15 // pred_region
        %p151 = scmp.lt.s32.totalorder %s9, 1
        %s152 = scalar_select %p151, %s9, 1
        %s153 = smul.addr %s152, 4
        %s154 = smul.addr %s153, 2
        %s155 = scalar_lea.vmem %s2, %s154
      $region28: #{forward.58} parent=15 // pred_fallthru
        _
    $region16: #{forward.58} parent=5 // pred_fallthru
      _
    %p156 = scmp.le.s32.totalorder 1, %s9
    %p157 = scmp.lt.s32.totalorder %s9, 3
    %p158 = pnand %p156, %p157
    %p159 = pneg %p158
    // Predicated region
    $region29: #{forward.58} parent=5 // pred_check
      _
    $region30: #{forward.58} parent=5 // pred_check_branch
      %161 = sbr.rel (%p158) target = $region32
    $region31: #{forward.58} parent=5 // pred_region
      %s162 = ssub.s32 %s9, 1
      %p163 = scmp.lt.s32.totalorder %s14, 1
      %s164 = scalar_select %p163, %s14, 1
      %s165 = smul.addr %s164, 4
      %s166 = smul.addr %s165, 2
      %s167 = scalar_lea.vmem %s0, %s166
      %p168 = pneg %p35
      %p169 = pneg %p32
      %p170 = scmp.lt.s32.totalorder %s14, 1
      %s171 = scalar_select %p170, %s14, 1
      %s172 = smul.addr %s171, 4
      %s173 = smul.addr %s172, 2
      %s174 = scalar_lea.vmem %s1, %s173
      %p175 = pneg %p61
      %p176 = pneg %p58
      %p177 = scmp.lt.s32.totalorder %s14, 1
      %s178 = scalar_select %p177, %s14, 1
      %s179 = smul.addr %s178, 4
      %s180 = smul.addr %s179, 2
      %s181 = scalar_lea.vmem %s2, %s180
      %p182 = pneg %p87
      %p183 = pneg %p84
      %p184 = pneg %p113
      %p185 = pneg %p110
      %p186 = scmp.lt.s32.totalorder %s14, 1
      %s187 = scalar_select %p186, %s14, 1
      %s188 = smul.addr %s187, 4
      %s189 = smul.addr %s188, 4
      %s190 = scalar_lea.vmem %s3, %s189
      %p191 = scmp.lt.s32.totalorder %s14, 1
      %s192 = scalar_select %p191, %s14, 1
      %s193 = smul.addr %s192, 4
      %s194 = smul.addr %s193, 2
      %s195 = scalar_lea.vmem %s0, %s194
      %p196 = scmp.lt.s32.totalorder %s14, 1
      %s197 = scalar_select %p196, %s14, 1
      %s198 = smul.addr %s197, 4
      %s199 = smul.addr %s198, 2
      %s200 = scalar_lea.vmem %s1, %s199
      %p201 = scmp.lt.s32.totalorder %s14, 1
      %s202 = scalar_select %p201, %s14, 1
      %s203 = smul.addr %s202, 4
      %s204 = smul.addr %s203, 2
      %s205 = scalar_lea.vmem %s2, %s204
      %p206 = scmp.lt.s32.totalorder %s14, 1
      %s207 = scalar_select %p206, %s14, 1
      %s208 = smul.addr %s207, 4
      %s209 = smul.addr %s208, 4
      %s210 = scalar_lea.vmem %s3, %s209
      %v212 = vld [vmem:[%s195] sm:$0x3]
      %v213 = vld [vmem:[%s195 + $0x2] sm:$0x3]
      %v214 = vld [vmem:[%s195 + $0x4] sm:$0x3]
      %v215 = vld [vmem:[%s195 + $0x6] sm:$0x3]
      %v216 = vld [vmem:[%s200] sm:$0x3]
      %v217 = vld [vmem:[%s200 + $0x2] sm:$0x3]
      %v218 = vld [vmem:[%s200 + $0x4] sm:$0x3]
      %v219 = vld [vmem:[%s200 + $0x6] sm:$0x3]
      %v220 = vld [vmem:[%s205] sm:$0x3]
      %v221 = vld [vmem:[%s205 + $0x2] sm:$0x3]
      %v222 = vld [vmem:[%s205 + $0x4] sm:$0x3]
      %v223 = vld [vmem:[%s205 + $0x6] sm:$0x3]
      %vm224 = vcmask 130048
      %v226 = vsel %vm224, %v212, 0
      %v229 = vsel %vm224, %v216, 0
      %231 = vmatpush.bf16.xpose.msra.mxu0 0
      %232 = vmatpush.bf16.xpose.msra.mxu0 0
      %233 = vmatpush.bf16.xpose.msra.mxu0 0
      %234 = vmatpush.bf16.xpose.msra.mxu0 0
      %235 = vmatpush.bf16.xpose.msra.mxu0 0
      %236 = vmatpush.bf16.xpose.msra.mxu0 0
      %237 = vmatpush.bf16.xpose.msra.mxu0 0
      %238 = vmatpush.bf16.xpose.msra.mxu0 %v229
      %239 = vmatmul.bf16.gmra.mxu0 %v226
      %v240 = vpop.f32.mrf.mxu0
      %v241 = vadd.f32 0.0, %v240
      %v242 = vpop.f32.mrf.mxu0
      %243 = vdwg.mxu0
      %v245 = vsel %vm224, %v213, 0
      %v248 = vsel %vm224, %v217, 0
      %250 = vmatpush.bf16.xpose.msra.mxu0 0
      %251 = vmatpush.bf16.xpose.msra.mxu0 0
      %252 = vmatpush.bf16.xpose.msra.mxu0 0
      %253 = vmatpush.bf16.xpose.msra.mxu0 0
      %254 = vmatpush.bf16.xpose.msra.mxu0 0
      %255 = vmatpush.bf16.xpose.msra.mxu0 0
      %256 = vmatpush.bf16.xpose.msra.mxu0 0
      %257 = vmatpush.bf16.xpose.msra.mxu0 %v248
      %258 = vmatmul.bf16.gmra.mxu0 %v245
      %v259 = vpop.f32.mrf.mxu0
      %v260 = vadd.f32 0.0, %v259
      %v261 = vpop.f32.mrf.mxu0
      %262 = vdwg.mxu0
      %v264 = vsel %vm224, %v214, 0
      %v267 = vsel %vm224, %v218, 0
      %269 = vmatpush.bf16.xpose.msra.mxu0 0
      %270 = vmatpush.bf16.xpose.msra.mxu0 0
      %271 = vmatpush.bf16.xpose.msra.mxu0 0
      %272 = vmatpush.bf16.xpose.msra.mxu0 0
      %273 = vmatpush.bf16.xpose.msra.mxu0 0
      %274 = vmatpush.bf16.xpose.msra.mxu0 0
      %275 = vmatpush.bf16.xpose.msra.mxu0 0
      %276 = vmatpush.bf16.xpose.msra.mxu0 %v267
      %277 = vmatmul.bf16.gmra.mxu0 %v264
      %v278 = vpop.f32.mrf.mxu0
      %v279 = vadd.f32 0.0, %v278
      %v280 = vpop.f32.mrf.mxu0
      %281 = vdwg.mxu0
      %v283 = vsel %vm224, %v215, 0
      %v286 = vsel %vm224, %v219, 0
      %288 = vmatpush.bf16.xpose.msra.mxu0 0
      %289 = vmatpush.bf16.xpose.msra.mxu0 0
      %290 = vmatpush.bf16.xpose.msra.mxu0 0
      %291 = vmatpush.bf16.xpose.msra.mxu0 0
      %292 = vmatpush.bf16.xpose.msra.mxu0 0
      %293 = vmatpush.bf16.xpose.msra.mxu0 0
      %294 = vmatpush.bf16.xpose.msra.mxu0 0
      %295 = vmatpush.bf16.xpose.msra.mxu0 %v286
      %296 = vmatmul.bf16.gmra.mxu0 %v283
      %v297 = vpop.f32.mrf.mxu0
      %v298 = vadd.f32 0.0, %v297
      %v299 = vpop.f32.mrf.mxu0
      %300 = vdwg.mxu0
      %v301 = vmul.f32 %v241, 0.35355338
      %v302 = vmul.f32 %v260, 0.35355338
      %v303 = vmul.f32 %v279, 0.35355338
      %v304 = vmul.f32 %v298, 0.35355338
      %vm305 = vcmask 26624
      %v306 = vsel %vm305, %v301, -inf
      %307 = vmax.xlane.f32.xlu0 %v306
      %v308 = vpop.xlane.xlu0 %307
      %v309 = vsel %vm305, %v302, -inf
      %310 = vmax.xlane.f32.xlu0 %v309
      %v311 = vpop.xlane.xlu0 %310
      %v312 = vsel %vm305, %v303, -inf
      %313 = vmax.xlane.f32.xlu0 %v312
      %v314 = vpop.xlane.xlu0 %313
      %v315 = vsel %vm305, %v304, -inf
      %316 = vmax.xlane.f32.xlu0 %v315
      %v317 = vpop.xlane.xlu0 %316
      %v318 = vsub.f32 %v301, %v308
      %v319 = vsub.f32 %v302, %v311
      %v320 = vsub.f32 %v303, %v314
      %v321 = vsub.f32 %v304, %v317
      %v322 = vmul.f32 %v318, 1.442695
      %v323 = vpow.pop %v322
      %v324 = vmul.f32 %v319, 1.442695
      %v325 = vpow.pop %v324
      %v326 = vmul.f32 %v320, 1.442695
      %v327 = vpow.pop %v326
      %v328 = vmul.f32 %v321, 1.442695
      %v329 = vpow.pop %v328
      %v330 = vsel %vm305, %v323, 0.0
      %331 = vadd.xlane.f32.xlu0 %v330
      %v332 = vpop.xlane.xlu0 %331
      %v333 = vsel %vm305, %v325, 0.0
      %334 = vadd.xlane.f32.xlu0 %v333
      %v335 = vpop.xlane.xlu0 %334
      %v336 = vsel %vm305, %v327, 0.0
      %337 = vadd.xlane.f32.xlu0 %v336
      %v338 = vpop.xlane.xlu0 %337
      %v339 = vsel %vm305, %v329, 0.0
      %340 = vadd.xlane.f32.xlu0 %v339
      %v341 = vpop.xlane.xlu0 %340
      %v342 = vrcp.pop %v332
      %v343 = vrcp.pop %v335
      %v344 = vrcp.pop %v338
      %v345 = vrcp.pop %v341
      %v346 = vmul.f32 %v323, %v342
      %v347 = vmul.f32 %v325, %v343
      %v348 = vmul.f32 %v327, %v344
      %v349 = vmul.f32 %v329, %v345
      %v350 = vpack.c.bf16 %v346, %v346
      %v351 = vpack.c.bf16 %v347, %v347
      %v352 = vpack.c.bf16 %v348, %v348
      %v353 = vpack.c.bf16 %v349, %v349
      %vm354 = vcmask 31744
      %v356 = vsel %vm354, %v350, 0
      %vm358 = vcmask 1041408
      %v360 = vsel %vm358, %v220, 0
      %362 = vmatpush.bf16.msra.mxu0 0
      %363 = vmatpush.bf16.msra.mxu0 0
      %364 = vmatpush.bf16.msra.mxu0 0
      %365 = vmatpush.bf16.msra.mxu0 0
      %366 = vmatpush.bf16.msra.mxu0 0
      %367 = vmatpush.bf16.msra.mxu0 0
      %368 = vmatpush.bf16.msra.mxu0 0
      %369 = vmatpush.bf16.msra.mxu0 %v360
      %370 = vmatmul.bf16.gmra.mxu0 %v356
      %v371 = vpop.f32.mrf.mxu0
      %v372 = vadd.f32 0.0, %v371
      %v373 = vpop.f32.mrf.mxu0
      %374 = vdwg.mxu0
      %v376 = vsel %vm354, %v351, 0
      %v379 = vsel %vm358, %v221, 0
      %381 = vmatpush.bf16.msra.mxu0 0
      %382 = vmatpush.bf16.msra.mxu0 0
      %383 = vmatpush.bf16.msra.mxu0 0
      %384 = vmatpush.bf16.msra.mxu0 0
      %385 = vmatpush.bf16.msra.mxu0 0
      %386 = vmatpush.bf16.msra.mxu0 0
      %387 = vmatpush.bf16.msra.mxu0 0
      %388 = vmatpush.bf16.msra.mxu0 %v379
      %389 = vmatmul.bf16.gmra.mxu0 %v376
      %v390 = vpop.f32.mrf.mxu0
      %v391 = vadd.f32 0.0, %v390
      %v392 = vpop.f32.mrf.mxu0
      %393 = vdwg.mxu0
      %v395 = vsel %vm354, %v352, 0
      %v398 = vsel %vm358, %v222, 0
      %400 = vmatpush.bf16.msra.mxu0 0
      %401 = vmatpush.bf16.msra.mxu0 0
      %402 = vmatpush.bf16.msra.mxu0 0
      %403 = vmatpush.bf16.msra.mxu0 0
      %404 = vmatpush.bf16.msra.mxu0 0
      %405 = vmatpush.bf16.msra.mxu0 0
      %406 = vmatpush.bf16.msra.mxu0 0
      %407 = vmatpush.bf16.msra.mxu0 %v398
      %408 = vmatmul.bf16.gmra.mxu0 %v395
      %v409 = vpop.f32.mrf.mxu0
      %v410 = vadd.f32 0.0, %v409
      %v411 = vpop.f32.mrf.mxu0
      %412 = vdwg.mxu0
      %v414 = vsel %vm354, %v353, 0
      %v417 = vsel %vm358, %v223, 0
      %419 = vmatpush.bf16.msra.mxu0 0
      %420 = vmatpush.bf16.msra.mxu0 0
      %421 = vmatpush.bf16.msra.mxu0 0
      %422 = vmatpush.bf16.msra.mxu0 0
      %423 = vmatpush.bf16.msra.mxu0 0
      %424 = vmatpush.bf16.msra.mxu0 0
      %425 = vmatpush.bf16.msra.mxu0 0
      %426 = vmatpush.bf16.msra.mxu0 %v417
      %427 = vmatmul.bf16.gmra.mxu0 %v414
      %v428 = vpop.f32.mrf.mxu0
      %v429 = vadd.f32 0.0, %v428
      %v430 = vpop.f32.mrf.mxu0
      %431 = vdwg.mxu0
      %vm432 = vcmask 124928
      %433 = vst.msk [vmem:[%s210] sm:$0x7] %vm432, %v372
      %434 = vst.msk [vmem:[%s210 + $0x4] sm:$0x7] %vm432, %v391
      %435 = vst.msk [vmem:[%s210 + $0x8] sm:$0x7] %vm432, %v410
      %436 = vst.msk [vmem:[%s210 + $0xc] sm:$0x7] %vm432, %v429
      %p437 = scmp.lt.s32.totalorder %s14, 1
      %s438 = scalar_select %p437, %s14, 1
      %s439 = smul.addr %s438, 4
      %s440 = smul.addr %s439, 4
      %s441 = scalar_lea.vmem %s3, %s440
      // Predicated region
      $region33: #{forward.58} parent=31 // pred_check
        %p442 = pneg %p110
      $region34: #{forward.58} parent=31 // pred_check_branch
        %444 = sbr.rel (%p442) target = $region36
      $region35: #{forward.58} parent=31 // pred_region
        _
      $region36: #{forward.58} parent=31 // pred_fallthru
        _
    $region32: #{forward.58} parent=5 // pred_fallthru
      _
    %p445 = scmp.le.s32.totalorder 2, %s9
    // Predicated region
    $region37: #{forward.58} parent=5 // pred_check
      %p446 = pneg %p445
    $region38: #{forward.58} parent=5 // pred_check_branch
      %448 = sbr.rel (%p446) target = $region40
    $region39: #{forward.58} parent=5 // pred_region
      %s449 = ssub.s32 %s9, 2
      // Predicated region
      $region41: #{forward.58} parent=39 // pred_check
        %p450 = pneg %p116
      $region42: #{forward.58} parent=39 // pred_check_branch
        %452 = sbr.rel (%p450) target = $region44
      $region43: #{forward.58} parent=39 // pred_region
        %p453 = scmp.lt.s32.totalorder %s15, 1
        %s454 = scalar_select %p453, %s15, 1
        %s455 = smul.addr %s454, 4
        %s456 = smul.addr %s455, 4
        %s457 = scalar_lea.vmem %s3, %s456
      $region44: #{forward.58} parent=39 // pred_fallthru
        _
    $region40: #{forward.58} parent=5 // pred_fallthru
      _
  $region6: #{forward.58} parent=0 // loop_footer
    %s13 = sadd.s32 1, %s9
  $region7: #{forward.58} parent=0 // loop_footer_branch
    %8 = sbr.rel target = $region3
  $region8: #{forward.58} parent=0 // loop_exit
    _

// kernel: forward.71
$region0: #{forward.71}
  #allocation0 [shape = 'u32[]', space=smem, size = 0x4, offset = 0x4, fixed_abs, tag = 'smem constant byte address 0x4 - core index']
  #allocation1 [shape = 'u32[72,128]{1,0:T(1,128)}', space=vmem, size = 0x9000, scoped, tag = 'internal scratch']
  %s0 = inlined_call_operand.vmem [shape: bf16[8,64], index: 0, kind: input, shape index: {}]
  %s1 = inlined_call_operand.vmem [shape: bf16[64,32], index: 1, kind: input, shape index: {}]
  %s2 = inlined_call_operand.vmem [shape: f32[1,32], index: 2, kind: input, shape index: {}]
  %s3 = inlined_call_operand.vmem [shape: bf16[32,8], index: 3, kind: input, shape index: {}]
  %s4 = inlined_call_operand.vmem [shape: f32[1,8], index: 4, kind: input, shape index: {}]
  %s5 = inlined_call_operand.vmem [shape: f32[8,8], index: 5, kind: output, shape index: {}]
  %s6 = sld [smem:[#allocation0]]
  $region30: #{forward.71} parent=0
    _
  %s8 = ssub.s32 1, %s6
  %s9 = scalar_select 0, %s8, %s6
  // Predicated region
  $region2: #{forward.71} parent=0 // pred_check
    _
  $region3: #{forward.71} parent=0 // pred_check_branch
    %11 = sbr.rel (0) target = $region5
  $region4: #{forward.71} parent=0 // pred_region
    _
  $region5: #{forward.71} parent=0 // pred_fallthru
    _
  // Predicated region
  $region6: #{forward.71} parent=0 // pred_check
    _
  $region7: #{forward.71} parent=0 // pred_check_branch
    %13 = sbr.rel (0) target = $region9
  $region8: #{forward.71} parent=0 // pred_region
    _
  $region9: #{forward.71} parent=0 // pred_fallthru
    _
  // Predicated region
  $region10: #{forward.71} parent=0 // pred_check
    _
  $region11: #{forward.71} parent=0 // pred_check_branch
    %15 = sbr.rel (0) target = $region13
  $region12: #{forward.71} parent=0 // pred_region
    _
  $region13: #{forward.71} parent=0 // pred_fallthru
    _
  // Predicated region
  $region14: #{forward.71} parent=0 // pred_check
    _
  $region15: #{forward.71} parent=0 // pred_check_branch
    %17 = sbr.rel (0) target = $region17
  $region16: #{forward.71} parent=0 // pred_region
    _
  $region17: #{forward.71} parent=0 // pred_fallthru
    _
  // Predicated region
  $region18: #{forward.71} parent=0 // pred_check
    _
  $region19: #{forward.71} parent=0 // pred_check_branch
    %19 = sbr.rel (0) target = $region21
  $region20: #{forward.71} parent=0 // pred_region
    _
  $region21: #{forward.71} parent=0 // pred_fallthru
    _
  %v21 = vld [vmem:[%s0] sm:$0xf]
  %v22 = vld [vmem:[%s1] sm:$0xf]
  %v23 = vld [vmem:[%s1 + $0x4] sm:$0xf]
  %v24 = vld [vmem:[%s1 + $0x8] sm:$0xf]
  %v25 = vld [vmem:[%s1 + $0xc] sm:$0xf]
  %v26 = vld [vmem:[%s1 + $0x10] sm:$0xf]
  %v27 = vld [vmem:[%s1 + $0x14] sm:$0xf]
  %v28 = vld [vmem:[%s1 + $0x18] sm:$0xf]
  %v29 = vld [vmem:[%s1 + $0x1c] sm:$0xf]
  %v30 = vld [vmem:[%s2] sm:$0x1]
  %v32 = vperm.slane %v30, 0
  %v42 = vunpack.c.l.b16 %v22
  %v43 = vunpack.c.l.b16 %v23
  %v44 = vunpack.c.l.b16 %v24
  %v45 = vunpack.c.l.b16 %v25
  %v46 = vunpack.c.l.b16 %v26
  %v47 = vunpack.c.l.b16 %v27
  %v48 = vunpack.c.l.b16 %v28
  %v49 = vunpack.c.l.b16 %v29
  %v50 = vpack.c.b16 %v43, %v42
  %v51 = vpack.c.b16 %v45, %v44
  %v52 = vpack.c.b16 %v47, %v46
  %v53 = vpack.c.b16 %v49, %v48
  %vm58 = vcmask 523264
  %v60 = vsel %vm58, %v21, 0
  %62 = vmatpush.bf16.msra.mxu0 0
  %63 = vmatpush.bf16.msra.mxu0 0
  %64 = vmatpush.bf16.msra.mxu0 0
  %65 = vmatpush.bf16.msra.mxu0 0
  %66 = vmatpush.bf16.msra.mxu0 %v53
  %67 = vmatpush.bf16.msra.mxu0 %v52
  %68 = vmatpush.bf16.msra.mxu0 %v51
  %69 = vmatpush.bf16.msra.mxu0 %v50
  %70 = vmatmul.bf16.gmra.mxu0 %v60
  %v71 = vpop.f32.mrf.mxu0
  %v72 = vadd.f32 %v32, %v71
  %v73 = vpop.f32.mrf.mxu0
  %74 = vdwg.mxu0
  %v75 = vmax.f32 %v72, 0.0
  %v76 = vpack.c.bf16 %v75, %v75
  %v77 = vld [vmem:[%s3] sm:$0xf]
  %v78 = vld [vmem:[%s3 + $0x4] sm:$0xf]
  %v79 = vld [vmem:[%s3 + $0x8] sm:$0xf]
  %v80 = vld [vmem:[%s3 + $0xc] sm:$0xf]
  %v81 = vld [vmem:[%s4] sm:$0x1]
  %v83 = vperm.slane %v81, 0
  %v89 = vunpack.c.l.b16 %v77
  %v90 = vunpack.c.l.b16 %v78
  %v91 = vunpack.c.l.b16 %v79
  %v92 = vunpack.c.l.b16 %v80
  %v93 = vpack.c.b16 %v90, %v89
  %v94 = vpack.c.b16 %v92, %v91
  %vm97 = vcmask 261120
  %v99 = vsel %vm97, %v76, 0
  %101 = vmatpush.bf16.msra.mxu0 0
  %102 = vmatpush.bf16.msra.mxu0 0
  %103 = vmatpush.bf16.msra.mxu0 0
  %104 = vmatpush.bf16.msra.mxu0 0
  %105 = vmatpush.bf16.msra.mxu0 0
  %106 = vmatpush.bf16.msra.mxu0 0
  %107 = vmatpush.bf16.msra.mxu0 %v94
  %108 = vmatpush.bf16.msra.mxu0 %v93
  %109 = vmatmul.bf16.gmra.mxu0 %v99
  %v110 = vpop.f32.mrf.mxu0
  %v111 = vadd.f32 %v83, %v110
  %v112 = vpop.f32.mrf.mxu0
  %113 = vdwg.mxu0
  %vm114 = vcmask 64512
  %115 = vst.msk [vmem:[%s5] sm:$0xff] %vm114, %v111
  // Predicated region
  $region22: #{forward.71} parent=0 // pred_check
    _
  $region23: #{forward.71} parent=0 // pred_check_branch
    %117 = sbr.rel (0) target = $region25
  $region24: #{forward.71} parent=0 // pred_region
    _
  $region25: #{forward.71} parent=0 // pred_fallthru
    _
  // Predicated region
  $region26: #{forward.71} parent=0 // pred_check
    _
  $region27: #{forward.71} parent=0 // pred_check_branch
    %119 = sbr.rel (0) target = $region29
  $region28: #{forward.71} parent=0 // pred_region
    _
  $region29: #{forward.71} parent=0 // pred_fallthru
    _

</llo_original>
